<compile_context>
chip_gen: v6e
topology: v6e:2x2x1
jax: 0.10.0
libtpu: 0.0.40
codegen_flags: <defaults>
</compile_context>

<pallas_src>
import jax
import jax.numpy as jnp
from jax.experimental import pallas as pl
from jax.experimental.pallas import tpu as pltpu


def basic_block_kernel(x_ref, w1_ref, s1_ref, b1_ref, w2_ref, s2_ref, b2_ref,
                       o_ref):
    # x_ref : (1, H, W, Cp)   bf16 input (channels zero-padded to Cp lanes)
    # w*_ref: (3, 3*Cp, Cp)   bf16 conv weights, [kh, kw*Cp + cin, cout]
    # s*/b* : (1, Cp)         f32 folded BatchNorm scale / bias
    # o_ref : (1, H, W, Cp)   f32 output
    _, H, W, Cp = x_ref.shape
    HW = H * W

    x = x_ref[0].astype(jnp.float32)                     # (H, W, Cp)

    def conv3x3(inp, w_ref):
        """3x3 conv, stride 1, pad 1, as 3 matmuls of depth 3*Cp."""
        # kw shifts: one XLU roll + boundary mask each (no misaligned slices).
        col = jax.lax.broadcasted_iota(jnp.int32, (H, W, Cp), 1)
        left = jnp.where(col >= 1,
                         pltpu.roll(inp, shift=1, axis=1), 0.0)      # x[:, w-1]
        right = jnp.where(col < W - 1,
                          pltpu.roll(inp, shift=W - 1, axis=1), 0.0)  # x[:, w+1]
        # Fold kw into the contraction dim: (H, W, 3*Cp), lane-tile aligned.
        cat = jnp.concatenate([left, inp, right], axis=-1)
        # Zero halo in H (leading dim -> cheap concat, no memset of a scratch).
        zrow = jnp.zeros((1, W, 3 * Cp), jnp.float32)
        catp = jnp.concatenate([zrow, cat, zrow], axis=0)            # (H+2, W, 3Cp)

        acc = jnp.zeros((HW, Cp), jnp.float32)
        for kh in range(3):
            # Leading-dim slice (free); reshape keeps (8,128) tiling (W % 8 == 0
            # in the test; full-dim blocks otherwise).
            lhs = catp[kh:kh + H].reshape(HW, 3 * Cp).astype(jnp.bfloat16)
            acc = acc + jnp.dot(lhs, w_ref[kh],
                                preferred_element_type=jnp.float32)
        return acc                                                    # (HW, Cp) f32

    # conv1 -> BN1 -> ReLU (all f32 elementwise)
    acc1 = conv3x3(x, w1_ref)
    y1 = jnp.maximum(acc1 * s1_ref[...] + b1_ref[...], 0.0)

    # conv2 -> BN2 -> + identity -> ReLU
    acc2 = conv3x3(y1.reshape(H, W, Cp), w2_ref)
    y2 = acc2 * s2_ref[...] + b2_ref[...]
    out = jnp.maximum(y2 + x.reshape(HW, Cp), 0.0)

    o_ref[...] = out.reshape(1, H, W, Cp)                 # lane-dense f32 store


def _fold_bn(gamma, beta, mean, var, c_pad, eps=1e-5):
    """Eval-mode BatchNorm folded into per-channel scale & bias (f32)."""
    scale = gamma / jnp.sqrt(var + eps)
    bias = beta - mean * scale
    if c_pad:
        scale = jnp.pad(scale, (0, c_pad))
        bias = jnp.pad(bias, (0, c_pad))
    return (scale.reshape(1, -1).astype(jnp.float32),
            bias.reshape(1, -1).astype(jnp.float32))


def basic_block(x_nchw, w1_oihw, bn1, w2_oihw, bn2):
    """BasicBlock forward (stride=1, downsample=None). x_nchw: (N, C, H, W)."""
    N, C, H, W = x_nchw.shape
    Cout = w1_oihw.shape[0]
    assert Cout == C, "downsample=None requires inplanes == planes"

    LANE = 128
    Cp = ((C + LANE - 1) // LANE) * LANE
    c_pad = Cp - C

    # NCHW -> NHWC + bf16 cast + channel pad: all fused by XLA into the one
    # layout-conversion pass the wrapper must do anyway.
    x = jnp.transpose(x_nchw, (0, 2, 3, 1)).astype(jnp.bfloat16)
    if c_pad:
        x = jnp.pad(x, ((0, 0), (0, 0), (0, 0), (0, c_pad)))

    def prep_w(w_oihw):
        w = jnp.transpose(w_oihw, (2, 3, 1, 0))            # OIHW -> HWIO
        if c_pad:
            w = jnp.pad(w, ((0, 0), (0, 0), (0, c_pad), (0, c_pad)))
        # (3, 3, Cp, Cp) -> (3, 3*Cp, Cp): kh slabs with (kw, cin) folded into K.
        return w.reshape(3, 3 * Cp, Cp).astype(jnp.bfloat16)

    w1 = prep_w(w1_oihw)
    w2 = prep_w(w2_oihw)
    s1, b1 = _fold_bn(*bn1, c_pad=c_pad)
    s2, b2 = _fold_bn(*bn2, c_pad=c_pad)

    out_nhwc = pl.pallas_call(
        basic_block_kernel,
        out_shape=jax.ShapeDtypeStruct((N, H, W, Cp), jnp.float32),
        grid_spec=pltpu.PrefetchScalarGridSpec(
            num_scalar_prefetch=0,
            grid=(N,),
            in_specs=[
                pl.BlockSpec((1, H, W, Cp), lambda n: (n, 0, 0, 0)),
                pl.BlockSpec((3, 3 * Cp, Cp), lambda n: (0, 0, 0)),
                pl.BlockSpec((1, Cp), lambda n: (0, 0)),
                pl.BlockSpec((1, Cp), lambda n: (0, 0)),
                pl.BlockSpec((3, 3 * Cp, Cp), lambda n: (0, 0, 0)),
                pl.BlockSpec((1, Cp), lambda n: (0, 0)),
                pl.BlockSpec((1, Cp), lambda n: (0, 0)),
            ],
            out_specs=pl.BlockSpec((1, H, W, Cp), lambda n: (n, 0, 0, 0)),
        ),
        compiler_params=pltpu.CompilerParams(
            dimension_semantics=("parallel",)),
    )(x, w1, s1, b1, w2, s2, b2)

    out_nhwc = out_nhwc[..., :C]                           # drop channel padding
    return jnp.transpose(out_nhwc, (0, 3, 1, 2))           # back to NCHW


# ---------------- pure-JAX reference (for correctness check) ----------------
def _ref_forward(x, w1, bn1, w2, bn2, eps=1e-5):
    def conv(x, w):
        return jax.lax.conv_general_dilated(
            x, w, window_strides=(1, 1), padding=((1, 1), (1, 1)),
            dimension_numbers=("NCHW", "OIHW", "NCHW"))

    def bn(x, gamma, beta, mean, var):
        g = gamma[None, :, None, None]
        b = beta[None, :, None, None]
        m = mean[None, :, None, None]
        v = var[None, :, None, None]
        return (x - m) / jnp.sqrt(v + eps) * g + b

    out = jax.nn.relu(bn(conv(x, w1), *bn1))
    out = bn(conv(out, w2), *bn2)
    return jax.nn.relu(out + x)


if __name__ == "__main__":
    key = jax.random.PRNGKey(0)
    N, C, H, W = 2, 4, 16, 16                     # inplanes = planes = 4
    ks = jax.random.split(key, 11)

    x = jax.random.normal(ks[0], (N, C, H, W), jnp.float32)
    # conv weights, PyTorch OIHW layout, bias=False
    w1 = 0.1 * jax.random.normal(ks[1], (C, C, 3, 3), jnp.float32)
    w2 = 0.1 * jax.random.normal(ks[2], (C, C, 3, 3), jnp.float32)
    # deterministic BatchNorm params: (gamma, beta, running_mean, running_var)
    bn1 = (1.0 + 0.1 * jax.random.normal(ks[3], (C,), jnp.float32),
           0.1 * jax.random.normal(ks[4], (C,), jnp.float32),
           0.1 * jax.random.normal(ks[5], (C,), jnp.float32),
           1.0 + 0.1 * jnp.abs(jax.random.normal(ks[6], (C,), jnp.float32)))
    bn2 = (1.0 + 0.1 * jax.random.normal(ks[7], (C,), jnp.float32),
           0.1 * jax.random.normal(ks[8], (C,), jnp.float32),
           0.1 * jax.random.normal(ks[9], (C,), jnp.float32),
           1.0 + 0.1 * jnp.abs(jax.random.normal(ks[10], (C,), jnp.float32)))

    out = basic_block(x, w1, bn1, w2, bn2)
    out = jax.block_until_ready(out)

    ref = _ref_forward(x, w1, bn1, w2, bn2)
    assert out.shape == (N, C, H, W), out.shape
    # Tolerance relaxed vs. the pure-f32 version because activations/weights
    # are bf16 on the MXU (accumulation and elementwise math remain f32).
    max_err = float(jnp.max(jnp.abs(out - ref)))
    assert jnp.allclose(out, ref, atol=8e-2, rtol=8e-2), max_err
    print("KERNEL_OK")
</pallas_src>

<mosaic_0001>
module attributes {stable_mosaic.version = 11 : i64} {
  func.func @basic_block_kernel(%arg0: i32, %arg1: memref<1x16x16x128xbf16, #tpu.memory_space<vmem>>, %arg2: memref<3x384x128xbf16, #tpu.memory_space<vmem>>, %arg3: memref<1x128xf32, #tpu.memory_space<vmem>>, %arg4: memref<1x128xf32, #tpu.memory_space<vmem>>, %arg5: memref<3x384x128xbf16, #tpu.memory_space<vmem>>, %arg6: memref<1x128xf32, #tpu.memory_space<vmem>>, %arg7: memref<1x128xf32, #tpu.memory_space<vmem>>, %arg8: memref<1x16x16x128xf32, #tpu.memory_space<vmem>>) attributes {dimension_semantics = [#tpu.dimension_semantics<parallel>], iteration_bounds = array<i64: 2>, scalar_prefetch = 0 : i64, scratch_operands = 0 : i64, tpu.core_type = #tpu.core_type<tc>, window_params = [{transform_indices = @transform_0, window_bounds = array<i64: 1, 16, 16, 128>}, {pipeline_mode = #tpu.pipeline_mode<synchronous>, transform_indices = @transform_1, window_bounds = array<i64: 3, 384, 128>}, {pipeline_mode = #tpu.pipeline_mode<synchronous>, transform_indices = @transform_2, window_bounds = array<i64: 1, 128>}, {pipeline_mode = #tpu.pipeline_mode<synchronous>, transform_indices = @transform_3, window_bounds = array<i64: 1, 128>}, {pipeline_mode = #tpu.pipeline_mode<synchronous>, transform_indices = @transform_4, window_bounds = array<i64: 3, 384, 128>}, {pipeline_mode = #tpu.pipeline_mode<synchronous>, transform_indices = @transform_5, window_bounds = array<i64: 1, 128>}, {pipeline_mode = #tpu.pipeline_mode<synchronous>, transform_indices = @transform_6, window_bounds = array<i64: 1, 128>}, {transform_indices = @transform_7, window_bounds = array<i64: 1, 16, 16, 128>}]} {
    %c0 = arith.constant 0 : index
    %c0_0 = arith.constant 0 : index
    %c0_1 = arith.constant 0 : index
    %c0_2 = arith.constant 0 : index
    %0 = vector.load %arg1[%c0, %c0_0, %c0_1, %c0_2] : memref<1x16x16x128xbf16, #tpu.memory_space<vmem>>, vector<1x16x16x128xbf16>
    %1 = vector.shape_cast %0 : vector<1x16x16x128xbf16> to vector<16x16x128xbf16>
    %2 = arith.extf %1 : vector<16x16x128xbf16> to vector<16x16x128xf32>
    %3 = tpu.iota {dimensions = array<i32: 1>} : vector<16x16x128xi32>
    %c1_i32 = arith.constant 1 : i32
    %4 = vector.broadcast %c1_i32 : i32 to vector<16x16x128xi32>
    %5 = arith.cmpi sge, %3, %4 : vector<16x16x128xi32>
    %c1_i32_3 = arith.constant 1 : i32
    %6 = tpu.dynamic_rotate %2 by %c1_i32_3 dim 1 : vector<16x16x128xf32>, i32 -> vector<16x16x128xf32>
    %cst = arith.constant 0.000000e+00 : f32
    %7 = vector.broadcast %cst : f32 to vector<16x16x128xf32>
    %8 = arith.select %5, %6, %7 : vector<16x16x128xi1>, vector<16x16x128xf32>
    %c15_i32 = arith.constant 15 : i32
    %9 = vector.broadcast %c15_i32 : i32 to vector<16x16x128xi32>
    %10 = arith.cmpi slt, %3, %9 : vector<16x16x128xi32>
    %c15_i32_4 = arith.constant 15 : i32
    %11 = tpu.dynamic_rotate %2 by %c15_i32_4 dim 1 : vector<16x16x128xf32>, i32 -> vector<16x16x128xf32>
    %cst_5 = arith.constant 0.000000e+00 : f32
    %12 = vector.broadcast %cst_5 : f32 to vector<16x16x128xf32>
    %13 = arith.select %10, %11, %12 : vector<16x16x128xi1>, vector<16x16x128xf32>
    %14 = tpu.concatenate %8, %2, %13 in 2 : vector<16x16x128xf32>, vector<16x16x128xf32>, vector<16x16x128xf32> -> vector<16x16x384xf32>
    %cst_6 = arith.constant 0.000000e+00 : f32
    %15 = vector.broadcast %cst_6 : f32 to vector<1x16x384xf32>
    %16 = tpu.concatenate %15, %14, %15 in 0 : vector<1x16x384xf32>, vector<16x16x384xf32>, vector<1x16x384xf32> -> vector<18x16x384xf32>
    %cst_7 = arith.constant 0.000000e+00 : f32
    %17 = vector.broadcast %cst_7 : f32 to vector<256x128xf32>
    %18 = vector.extract_strided_slice %16 {offsets = [0, 0, 0], sizes = [16, 16, 384], strides = [1, 1, 1]} : vector<18x16x384xf32> to vector<16x16x384xf32>
    %19 = vector.shape_cast %18 : vector<16x16x384xf32> to vector<256x384xf32>
    %20 = arith.truncf %19 : vector<256x384xf32> to vector<256x384xbf16>
    %c0_8 = arith.constant 0 : index
    %c0_9 = arith.constant 0 : index
    %c0_10 = arith.constant 0 : index
    %21 = vector.load %arg2[%c0_8, %c0_9, %c0_10] : memref<3x384x128xbf16, #tpu.memory_space<vmem>>, vector<1x384x128xbf16>
    %22 = vector.shape_cast %21 : vector<1x384x128xbf16> to vector<384x128xbf16>
    %cst_11 = arith.constant dense<0.000000e+00> : vector<256x128xf32>
    %23 = tpu.matmul %20, %22, %cst_11 {dimension_numbers = #tpu.dot_dimension_numbers<[1], [0], [0], [1], [0, 0, 1, 1], [], []>} : vector<256x384xbf16>, vector<384x128xbf16>, vector<256x128xf32> -> vector<256x128xf32>
    %24 = arith.addf %17, %23 : vector<256x128xf32>
    %25 = vector.extract_strided_slice %16 {offsets = [1, 0, 0], sizes = [16, 16, 384], strides = [1, 1, 1]} : vector<18x16x384xf32> to vector<16x16x384xf32>
    %26 = vector.shape_cast %25 : vector<16x16x384xf32> to vector<256x384xf32>
    %27 = arith.truncf %26 : vector<256x384xf32> to vector<256x384xbf16>
    %c1 = arith.constant 1 : index
    %c0_12 = arith.constant 0 : index
    %c0_13 = arith.constant 0 : index
    %28 = vector.load %arg2[%c1, %c0_12, %c0_13] : memref<3x384x128xbf16, #tpu.memory_space<vmem>>, vector<1x384x128xbf16>
    %29 = vector.shape_cast %28 : vector<1x384x128xbf16> to vector<384x128xbf16>
    %cst_14 = arith.constant dense<0.000000e+00> : vector<256x128xf32>
    %30 = tpu.matmul %27, %29, %cst_14 {dimension_numbers = #tpu.dot_dimension_numbers<[1], [0], [0], [1], [0, 0, 1, 1], [], []>} : vector<256x384xbf16>, vector<384x128xbf16>, vector<256x128xf32> -> vector<256x128xf32>
    %31 = arith.addf %24, %30 : vector<256x128xf32>
    %32 = vector.extract_strided_slice %16 {offsets = [2, 0, 0], sizes = [16, 16, 384], strides = [1, 1, 1]} : vector<18x16x384xf32> to vector<16x16x384xf32>
    %33 = vector.shape_cast %32 : vector<16x16x384xf32> to vector<256x384xf32>
    %34 = arith.truncf %33 : vector<256x384xf32> to vector<256x384xbf16>
    %c2 = arith.constant 2 : index
    %c0_15 = arith.constant 0 : index
    %c0_16 = arith.constant 0 : index
    %35 = vector.load %arg2[%c2, %c0_15, %c0_16] : memref<3x384x128xbf16, #tpu.memory_space<vmem>>, vector<1x384x128xbf16>
    %36 = vector.shape_cast %35 : vector<1x384x128xbf16> to vector<384x128xbf16>
    %cst_17 = arith.constant dense<0.000000e+00> : vector<256x128xf32>
    %37 = tpu.matmul %34, %36, %cst_17 {dimension_numbers = #tpu.dot_dimension_numbers<[1], [0], [0], [1], [0, 0, 1, 1], [], []>} : vector<256x384xbf16>, vector<384x128xbf16>, vector<256x128xf32> -> vector<256x128xf32>
    %38 = arith.addf %31, %37 : vector<256x128xf32>
    %c0_18 = arith.constant 0 : index
    %c0_19 = arith.constant 0 : index
    %39 = vector.load %arg3[%c0_18, %c0_19] : memref<1x128xf32, #tpu.memory_space<vmem>>, vector<1x128xf32>
    %40 = vector.broadcast %39 : vector<1x128xf32> to vector<256x128xf32>
    %41 = arith.mulf %38, %40 : vector<256x128xf32>
    %c0_20 = arith.constant 0 : index
    %c0_21 = arith.constant 0 : index
    %42 = vector.load %arg4[%c0_20, %c0_21] : memref<1x128xf32, #tpu.memory_space<vmem>>, vector<1x128xf32>
    %43 = vector.broadcast %42 : vector<1x128xf32> to vector<256x128xf32>
    %44 = arith.addf %41, %43 : vector<256x128xf32>
    %cst_22 = arith.constant 0.000000e+00 : f32
    %45 = vector.broadcast %cst_22 : f32 to vector<256x128xf32>
    %46 = arith.maximumf %44, %45 : vector<256x128xf32>
    %47 = vector.shape_cast %46 : vector<256x128xf32> to vector<16x16x128xf32>
    %48 = tpu.iota {dimensions = array<i32: 1>} : vector<16x16x128xi32>
    %c1_i32_23 = arith.constant 1 : i32
    %49 = vector.broadcast %c1_i32_23 : i32 to vector<16x16x128xi32>
    %50 = arith.cmpi sge, %48, %49 : vector<16x16x128xi32>
    %c1_i32_24 = arith.constant 1 : i32
    %51 = tpu.dynamic_rotate %47 by %c1_i32_24 dim 1 : vector<16x16x128xf32>, i32 -> vector<16x16x128xf32>
    %cst_25 = arith.constant 0.000000e+00 : f32
    %52 = vector.broadcast %cst_25 : f32 to vector<16x16x128xf32>
    %53 = arith.select %50, %51, %52 : vector<16x16x128xi1>, vector<16x16x128xf32>
    %c15_i32_26 = arith.constant 15 : i32
    %54 = vector.broadcast %c15_i32_26 : i32 to vector<16x16x128xi32>
    %55 = arith.cmpi slt, %48, %54 : vector<16x16x128xi32>
    %c15_i32_27 = arith.constant 15 : i32
    %56 = tpu.dynamic_rotate %47 by %c15_i32_27 dim 1 : vector<16x16x128xf32>, i32 -> vector<16x16x128xf32>
    %cst_28 = arith.constant 0.000000e+00 : f32
    %57 = vector.broadcast %cst_28 : f32 to vector<16x16x128xf32>
    %58 = arith.select %55, %56, %57 : vector<16x16x128xi1>, vector<16x16x128xf32>
    %59 = tpu.concatenate %53, %47, %58 in 2 : vector<16x16x128xf32>, vector<16x16x128xf32>, vector<16x16x128xf32> -> vector<16x16x384xf32>
    %cst_29 = arith.constant 0.000000e+00 : f32
    %60 = vector.broadcast %cst_29 : f32 to vector<1x16x384xf32>
    %61 = tpu.concatenate %60, %59, %60 in 0 : vector<1x16x384xf32>, vector<16x16x384xf32>, vector<1x16x384xf32> -> vector<18x16x384xf32>
    %cst_30 = arith.constant 0.000000e+00 : f32
    %62 = vector.broadcast %cst_30 : f32 to vector<256x128xf32>
    %63 = vector.extract_strided_slice %61 {offsets = [0, 0, 0], sizes = [16, 16, 384], strides = [1, 1, 1]} : vector<18x16x384xf32> to vector<16x16x384xf32>
    %64 = vector.shape_cast %63 : vector<16x16x384xf32> to vector<256x384xf32>
    %65 = arith.truncf %64 : vector<256x384xf32> to vector<256x384xbf16>
    %c0_31 = arith.constant 0 : index
    %c0_32 = arith.constant 0 : index
    %c0_33 = arith.constant 0 : index
    %66 = vector.load %arg5[%c0_31, %c0_32, %c0_33] : memref<3x384x128xbf16, #tpu.memory_space<vmem>>, vector<1x384x128xbf16>
    %67 = vector.shape_cast %66 : vector<1x384x128xbf16> to vector<384x128xbf16>
    %cst_34 = arith.constant dense<0.000000e+00> : vector<256x128xf32>
    %68 = tpu.matmul %65, %67, %cst_34 {dimension_numbers = #tpu.dot_dimension_numbers<[1], [0], [0], [1], [0, 0, 1, 1], [], []>} : vector<256x384xbf16>, vector<384x128xbf16>, vector<256x128xf32> -> vector<256x128xf32>
    %69 = arith.addf %62, %68 : vector<256x128xf32>
    %70 = vector.extract_strided_slice %61 {offsets = [1, 0, 0], sizes = [16, 16, 384], strides = [1, 1, 1]} : vector<18x16x384xf32> to vector<16x16x384xf32>
    %71 = vector.shape_cast %70 : vector<16x16x384xf32> to vector<256x384xf32>
    %72 = arith.truncf %71 : vector<256x384xf32> to vector<256x384xbf16>
    %c1_35 = arith.constant 1 : index
    %c0_36 = arith.constant 0 : index
    %c0_37 = arith.constant 0 : index
    %73 = vector.load %arg5[%c1_35, %c0_36, %c0_37] : memref<3x384x128xbf16, #tpu.memory_space<vmem>>, vector<1x384x128xbf16>
    %74 = vector.shape_cast %73 : vector<1x384x128xbf16> to vector<384x128xbf16>
    %cst_38 = arith.constant dense<0.000000e+00> : vector<256x128xf32>
    %75 = tpu.matmul %72, %74, %cst_38 {dimension_numbers = #tpu.dot_dimension_numbers<[1], [0], [0], [1], [0, 0, 1, 1], [], []>} : vector<256x384xbf16>, vector<384x128xbf16>, vector<256x128xf32> -> vector<256x128xf32>
    %76 = arith.addf %69, %75 : vector<256x128xf32>
    %77 = vector.extract_strided_slice %61 {offsets = [2, 0, 0], sizes = [16, 16, 384], strides = [1, 1, 1]} : vector<18x16x384xf32> to vector<16x16x384xf32>
    %78 = vector.shape_cast %77 : vector<16x16x384xf32> to vector<256x384xf32>
    %79 = arith.truncf %78 : vector<256x384xf32> to vector<256x384xbf16>
    %c2_39 = arith.constant 2 : index
    %c0_40 = arith.constant 0 : index
    %c0_41 = arith.constant 0 : index
    %80 = vector.load %arg5[%c2_39, %c0_40, %c0_41] : memref<3x384x128xbf16, #tpu.memory_space<vmem>>, vector<1x384x128xbf16>
    %81 = vector.shape_cast %80 : vector<1x384x128xbf16> to vector<384x128xbf16>
    %cst_42 = arith.constant dense<0.000000e+00> : vector<256x128xf32>
    %82 = tpu.matmul %79, %81, %cst_42 {dimension_numbers = #tpu.dot_dimension_numbers<[1], [0], [0], [1], [0, 0, 1, 1], [], []>} : vector<256x384xbf16>, vector<384x128xbf16>, vector<256x128xf32> -> vector<256x128xf32>
    %83 = arith.addf %76, %82 : vector<256x128xf32>
    %c0_43 = arith.constant 0 : index
    %c0_44 = arith.constant 0 : index
    %84 = vector.load %arg6[%c0_43, %c0_44] : memref<1x128xf32, #tpu.memory_space<vmem>>, vector<1x128xf32>
    %85 = vector.broadcast %84 : vector<1x128xf32> to vector<256x128xf32>
    %86 = arith.mulf %83, %85 : vector<256x128xf32>
    %c0_45 = arith.constant 0 : index
    %c0_46 = arith.constant 0 : index
    %87 = vector.load %arg7[%c0_45, %c0_46] : memref<1x128xf32, #tpu.memory_space<vmem>>, vector<1x128xf32>
    %88 = vector.broadcast %87 : vector<1x128xf32> to vector<256x128xf32>
    %89 = arith.addf %86, %88 : vector<256x128xf32>
    %90 = vector.shape_cast %2 : vector<16x16x128xf32> to vector<256x128xf32>
    %91 = arith.addf %89, %90 : vector<256x128xf32>
    %cst_47 = arith.constant 0.000000e+00 : f32
    %92 = vector.broadcast %cst_47 : f32 to vector<256x128xf32>
    %93 = arith.maximumf %91, %92 : vector<256x128xf32>
    %94 = vector.shape_cast %93 : vector<256x128xf32> to vector<1x16x16x128xf32>
    %c0_48 = arith.constant 0 : index
    %c0_49 = arith.constant 0 : index
    %c0_50 = arith.constant 0 : index
    %c0_51 = arith.constant 0 : index
    %95 = vector.load %arg8[%c0_48, %c0_49, %c0_50, %c0_51] : memref<1x16x16x128xf32, #tpu.memory_space<vmem>>, vector<1x16x16x128xf32>
    tpu.vector_store %arg8[%c0_48, %c0_49, %c0_50, %c0_51], %94 {strides = array<i32>} : memref<1x16x16x128xf32, #tpu.memory_space<vmem>>, vector<1x16x16x128xf32>,
    return
  }
  func.func @transform_0(%arg0: i32) -> (i32, i32, i32, i32) {
    %c0_i32 = arith.constant 0 : i32
    %c0_i32_0 = arith.constant 0 : i32
    %c0_i32_1 = arith.constant 0 : i32
    %c0_i32_2 = arith.constant 0 : i32
    return %arg0, %c0_i32, %c0_i32_0, %c0_i32_1 : i32, i32, i32, i32
  }
  func.func @transform_1(%arg0: i32) -> (i32, i32, i32) {
    %c0_i32 = arith.constant 0 : i32
    %c0_i32_0 = arith.constant 0 : i32
    %c0_i32_1 = arith.constant 0 : i32
    %c0_i32_2 = arith.constant 0 : i32
    return %c0_i32, %c0_i32_0, %c0_i32_1 : i32, i32, i32
  }
  func.func @transform_2(%arg0: i32) -> (i32, i32) {
    %c0_i32 = arith.constant 0 : i32
    %c0_i32_0 = arith.constant 0 : i32
    %c0_i32_1 = arith.constant 0 : i32
    return %c0_i32, %c0_i32_0 : i32, i32
  }
  func.func @transform_3(%arg0: i32) -> (i32, i32) {
    %c0_i32 = arith.constant 0 : i32
    %c0_i32_0 = arith.constant 0 : i32
    %c0_i32_1 = arith.constant 0 : i32
    return %c0_i32, %c0_i32_0 : i32, i32
  }
  func.func @transform_4(%arg0: i32) -> (i32, i32, i32) {
    %c0_i32 = arith.constant 0 : i32
    %c0_i32_0 = arith.constant 0 : i32
    %c0_i32_1 = arith.constant 0 : i32
    %c0_i32_2 = arith.constant 0 : i32
    return %c0_i32, %c0_i32_0, %c0_i32_1 : i32, i32, i32
  }
  func.func @transform_5(%arg0: i32) -> (i32, i32) {
    %c0_i32 = arith.constant 0 : i32
    %c0_i32_0 = arith.constant 0 : i32
    %c0_i32_1 = arith.constant 0 : i32
    return %c0_i32, %c0_i32_0 : i32, i32
  }
  func.func @transform_6(%arg0: i32) -> (i32, i32) {
    %c0_i32 = arith.constant 0 : i32
    %c0_i32_0 = arith.constant 0 : i32
    %c0_i32_1 = arith.constant 0 : i32
    return %c0_i32, %c0_i32_0 : i32, i32
  }
  func.func @transform_7(%arg0: i32) -> (i32, i32, i32, i32) {
    %c0_i32 = arith.constant 0 : i32
    %c0_i32_0 = arith.constant 0 : i32
    %c0_i32_1 = arith.constant 0 : i32
    %c0_i32_2 = arith.constant 0 : i32
    return %arg0, %c0_i32, %c0_i32_0, %c0_i32_1 : i32, i32, i32, i32
  }
}

</mosaic_0001>

<llo_original>
// kernel: tpu_custom_call.1
$region0: #{tpu_custom_call.1}
  #allocation0 [shape = 'u32[]', space=smem, size = 0x4, offset = 0x4, fixed_abs, tag = 'smem constant byte address 0x4 - core index']
  #allocation1 [shape = 'u32[144,128]{1,0:T(1,128)}', space=vmem, size = 0x12000, scoped, tag = 'internal scratch']
  %s0 = inlined_call_operand.hbm [shape: bf16[2,16,16,128], index: 0, kind: input, shape index: {}]
  %s1 = inlined_call_operand.hbm [shape: bf16[3,384,128], index: 1, kind: input, shape index: {}]
  %s2 = inlined_call_operand.vmem [shape: f32[1,128], index: 2, kind: input, shape index: {}]
  %s3 = inlined_call_operand.vmem [shape: f32[1,128], index: 3, kind: input, shape index: {}]
  %s4 = inlined_call_operand.hbm [shape: bf16[3,384,128], index: 4, kind: input, shape index: {}]
  %s5 = inlined_call_operand.vmem [shape: f32[1,128], index: 5, kind: input, shape index: {}]
  %s6 = inlined_call_operand.vmem [shape: f32[1,128], index: 6, kind: input, shape index: {}]
  %s7 = inlined_call_operand.hbm [shape: f32[2,16,16,128], index: 7, kind: output, shape index: {}]
  %s8 = sld [smem:[#allocation0]]
  $region73: #{tpu_custom_call.1} parent=0
    _
  %s10 = ssub.s32 1, %s8
  %s11 = scalar_select 0, %s10, %s8
  $region1: #{tpu_custom_call.1} parent=0
    #allocation2 [shape = 'u8[131072]{0}', space=vmem, size = 0x20000, scoped, tag = 'input window, operand 0']
    #allocation3 [shape = 's32[2]{0}', space=sflag, size = 0x8, scoped, tag = 'scoped memory for tpu_custom_call.1']
    #allocation4 [shape = 's32[2]{0}', space=sflag, size = 0x8, scoped, tag = 'scoped memory for tpu_custom_call.1']
    #allocation5 [shape = 'u8[294912]{0}', space=vmem, size = 0x48000, scoped, tag = 'input window, operand 1, single buffered']
    #allocation6 [shape = 's32[1]{0}', space=sflag, size = 0x4, scoped, tag = 'scoped memory for tpu_custom_call.1']
    #allocation7 [shape = 'u8[294912]{0}', space=vmem, size = 0x48000, scoped, tag = 'input window, operand 4, single buffered']
    #allocation8 [shape = 'u8[262144]{0}', space=vmem, size = 0x40000, scoped, tag = 'output window, operand 0']
    %12 = vsyncpa [#allocation3], 0
    %s13 = scalar_lea.sflag [#allocation3], 1
    %14 = vsyncpa %s13, 0
    %15 = vsyncpa [#allocation6], 0
    %16 = vsyncpa [#allocation4], 0
    %s17 = scalar_lea.sflag [#allocation4], 1
    %18 = vsyncpa %s17, 0
    loop: start=0, step=1, limit=4
    $region2: #{tpu_custom_call.1} parent=1 // loop_pre_header
      _
    $region3: #{tpu_custom_call.1} parent=1 // loop_header
      %s20 = sphi 0, %s24
      %p21 = scmp.ge.s32.totalorder %s20, 4
      %s30 = sphi 0, %s32
      %s33 = sphi 0, %s30
      %s34 = sphi 0, %s33
      %s50 = sphi 0, %s34
      %s54 = sphi 0, %s54
      %s56 = sphi 0, %s54
      %s57 = sphi 0, %s56
      %s71 = sphi 0, %s57
      %s75 = sphi 0, %s75
      %s77 = sphi 0, %s75
      %s78 = sphi 0, %s77
      %s92 = sphi 0, %s78
      %s96 = sphi 0, %s96
      %s98 = sphi 0, %s96
      %s99 = sphi 0, %s98
      %s113 = sphi 0, %s99
      %s117 = sphi 0, %s117
      %s119 = sphi 0, %s117
      %s120 = sphi 0, %s119
      %s134 = sphi 0, %s120
      %s138 = sphi 0, %s138
      %s140 = sphi 0, %s138
      %s141 = sphi 0, %s140
      %s155 = sphi 0, %s141
      %s159 = sphi 0, %s159
      %s161 = sphi 0, %s159
      %s162 = sphi 0, %s161
      %s176 = sphi 0, %s162
      %s182 = sphi 0, %s184
      %s185 = sphi 0, %s182
      %s186 = sphi 0, %s185
      %s202 = sphi 0, %s186
    $region4: #{tpu_custom_call.1} parent=1 // loop_header_branch
      %23 = sbr.rel (%p21) target = $region8
    $region5: #{tpu_custom_call.1} parent=1 // loop_body
      %s25 = ssub.s32 %s20, 1
      %s26 = ssub.s32 %s20, 2
      %s27 = sadd.s32 %s20, 1
      %s28 = ssub.s32 %s20, %s27
      %p29 = scmp.eq.s32.totalorder %s28, 0
      %s31 = sadd.s32 %s30, 1
      %s32 = scalar_select %p29, %s30, %s31
      %p35 = pneg %p29
      %p36 = scmp.eq.s32.totalorder %s20, 1
      %p37 = por %p35, %p36
      %p38 = scmp.ne.s32.totalorder %s30, %s33
      %p39 = scmp.eq.s32.totalorder %s20, 0
      %p40 = por %p38, %p39
      %p41 = scmp.ne.s32.totalorder %s30, %s33
      %p42 = scmp.eq.s32.totalorder %s25, 1
      %p43 = por %p41, %p42
      %p44 = scmp.ne.s32.totalorder %s33, %s34
      %p45 = scmp.eq.s32.totalorder %s25, 0
      %p46 = por %p44, %p45
      %p47 = scmp.ne.s32.totalorder %s33, %s34
      %p48 = scmp.eq.s32.totalorder %s26, 1
      %p49 = por %p47, %p48
      %p51 = scmp.ne.s32.totalorder %s34, %s50
      %p52 = scmp.eq.s32.totalorder %s26, 0
      %p53 = por %p51, %p52
      %s55 = sadd.s32 %s54, 1
      %p58 = scmp.eq.s32.totalorder %s20, 1
      %p59 = scmp.ne.s32.totalorder %s54, %s56
      %p60 = scmp.eq.s32.totalorder %s20, 0
      %p61 = por %p59, %p60
      %p62 = scmp.ne.s32.totalorder %s54, %s56
      %p63 = scmp.eq.s32.totalorder %s25, 1
      %p64 = por %p62, %p63
      %p65 = scmp.ne.s32.totalorder %s56, %s57
      %p66 = scmp.eq.s32.totalorder %s25, 0
      %p67 = por %p65, %p66
      %p68 = scmp.ne.s32.totalorder %s56, %s57
      %p69 = scmp.eq.s32.totalorder %s26, 1
      %p70 = por %p68, %p69
      %p72 = scmp.ne.s32.totalorder %s57, %s71
      %p73 = scmp.eq.s32.totalorder %s26, 0
      %p74 = por %p72, %p73
      %s76 = sadd.s32 %s75, 1
      %p79 = scmp.eq.s32.totalorder %s20, 1
      %p80 = scmp.ne.s32.totalorder %s75, %s77
      %p81 = scmp.eq.s32.totalorder %s20, 0
      %p82 = por %p80, %p81
      %p83 = scmp.ne.s32.totalorder %s75, %s77
      %p84 = scmp.eq.s32.totalorder %s25, 1
      %p85 = por %p83, %p84
      %p86 = scmp.ne.s32.totalorder %s77, %s78
      %p87 = scmp.eq.s32.totalorder %s25, 0
      %p88 = por %p86, %p87
      %p89 = scmp.ne.s32.totalorder %s77, %s78
      %p90 = scmp.eq.s32.totalorder %s26, 1
      %p91 = por %p89, %p90
      %p93 = scmp.ne.s32.totalorder %s78, %s92
      %p94 = scmp.eq.s32.totalorder %s26, 0
      %p95 = por %p93, %p94
      %s97 = sadd.s32 %s96, 1
      %p100 = scmp.eq.s32.totalorder %s20, 1
      %p101 = scmp.ne.s32.totalorder %s96, %s98
      %p102 = scmp.eq.s32.totalorder %s20, 0
      %p103 = por %p101, %p102
      %p104 = scmp.ne.s32.totalorder %s96, %s98
      %p105 = scmp.eq.s32.totalorder %s25, 1
      %p106 = por %p104, %p105
      %p107 = scmp.ne.s32.totalorder %s98, %s99
      %p108 = scmp.eq.s32.totalorder %s25, 0
      %p109 = por %p107, %p108
      %p110 = scmp.ne.s32.totalorder %s98, %s99
      %p111 = scmp.eq.s32.totalorder %s26, 1
      %p112 = por %p110, %p111
      %p114 = scmp.ne.s32.totalorder %s99, %s113
      %p115 = scmp.eq.s32.totalorder %s26, 0
      %p116 = por %p114, %p115
      %s118 = sadd.s32 %s117, 1
      %p121 = scmp.eq.s32.totalorder %s20, 1
      %p122 = scmp.ne.s32.totalorder %s117, %s119
      %p123 = scmp.eq.s32.totalorder %s20, 0
      %p124 = por %p122, %p123
      %p125 = scmp.ne.s32.totalorder %s117, %s119
      %p126 = scmp.eq.s32.totalorder %s25, 1
      %p127 = por %p125, %p126
      %p128 = scmp.ne.s32.totalorder %s119, %s120
      %p129 = scmp.eq.s32.totalorder %s25, 0
      %p130 = por %p128, %p129
      %p131 = scmp.ne.s32.totalorder %s119, %s120
      %p132 = scmp.eq.s32.totalorder %s26, 1
      %p133 = por %p131, %p132
      %p135 = scmp.ne.s32.totalorder %s120, %s134
      %p136 = scmp.eq.s32.totalorder %s26, 0
      %p137 = por %p135, %p136
      %s139 = sadd.s32 %s138, 1
      %p142 = scmp.eq.s32.totalorder %s20, 1
      %p143 = scmp.ne.s32.totalorder %s138, %s140
      %p144 = scmp.eq.s32.totalorder %s20, 0
      %p145 = por %p143, %p144
      %p146 = scmp.ne.s32.totalorder %s138, %s140
      %p147 = scmp.eq.s32.totalorder %s25, 1
      %p148 = por %p146, %p147
      %p149 = scmp.ne.s32.totalorder %s140, %s141
      %p150 = scmp.eq.s32.totalorder %s25, 0
      %p151 = por %p149, %p150
      %p152 = scmp.ne.s32.totalorder %s140, %s141
      %p153 = scmp.eq.s32.totalorder %s26, 1
      %p154 = por %p152, %p153
      %p156 = scmp.ne.s32.totalorder %s141, %s155
      %p157 = scmp.eq.s32.totalorder %s26, 0
      %p158 = por %p156, %p157
      %s160 = sadd.s32 %s159, 1
      %p163 = scmp.eq.s32.totalorder %s20, 1
      %p164 = scmp.ne.s32.totalorder %s159, %s161
      %p165 = scmp.eq.s32.totalorder %s20, 0
      %p166 = por %p164, %p165
      %p167 = scmp.ne.s32.totalorder %s159, %s161
      %p168 = scmp.eq.s32.totalorder %s25, 1
      %p169 = por %p167, %p168
      %p170 = scmp.ne.s32.totalorder %s161, %s162
      %p171 = scmp.eq.s32.totalorder %s25, 0
      %p172 = por %p170, %p171
      %p173 = scmp.ne.s32.totalorder %s161, %s162
      %p174 = scmp.eq.s32.totalorder %s26, 1
      %p175 = por %p173, %p174
      %p177 = scmp.ne.s32.totalorder %s162, %s176
      %p178 = scmp.eq.s32.totalorder %s26, 0
      %p179 = por %p177, %p178
      %s180 = ssub.s32 %s20, %s27
      %p181 = scmp.eq.s32.totalorder %s180, 0
      %s183 = sadd.s32 %s182, 1
      %s184 = scalar_select %p181, %s182, %s183
      %p187 = pneg %p181
      %p188 = scmp.eq.s32.totalorder %s20, 1
      %p189 = por %p187, %p188
      %p190 = scmp.ne.s32.totalorder %s182, %s185
      %p191 = scmp.eq.s32.totalorder %s20, 0
      %p192 = por %p190, %p191
      %p193 = scmp.ne.s32.totalorder %s182, %s185
      %p194 = scmp.eq.s32.totalorder %s25, 1
      %p195 = por %p193, %p194
      %p196 = scmp.ne.s32.totalorder %s185, %s186
      %p197 = scmp.eq.s32.totalorder %s25, 0
      %p198 = por %p196, %p197
      %p199 = scmp.ne.s32.totalorder %s185, %s186
      %p200 = scmp.eq.s32.totalorder %s26, 1
      %p201 = por %p199, %p200
      %p203 = scmp.ne.s32.totalorder %s186, %s202
      %p204 = scmp.eq.s32.totalorder %s26, 0
      %p205 = por %p203, %p204
      %p206 = scmp.le.s32.totalorder 1, %s20
      %p207 = scmp.lt.s32.totalorder %s20, 3
      %p208 = pnand %p206, %p207
      %p209 = pneg %p208
      // Predicated region
      $region9: #{tpu_custom_call.1} parent=5 // pred_check
        _
      $region10: #{tpu_custom_call.1} parent=5 // pred_check_branch
        %211 = sbr.rel (%p208) target = $region12
      $region11: #{tpu_custom_call.1} parent=5 // pred_region
        %s212 = ssub.s32 %s20, 1
        // Predicated region
        $region13: #{tpu_custom_call.1} parent=11 // pred_check
          %p213 = pneg %p67
        $region14: #{tpu_custom_call.1} parent=11 // pred_check_branch
          %215 = sbr.rel (%p213) target = $region16
        $region15: #{tpu_custom_call.1} parent=11 // pred_region
          %s217 = ssub.s32 9216, 9216
          %218 = vsyncadd [#allocation6], %s217
          %s219 = sshll.u32 [#allocation5], 4
          %s220 = int_to_ptr.vmem [resolvable:$true] %s219
          %225 = dma.hbm_to_vmem [thread:$0]  %s1, 9216, %s220, [#allocation6], 64, 64, 4
        $region16: #{tpu_custom_call.1} parent=11 // pred_fallthru
          _
        // Predicated region
        $region17: #{tpu_custom_call.1} parent=11 // pred_check
          %p226 = pneg %p88
        $region18: #{tpu_custom_call.1} parent=11 // pred_check_branch
          %228 = sbr.rel (%p226) target = $region20
        $region19: #{tpu_custom_call.1} parent=11 // pred_region
          _
        $region20: #{tpu_custom_call.1} parent=11 // pred_fallthru
          _
        // Predicated region
        $region21: #{tpu_custom_call.1} parent=11 // pred_check
          %p229 = pneg %p109
        $region22: #{tpu_custom_call.1} parent=11 // pred_check_branch
          %231 = sbr.rel (%p229) target = $region24
        $region23: #{tpu_custom_call.1} parent=11 // pred_region
          _
        $region24: #{tpu_custom_call.1} parent=11 // pred_fallthru
          _
        // Predicated region
        $region25: #{tpu_custom_call.1} parent=11 // pred_check
          %p232 = pneg %p130
        $region26: #{tpu_custom_call.1} parent=11 // pred_check_branch
          %234 = sbr.rel (%p232) target = $region28
        $region27: #{tpu_custom_call.1} parent=11 // pred_region
          %s236 = ssub.s32 9216, 9216
          %237 = vsyncadd [#allocation6], %s236
          %s238 = sshll.u32 [#allocation7], 4
          %s239 = int_to_ptr.vmem [resolvable:$true] %s238
          %244 = dma.hbm_to_vmem [thread:$0]  %s4, 9216, %s239, [#allocation6], 64, 64, 4
        $region28: #{tpu_custom_call.1} parent=11 // pred_fallthru
          _
        // Predicated region
        $region29: #{tpu_custom_call.1} parent=11 // pred_check
          %p245 = pneg %p151
        $region30: #{tpu_custom_call.1} parent=11 // pred_check_branch
          %247 = sbr.rel (%p245) target = $region32
        $region31: #{tpu_custom_call.1} parent=11 // pred_region
          _
        $region32: #{tpu_custom_call.1} parent=11 // pred_fallthru
          _
        // Predicated region
        $region33: #{tpu_custom_call.1} parent=11 // pred_check
          %p248 = pneg %p172
        $region34: #{tpu_custom_call.1} parent=11 // pred_check_branch
          %250 = sbr.rel (%p248) target = $region36
        $region35: #{tpu_custom_call.1} parent=11 // pred_region
          _
        $region36: #{tpu_custom_call.1} parent=11 // pred_fallthru
          _
      $region12: #{tpu_custom_call.1} parent=5 // pred_fallthru
        _
      %p251 = scmp.lt.s32.totalorder %s20, 2
      // Predicated region
      $region37: #{tpu_custom_call.1} parent=5 // pred_check
        %p252 = pneg %p251
      $region38: #{tpu_custom_call.1} parent=5 // pred_check_branch
        %254 = sbr.rel (%p252) target = $region40
      $region39: #{tpu_custom_call.1} parent=5 // pred_region
        // Predicated region
        $region41: #{tpu_custom_call.1} parent=39 // pred_check
          %p255 = pneg %p40
        $region42: #{tpu_custom_call.1} parent=39 // pred_check_branch
          %257 = sbr.rel (%p255) target = $region44
        $region43: #{tpu_custom_call.1} parent=39 // pred_region
          %s258 = sand.u32 %s30, 1
          %s259 = scalar_lea.sflag [#allocation3], %s258
          %s260 = sand.u32 %s30, 1
          %s261 = smul.addr %s260, 128
          %s262 = scalar_lea.vmem [#allocation2], %s261
          %s264 = ssub.s32 2048, 2048
          %265 = vsyncadd %s259, %s264
          %s266 = smul.addr %s20, 32
          %s267 = smul.addr %s266, 64
          %s268 = scalar_lea.hbm %s0, %s267
          %s269 = sshll.u32 %s262, 4
          %s270 = int_to_ptr.vmem [resolvable:$true] %s269
          %275 = dma.hbm_to_vmem [thread:$0]  %s268, 2048, %s270, %s259, 64, 64, 4
        $region44: #{tpu_custom_call.1} parent=39 // pred_fallthru
          _
      $region40: #{tpu_custom_call.1} parent=5 // pred_fallthru
        _
      %p276 = scmp.le.s32.totalorder 1, %s20
      %p277 = scmp.lt.s32.totalorder %s20, 3
      %p278 = pnand %p276, %p277
      %p279 = pneg %p278
      // Predicated region
      $region45: #{tpu_custom_call.1} parent=5 // pred_check
        _
      $region46: #{tpu_custom_call.1} parent=5 // pred_check_branch
        %281 = sbr.rel (%p278) target = $region48
      $region47: #{tpu_custom_call.1} parent=5 // pred_region
        %s282 = ssub.s32 %s20, 1
        %s283 = sand.u32 %s33, 1
        %s284 = scalar_lea.sflag [#allocation3], %s283
        %s285 = sand.u32 %s33, 1
        %s286 = smul.addr %s285, 128
        %s287 = scalar_lea.vmem [#allocation2], %s286
        // Predicated region
        $region49: #{tpu_custom_call.1} parent=47 // pred_check
          %p288 = pneg %p46
        $region50: #{tpu_custom_call.1} parent=47 // pred_check_branch
          %290 = sbr.rel (%p288) target = $region52
        $region51: #{tpu_custom_call.1} parent=47 // pred_region
          %291 = dma.done %s284, 2048
        $region52: #{tpu_custom_call.1} parent=47 // pred_fallthru
          _
        // Predicated region
        $region53: #{tpu_custom_call.1} parent=47 // pred_check
          %p292 = pneg %p67
        $region54: #{tpu_custom_call.1} parent=47 // pred_check_branch
          %294 = sbr.rel (%p292) target = $region56
        $region55: #{tpu_custom_call.1} parent=47 // pred_region
          %295 = dma.done [#allocation6], 9216
        $region56: #{tpu_custom_call.1} parent=47 // pred_fallthru
          _
        // Predicated region
        $region57: #{tpu_custom_call.1} parent=47 // pred_check
          %p296 = pneg %p130
        $region58: #{tpu_custom_call.1} parent=47 // pred_check_branch
          %298 = sbr.rel (%p296) target = $region60
        $region59: #{tpu_custom_call.1} parent=47 // pred_region
          %299 = dma.done [#allocation6], 9216
        $region60: #{tpu_custom_call.1} parent=47 // pred_fallthru
          _
        %s300 = sand.u32 %s33, 1
        %s301 = scalar_lea.sflag [#allocation3], %s300
        %s302 = sand.u32 %s33, 1
        %s303 = smul.addr %s302, 128
        %s304 = scalar_lea.vmem [#allocation2], %s303
        %p305 = pneg %p46
        %p306 = pneg %p43
        %p307 = pneg %p67
        %p308 = pneg %p64
        %p309 = pneg %p88
        %p310 = pneg %p85
        %p311 = pneg %p109
        %p312 = pneg %p106
        %p313 = pneg %p130
        %p314 = pneg %p127
        %p315 = pneg %p151
        %p316 = pneg %p148
        %p317 = pneg %p172
        %p318 = pneg %p169
        %p319 = pneg %p198
        %p320 = pneg %p195
        %s321 = sand.u32 %s185, 1
        %s322 = scalar_lea.sflag [#allocation4], %s321
        %s323 = sand.u32 %s185, 1
        %s324 = smul.addr %s323, 256
        %s325 = scalar_lea.vmem [#allocation8], %s324
        %v327 = vld [vmem:[%s287] sm:$0xf]
        %v328 = vld [vmem:[%s287 + $0x4] sm:$0xf]
        %v329 = vld [vmem:[%s287 + $0x8] sm:$0xf]
        %v330 = vld [vmem:[%s287 + $0xc] sm:$0xf]
        %v331 = vld [vmem:[%s287 + $0x10] sm:$0xf]
        %v332 = vld [vmem:[%s287 + $0x14] sm:$0xf]
        %v333 = vld [vmem:[%s287 + $0x18] sm:$0xf]
        %v334 = vld [vmem:[%s287 + $0x1c] sm:$0xf]
        %v335 = vld [vmem:[%s287 + $0x20] sm:$0xf]
        %v336 = vld [vmem:[%s287 + $0x24] sm:$0xf]
        %v337 = vld [vmem:[%s287 + $0x28] sm:$0xf]
        %v338 = vld [vmem:[%s287 + $0x2c] sm:$0xf]
        %v339 = vld [vmem:[%s287 + $0x30] sm:$0xf]
        %v340 = vld [vmem:[%s287 + $0x34] sm:$0xf]
        %v341 = vld [vmem:[%s287 + $0x38] sm:$0xf]
        %v342 = vld [vmem:[%s287 + $0x3c] sm:$0xf]
        %v343 = vld [vmem:[%s287 + $0x40] sm:$0xf]
        %v344 = vld [vmem:[%s287 + $0x44] sm:$0xf]
        %v345 = vld [vmem:[%s287 + $0x48] sm:$0xf]
        %v346 = vld [vmem:[%s287 + $0x4c] sm:$0xf]
        %v347 = vld [vmem:[%s287 + $0x50] sm:$0xf]
        %v348 = vld [vmem:[%s287 + $0x54] sm:$0xf]
        %v349 = vld [vmem:[%s287 + $0x58] sm:$0xf]
        %v350 = vld [vmem:[%s287 + $0x5c] sm:$0xf]
        %v351 = vld [vmem:[%s287 + $0x60] sm:$0xf]
        %v352 = vld [vmem:[%s287 + $0x64] sm:$0xf]
        %v353 = vld [vmem:[%s287 + $0x68] sm:$0xf]
        %v354 = vld [vmem:[%s287 + $0x6c] sm:$0xf]
        %v355 = vld [vmem:[%s287 + $0x70] sm:$0xf]
        %v356 = vld [vmem:[%s287 + $0x74] sm:$0xf]
        %v357 = vld [vmem:[%s287 + $0x78] sm:$0xf]
        %v358 = vld [vmem:[%s287 + $0x7c] sm:$0xf]
        %v359 = vunpack.c.l.bf16 %v327
        %v360 = vunpack.c.l.bf16 %v328
        %v361 = vunpack.c.l.bf16 %v329
        %v362 = vunpack.c.l.bf16 %v330
        %v363 = vunpack.c.l.bf16 %v331
        %v364 = vunpack.c.l.bf16 %v332
        %v365 = vunpack.c.l.bf16 %v333
        %v366 = vunpack.c.l.bf16 %v334
        %v367 = vunpack.c.l.bf16 %v335
        %v368 = vunpack.c.l.bf16 %v336
        %v369 = vunpack.c.l.bf16 %v337
        %v370 = vunpack.c.l.bf16 %v338
        %v371 = vunpack.c.l.bf16 %v339
        %v372 = vunpack.c.l.bf16 %v340
        %v373 = vunpack.c.l.bf16 %v341
        %v374 = vunpack.c.l.bf16 %v342
        %v375 = vunpack.c.l.bf16 %v343
        %v376 = vunpack.c.l.bf16 %v344
        %v377 = vunpack.c.l.bf16 %v345
        %v378 = vunpack.c.l.bf16 %v346
        %v379 = vunpack.c.l.bf16 %v347
        %v380 = vunpack.c.l.bf16 %v348
        %v381 = vunpack.c.l.bf16 %v349
        %v382 = vunpack.c.l.bf16 %v350
        %v383 = vunpack.c.l.bf16 %v351
        %v384 = vunpack.c.l.bf16 %v352
        %v385 = vunpack.c.l.bf16 %v353
        %v386 = vunpack.c.l.bf16 %v354
        %v387 = vunpack.c.l.bf16 %v355
        %v388 = vunpack.c.l.bf16 %v356
        %v389 = vunpack.c.l.bf16 %v357
        %v390 = vunpack.c.l.bf16 %v358
        %v391 = vlaneseq
        %v392 = vshrl.u32 %v391, 7
        %v393 = vadd.s32 %v392, 8
        %vm394 = vcmp.ge.s32.totalorder %v392, 1
        %vm395 = vcmp.ge.s32.totalorder %v393, 1
        %v396 = vrot.slane %v359, 7
        %v397 = vrot.slane %v361, 7
        %v398 = vrot.slane %v363, 7
        %v399 = vrot.slane %v365, 7
        %v400 = vrot.slane %v367, 7
        %v401 = vrot.slane %v369, 7
        %v402 = vrot.slane %v371, 7
        %v403 = vrot.slane %v373, 7
        %v404 = vrot.slane %v375, 7
        %v405 = vrot.slane %v377, 7
        %v406 = vrot.slane %v379, 7
        %v407 = vrot.slane %v381, 7
        %v408 = vrot.slane %v383, 7
        %v409 = vrot.slane %v385, 7
        %v410 = vrot.slane %v387, 7
        %v411 = vrot.slane %v389, 7
        %v412 = vrot.slane %v360, 7
        %v413 = vrot.slane %v362, 7
        %v414 = vrot.slane %v364, 7
        %v415 = vrot.slane %v366, 7
        %v416 = vrot.slane %v368, 7
        %v417 = vrot.slane %v370, 7
        %v418 = vrot.slane %v372, 7
        %v419 = vrot.slane %v374, 7
        %v420 = vrot.slane %v376, 7
        %v421 = vrot.slane %v378, 7
        %v422 = vrot.slane %v380, 7
        %v423 = vrot.slane %v382, 7
        %v424 = vrot.slane %v384, 7
        %v425 = vrot.slane %v386, 7
        %v426 = vrot.slane %v388, 7
        %v427 = vrot.slane %v390, 7
        %vm428 = vcmp.lt.s32.totalorder %v392, 1
        %v429 = vsel %vm428, %v396, %v412
        %v430 = vsel %vm428, %v397, %v413
        %v431 = vsel %vm428, %v398, %v414
        %v432 = vsel %vm428, %v399, %v415
        %v433 = vsel %vm428, %v400, %v416
        %v434 = vsel %vm428, %v401, %v417
        %v435 = vsel %vm428, %v402, %v418
        %v436 = vsel %vm428, %v403, %v419
        %v437 = vsel %vm428, %v404, %v420
        %v438 = vsel %vm428, %v405, %v421
        %v439 = vsel %vm428, %v406, %v422
        %v440 = vsel %vm428, %v407, %v423
        %v441 = vsel %vm428, %v408, %v424
        %v442 = vsel %vm428, %v409, %v425
        %v443 = vsel %vm428, %v410, %v426
        %v444 = vsel %vm428, %v411, %v427
        %v445 = vsel %vm428, %v412, %v396
        %v446 = vsel %vm428, %v413, %v397
        %v447 = vsel %vm428, %v414, %v398
        %v448 = vsel %vm428, %v415, %v399
        %v449 = vsel %vm428, %v416, %v400
        %v450 = vsel %vm428, %v417, %v401
        %v451 = vsel %vm428, %v418, %v402
        %v452 = vsel %vm428, %v419, %v403
        %v453 = vsel %vm428, %v420, %v404
        %v454 = vsel %vm428, %v421, %v405
        %v455 = vsel %vm428, %v422, %v406
        %v456 = vsel %vm428, %v423, %v407
        %v457 = vsel %vm428, %v424, %v408
        %v458 = vsel %vm428, %v425, %v409
        %v459 = vsel %vm428, %v426, %v410
        %v460 = vsel %vm428, %v427, %v411
        %v461 = vsel %vm394, %v445, 0.0
        %v462 = vsel %vm395, %v429, 0.0
        %v463 = vsel %vm394, %v446, 0.0
        %v464 = vsel %vm395, %v430, 0.0
        %v465 = vsel %vm394, %v447, 0.0
        %v466 = vsel %vm395, %v431, 0.0
        %v467 = vsel %vm394, %v448, 0.0
        %v468 = vsel %vm395, %v432, 0.0
        %v469 = vsel %vm394, %v449, 0.0
        %v470 = vsel %vm395, %v433, 0.0
        %v471 = vsel %vm394, %v450, 0.0
        %v472 = vsel %vm395, %v434, 0.0
        %v473 = vsel %vm394, %v451, 0.0
        %v474 = vsel %vm395, %v435, 0.0
        %v475 = vsel %vm394, %v452, 0.0
        %v476 = vsel %vm395, %v436, 0.0
        %v477 = vsel %vm394, %v453, 0.0
        %v478 = vsel %vm395, %v437, 0.0
        %v479 = vsel %vm394, %v454, 0.0
        %v480 = vsel %vm395, %v438, 0.0
        %v481 = vsel %vm394, %v455, 0.0
        %v482 = vsel %vm395, %v439, 0.0
        %v483 = vsel %vm394, %v456, 0.0
        %v484 = vsel %vm395, %v440, 0.0
        %v485 = vsel %vm394, %v457, 0.0
        %v486 = vsel %vm395, %v441, 0.0
        %v487 = vsel %vm394, %v458, 0.0
        %v488 = vsel %vm395, %v442, 0.0
        %v489 = vsel %vm394, %v459, 0.0
        %v490 = vsel %vm395, %v443, 0.0
        %v491 = vsel %vm394, %v460, 0.0
        %v492 = vsel %vm395, %v444, 0.0
        %vm493 = vcmp.lt.s32.totalorder %v392, 15
        %vm494 = vcmp.lt.s32.totalorder %v393, 15
        %v495 = vrot.slane %v359, 1
        %v496 = vrot.slane %v361, 1
        %v497 = vrot.slane %v363, 1
        %v498 = vrot.slane %v365, 1
        %v499 = vrot.slane %v367, 1
        %v500 = vrot.slane %v369, 1
        %v501 = vrot.slane %v371, 1
        %v502 = vrot.slane %v373, 1
        %v503 = vrot.slane %v375, 1
        %v504 = vrot.slane %v377, 1
        %v505 = vrot.slane %v379, 1
        %v506 = vrot.slane %v381, 1
        %v507 = vrot.slane %v383, 1
        %v508 = vrot.slane %v385, 1
        %v509 = vrot.slane %v387, 1
        %v510 = vrot.slane %v389, 1
        %v511 = vrot.slane %v360, 1
        %v512 = vrot.slane %v362, 1
        %v513 = vrot.slane %v364, 1
        %v514 = vrot.slane %v366, 1
        %v515 = vrot.slane %v368, 1
        %v516 = vrot.slane %v370, 1
        %v517 = vrot.slane %v372, 1
        %v518 = vrot.slane %v374, 1
        %v519 = vrot.slane %v376, 1
        %v520 = vrot.slane %v378, 1
        %v521 = vrot.slane %v380, 1
        %v522 = vrot.slane %v382, 1
        %v523 = vrot.slane %v384, 1
        %v524 = vrot.slane %v386, 1
        %v525 = vrot.slane %v388, 1
        %v526 = vrot.slane %v390, 1
        %vm527 = vcmp.lt.s32.totalorder %v392, 7
        %v528 = vsel %vm527, %v495, %v511
        %v529 = vsel %vm527, %v496, %v512
        %v530 = vsel %vm527, %v497, %v513
        %v531 = vsel %vm527, %v498, %v514
        %v532 = vsel %vm527, %v499, %v515
        %v533 = vsel %vm527, %v500, %v516
        %v534 = vsel %vm527, %v501, %v517
        %v535 = vsel %vm527, %v502, %v518
        %v536 = vsel %vm527, %v503, %v519
        %v537 = vsel %vm527, %v504, %v520
        %v538 = vsel %vm527, %v505, %v521
        %v539 = vsel %vm527, %v506, %v522
        %v540 = vsel %vm527, %v507, %v523
        %v541 = vsel %vm527, %v508, %v524
        %v542 = vsel %vm527, %v509, %v525
        %v543 = vsel %vm527, %v510, %v526
        %v544 = vsel %vm527, %v511, %v495
        %v545 = vsel %vm527, %v512, %v496
        %v546 = vsel %vm527, %v513, %v497
        %v547 = vsel %vm527, %v514, %v498
        %v548 = vsel %vm527, %v515, %v499
        %v549 = vsel %vm527, %v516, %v500
        %v550 = vsel %vm527, %v517, %v501
        %v551 = vsel %vm527, %v518, %v502
        %v552 = vsel %vm527, %v519, %v503
        %v553 = vsel %vm527, %v520, %v504
        %v554 = vsel %vm527, %v521, %v505
        %v555 = vsel %vm527, %v522, %v506
        %v556 = vsel %vm527, %v523, %v507
        %v557 = vsel %vm527, %v524, %v508
        %v558 = vsel %vm527, %v525, %v509
        %v559 = vsel %vm527, %v526, %v510
        %v560 = vsel %vm493, %v528, 0.0
        %v561 = vsel %vm494, %v544, 0.0
        %v562 = vsel %vm493, %v529, 0.0
        %v563 = vsel %vm494, %v545, 0.0
        %v564 = vsel %vm493, %v530, 0.0
        %v565 = vsel %vm494, %v546, 0.0
        %v566 = vsel %vm493, %v531, 0.0
        %v567 = vsel %vm494, %v547, 0.0
        %v568 = vsel %vm493, %v532, 0.0
        %v569 = vsel %vm494, %v548, 0.0
        %v570 = vsel %vm493, %v533, 0.0
        %v571 = vsel %vm494, %v549, 0.0
        %v572 = vsel %vm493, %v534, 0.0
        %v573 = vsel %vm494, %v550, 0.0
        %v574 = vsel %vm493, %v535, 0.0
        %v575 = vsel %vm494, %v551, 0.0
        %v576 = vsel %vm493, %v536, 0.0
        %v577 = vsel %vm494, %v552, 0.0
        %v578 = vsel %vm493, %v537, 0.0
        %v579 = vsel %vm494, %v553, 0.0
        %v580 = vsel %vm493, %v538, 0.0
        %v581 = vsel %vm494, %v554, 0.0
        %v582 = vsel %vm493, %v539, 0.0
        %v583 = vsel %vm494, %v555, 0.0
        %v584 = vsel %vm493, %v540, 0.0
        %v585 = vsel %vm494, %v556, 0.0
        %v586 = vsel %vm493, %v541, 0.0
        %v587 = vsel %vm494, %v557, 0.0
        %v588 = vsel %vm493, %v542, 0.0
        %v589 = vsel %vm494, %v558, 0.0
        %v590 = vsel %vm493, %v543, 0.0
        %v591 = vsel %vm494, %v559, 0.0
        %v592 = vpack.c.bf16 0.0, 0.0
        %v593 = vpack.c.bf16 %v462, %v461
        %v594 = vpack.c.bf16 %v360, %v359
        %v595 = vpack.c.bf16 %v561, %v560
        %v596 = vpack.c.bf16 %v464, %v463
        %v597 = vpack.c.bf16 %v362, %v361
        %v598 = vpack.c.bf16 %v563, %v562
        %v599 = vpack.c.bf16 %v466, %v465
        %v600 = vpack.c.bf16 %v364, %v363
        %v601 = vpack.c.bf16 %v565, %v564
        %v602 = vpack.c.bf16 %v468, %v467
        %v603 = vpack.c.bf16 %v366, %v365
        %v604 = vpack.c.bf16 %v567, %v566
        %v605 = vpack.c.bf16 %v470, %v469
        %v606 = vpack.c.bf16 %v368, %v367
        %v607 = vpack.c.bf16 %v569, %v568
        %v608 = vpack.c.bf16 %v472, %v471
        %v609 = vpack.c.bf16 %v370, %v369
        %v610 = vpack.c.bf16 %v571, %v570
        %v611 = vpack.c.bf16 %v474, %v473
        %v612 = vpack.c.bf16 %v372, %v371
        %v613 = vpack.c.bf16 %v573, %v572
        %v614 = vpack.c.bf16 %v476, %v475
        %v615 = vpack.c.bf16 %v374, %v373
        %v616 = vpack.c.bf16 %v575, %v574
        %v617 = vpack.c.bf16 %v478, %v477
        %v618 = vpack.c.bf16 %v376, %v375
        %v619 = vpack.c.bf16 %v577, %v576
        %v620 = vpack.c.bf16 %v480, %v479
        %v621 = vpack.c.bf16 %v378, %v377
        %v622 = vpack.c.bf16 %v579, %v578
        %v623 = vpack.c.bf16 %v482, %v481
        %v624 = vpack.c.bf16 %v380, %v379
        %v625 = vpack.c.bf16 %v581, %v580
        %v626 = vpack.c.bf16 %v484, %v483
        %v627 = vpack.c.bf16 %v382, %v381
        %v628 = vpack.c.bf16 %v583, %v582
        %v629 = vpack.c.bf16 %v486, %v485
        %v630 = vpack.c.bf16 %v384, %v383
        %v631 = vpack.c.bf16 %v585, %v584
        %v632 = vpack.c.bf16 %v488, %v487
        %v633 = vpack.c.bf16 %v386, %v385
        %v634 = vpack.c.bf16 %v587, %v586
        %v635 = vpack.c.bf16 %v490, %v489
        %v636 = vpack.c.bf16 %v388, %v387
        %v637 = vpack.c.bf16 %v589, %v588
        %v638 = vld [vmem:[#allocation5] sm:$0xf]
        %v639 = vld [vmem:[#allocation5 + $0x4] sm:$0xf]
        %v640 = vld [vmem:[#allocation5 + $0x8] sm:$0xf]
        %v641 = vld [vmem:[#allocation5 + $0xc] sm:$0xf]
        %v642 = vld [vmem:[#allocation5 + $0x10] sm:$0xf]
        %v643 = vld [vmem:[#allocation5 + $0x14] sm:$0xf]
        %v644 = vld [vmem:[#allocation5 + $0x18] sm:$0xf]
        %v645 = vld [vmem:[#allocation5 + $0x1c] sm:$0xf]
        %v646 = vld [vmem:[#allocation5 + $0x20] sm:$0xf]
        %v647 = vld [vmem:[#allocation5 + $0x24] sm:$0xf]
        %v648 = vld [vmem:[#allocation5 + $0x28] sm:$0xf]
        %v649 = vld [vmem:[#allocation5 + $0x2c] sm:$0xf]
        %v650 = vld [vmem:[#allocation5 + $0x30] sm:$0xf]
        %v651 = vld [vmem:[#allocation5 + $0x34] sm:$0xf]
        %v652 = vld [vmem:[#allocation5 + $0x38] sm:$0xf]
        %v653 = vld [vmem:[#allocation5 + $0x3c] sm:$0xf]
        %v654 = vld [vmem:[#allocation5 + $0x40] sm:$0xf]
        %v655 = vld [vmem:[#allocation5 + $0x44] sm:$0xf]
        %v656 = vld [vmem:[#allocation5 + $0x48] sm:$0xf]
        %v657 = vld [vmem:[#allocation5 + $0x4c] sm:$0xf]
        %v658 = vld [vmem:[#allocation5 + $0x50] sm:$0xf]
        %v659 = vld [vmem:[#allocation5 + $0x54] sm:$0xf]
        %v660 = vld [vmem:[#allocation5 + $0x58] sm:$0xf]
        %v661 = vld [vmem:[#allocation5 + $0x5c] sm:$0xf]
        %v662 = vld [vmem:[#allocation5 + $0x60] sm:$0xf]
        %v663 = vld [vmem:[#allocation5 + $0x64] sm:$0xf]
        %v664 = vld [vmem:[#allocation5 + $0x68] sm:$0xf]
        %v665 = vld [vmem:[#allocation5 + $0x6c] sm:$0xf]
        %v666 = vld [vmem:[#allocation5 + $0x70] sm:$0xf]
        %v667 = vld [vmem:[#allocation5 + $0x74] sm:$0xf]
        %v668 = vld [vmem:[#allocation5 + $0x78] sm:$0xf]
        %v669 = vld [vmem:[#allocation5 + $0x7c] sm:$0xf]
        %v670 = vld [vmem:[#allocation5 + $0x80] sm:$0xf]
        %v671 = vld [vmem:[#allocation5 + $0x84] sm:$0xf]
        %v672 = vld [vmem:[#allocation5 + $0x88] sm:$0xf]
        %v673 = vld [vmem:[#allocation5 + $0x8c] sm:$0xf]
        %v674 = vld [vmem:[#allocation5 + $0x90] sm:$0xf]
        %v675 = vld [vmem:[#allocation5 + $0x94] sm:$0xf]
        %v676 = vld [vmem:[#allocation5 + $0x98] sm:$0xf]
        %v677 = vld [vmem:[#allocation5 + $0x9c] sm:$0xf]
        %v678 = vld [vmem:[#allocation5 + $0xa0] sm:$0xf]
        %v679 = vld [vmem:[#allocation5 + $0xa4] sm:$0xf]
        %v680 = vld [vmem:[#allocation5 + $0xa8] sm:$0xf]
        %v681 = vld [vmem:[#allocation5 + $0xac] sm:$0xf]
        %v682 = vld [vmem:[#allocation5 + $0xb0] sm:$0xf]
        %v683 = vld [vmem:[#allocation5 + $0xb4] sm:$0xf]
        %v684 = vld [vmem:[#allocation5 + $0xb8] sm:$0xf]
        %v685 = vld [vmem:[#allocation5 + $0xbc] sm:$0xf]
        %v686 = vpack.c.bf16 %v492, %v491
        %v687 = vpack.c.bf16 %v390, %v389
        %v688 = vpack.c.bf16 %v591, %v590
        %s689 = scalar_lea.vmem [#allocation5], 192
        %v690 = vld [vmem:[%s689] sm:$0xf]
        %v691 = vld [vmem:[%s689 + $0x4] sm:$0xf]
        %v692 = vld [vmem:[%s689 + $0x8] sm:$0xf]
        %v693 = vld [vmem:[%s689 + $0xc] sm:$0xf]
        %v694 = vld [vmem:[%s689 + $0x10] sm:$0xf]
        %v695 = vld [vmem:[%s689 + $0x14] sm:$0xf]
        %v696 = vld [vmem:[%s689 + $0x18] sm:$0xf]
        %v697 = vld [vmem:[%s689 + $0x1c] sm:$0xf]
        %v698 = vld [vmem:[%s689 + $0x20] sm:$0xf]
        %v699 = vld [vmem:[%s689 + $0x24] sm:$0xf]
        %v700 = vld [vmem:[%s689 + $0x28] sm:$0xf]
        %v701 = vld [vmem:[%s689 + $0x2c] sm:$0xf]
        %v702 = vld [vmem:[%s689 + $0x30] sm:$0xf]
        %v703 = vld [vmem:[%s689 + $0x34] sm:$0xf]
        %v704 = vld [vmem:[%s689 + $0x38] sm:$0xf]
        %v705 = vld [vmem:[%s689 + $0x3c] sm:$0xf]
        %v706 = vld [vmem:[%s689 + $0x40] sm:$0xf]
        %v707 = vld [vmem:[%s689 + $0x44] sm:$0xf]
        %v708 = vld [vmem:[%s689 + $0x48] sm:$0xf]
        %v709 = vld [vmem:[%s689 + $0x4c] sm:$0xf]
        %v710 = vld [vmem:[%s689 + $0x50] sm:$0xf]
        %v711 = vld [vmem:[%s689 + $0x54] sm:$0xf]
        %v712 = vld [vmem:[%s689 + $0x58] sm:$0xf]
        %v713 = vld [vmem:[%s689 + $0x5c] sm:$0xf]
        %v714 = vld [vmem:[%s689 + $0x60] sm:$0xf]
        %v715 = vld [vmem:[%s689 + $0x64] sm:$0xf]
        %v716 = vld [vmem:[%s689 + $0x68] sm:$0xf]
        %v717 = vld [vmem:[%s689 + $0x6c] sm:$0xf]
        %v718 = vld [vmem:[%s689 + $0x70] sm:$0xf]
        %v719 = vld [vmem:[%s689 + $0x74] sm:$0xf]
        %v720 = vld [vmem:[%s689 + $0x78] sm:$0xf]
        %v721 = vld [vmem:[%s689 + $0x7c] sm:$0xf]
        %v722 = vld [vmem:[%s689 + $0x80] sm:$0xf]
        %v723 = vld [vmem:[%s689 + $0x84] sm:$0xf]
        %v724 = vld [vmem:[%s689 + $0x88] sm:$0xf]
        %v725 = vld [vmem:[%s689 + $0x8c] sm:$0xf]
        %v726 = vld [vmem:[%s689 + $0x90] sm:$0xf]
        %v727 = vld [vmem:[%s689 + $0x94] sm:$0xf]
        %v728 = vld [vmem:[%s689 + $0x98] sm:$0xf]
        %v729 = vld [vmem:[%s689 + $0x9c] sm:$0xf]
        %v730 = vld [vmem:[%s689 + $0xa0] sm:$0xf]
        %v731 = vld [vmem:[%s689 + $0xa4] sm:$0xf]
        %v732 = vld [vmem:[%s689 + $0xa8] sm:$0xf]
        %v733 = vld [vmem:[%s689 + $0xac] sm:$0xf]
        %v734 = vld [vmem:[%s689 + $0xb0] sm:$0xf]
        %v735 = vld [vmem:[%s689 + $0xb4] sm:$0xf]
        %v736 = vld [vmem:[%s689 + $0xb8] sm:$0xf]
        %v737 = vld [vmem:[%s689 + $0xbc] sm:$0xf]
        %v786 = vunpack.c.l.b16 %v690
        %v787 = vunpack.c.l.b16 %v691
        %v788 = vunpack.c.l.b16 %v692
        %v789 = vunpack.c.l.b16 %v693
        %v790 = vunpack.c.l.b16 %v694
        %v791 = vunpack.c.l.b16 %v695
        %v792 = vunpack.c.l.b16 %v696
        %v793 = vunpack.c.l.b16 %v697
        %v794 = vunpack.c.l.b16 %v698
        %v795 = vunpack.c.l.b16 %v699
        %v796 = vunpack.c.l.b16 %v700
        %v797 = vunpack.c.l.b16 %v701
        %v798 = vunpack.c.l.b16 %v702
        %v799 = vunpack.c.l.b16 %v703
        %v800 = vunpack.c.l.b16 %v704
        %v801 = vunpack.c.l.b16 %v705
        %v802 = vunpack.c.l.b16 %v706
        %v803 = vunpack.c.l.b16 %v707
        %v804 = vunpack.c.l.b16 %v708
        %v805 = vunpack.c.l.b16 %v709
        %v806 = vunpack.c.l.b16 %v710
        %v807 = vunpack.c.l.b16 %v711
        %v808 = vunpack.c.l.b16 %v712
        %v809 = vunpack.c.l.b16 %v713
        %v810 = vunpack.c.l.b16 %v714
        %v811 = vunpack.c.l.b16 %v715
        %v812 = vunpack.c.l.b16 %v716
        %v813 = vunpack.c.l.b16 %v717
        %v814 = vunpack.c.l.b16 %v718
        %v815 = vunpack.c.l.b16 %v719
        %v816 = vunpack.c.l.b16 %v720
        %v817 = vunpack.c.l.b16 %v721
        %v818 = vunpack.c.l.b16 %v722
        %v819 = vunpack.c.l.b16 %v723
        %v820 = vunpack.c.l.b16 %v724
        %v821 = vunpack.c.l.b16 %v725
        %v822 = vunpack.c.l.b16 %v726
        %v823 = vunpack.c.l.b16 %v727
        %v824 = vunpack.c.l.b16 %v728
        %v825 = vunpack.c.l.b16 %v729
        %v826 = vunpack.c.l.b16 %v730
        %v827 = vunpack.c.l.b16 %v731
        %v828 = vunpack.c.l.b16 %v732
        %v829 = vunpack.c.l.b16 %v733
        %v830 = vunpack.c.l.b16 %v734
        %v831 = vunpack.c.l.b16 %v735
        %v832 = vunpack.c.l.b16 %v736
        %v833 = vunpack.c.l.b16 %v737
        %v834 = vpack.c.b16 %v787, %v786
        %v835 = vpack.c.b16 %v789, %v788
        %v836 = vpack.c.b16 %v791, %v790
        %v837 = vpack.c.b16 %v793, %v792
        %v838 = vpack.c.b16 %v795, %v794
        %v839 = vpack.c.b16 %v797, %v796
        %v840 = vpack.c.b16 %v799, %v798
        %v841 = vpack.c.b16 %v801, %v800
        %v842 = vpack.c.b16 %v803, %v802
        %v843 = vpack.c.b16 %v805, %v804
        %v844 = vpack.c.b16 %v807, %v806
        %v845 = vpack.c.b16 %v809, %v808
        %v846 = vpack.c.b16 %v811, %v810
        %v847 = vpack.c.b16 %v813, %v812
        %v848 = vpack.c.b16 %v815, %v814
        %v849 = vpack.c.b16 %v817, %v816
        %v850 = vpack.c.b16 %v819, %v818
        %v851 = vpack.c.b16 %v821, %v820
        %v852 = vpack.c.b16 %v823, %v822
        %v853 = vpack.c.b16 %v825, %v824
        %v854 = vpack.c.b16 %v827, %v826
        %v855 = vpack.c.b16 %v829, %v828
        %v856 = vpack.c.b16 %v831, %v830
        %v857 = vpack.c.b16 %v833, %v832
        %882 = vmatprep.subr.bf16.mxu0 0
        %883 = vmatpush1.bf16.msra.mxu0 %v841
        %884 = vmatprep.subr.bf16.mxu0 0
        %885 = vmatpush1.bf16.msra.mxu0 %v840
        %886 = vmatprep.subr.bf16.mxu0 0
        %887 = vmatpush1.bf16.msra.mxu0 %v839
        %888 = vmatprep.subr.bf16.mxu0 0
        %889 = vmatpush1.bf16.msra.mxu0 %v838
        %890 = vmatprep.subr.bf16.mxu0 0
        %891 = vmatpush1.bf16.msra.mxu0 %v837
        %892 = vmatprep.subr.bf16.mxu0 0
        %893 = vmatpush1.bf16.msra.mxu0 %v836
        %894 = vmatprep.subr.bf16.mxu0 0
        %895 = vmatpush1.bf16.msra.mxu0 %v835
        %896 = vmatprep.subr.bf16.mxu0 0
        %897 = vmatpush1.bf16.msra.mxu0 %v834
        %898 = vmatprep.subr.bf16.mxu0 0
        %899 = vmatpush2.bf16.msra.mxu0 %v849
        %900 = vmatprep.subr.bf16.mxu0 0
        %901 = vmatpush2.bf16.msra.mxu0 %v848
        %902 = vmatprep.subr.bf16.mxu0 0
        %903 = vmatpush2.bf16.msra.mxu0 %v847
        %904 = vmatprep.subr.bf16.mxu0 0
        %905 = vmatpush2.bf16.msra.mxu0 %v846
        %906 = vmatprep.subr.bf16.mxu0 0
        %907 = vmatpush2.bf16.msra.mxu0 %v845
        %908 = vmatprep.subr.bf16.mxu0 0
        %909 = vmatpush2.bf16.msra.mxu0 %v844
        %910 = vmatprep.subr.bf16.mxu0 0
        %911 = vmatpush2.bf16.msra.mxu0 %v843
        %912 = vmatprep.subr.bf16.mxu0 0
        %913 = vmatpush2.bf16.msra.mxu0 %v842
        %914 = vmatprep.mubr.bf16.mxu0 %v594
        %915 = vmatmul.mubr.bf16.gmra.mxu0 %v593
        %v916 = vpop.f32.mrf.mxu0
        %v917 = vadd.f32 0.0, %v916
        %v918 = vpop.f32.mrf.mxu0
        %v919 = vpop.f32.mrf.mxu0
        %v920 = vadd.f32 0.0, %v919
        %v921 = vpop.f32.mrf.mxu0
        %922 = vmatprep.mubr.bf16.mxu0 %v597
        %923 = vmatmul.mubr.bf16.gmra.mxu0 %v596
        %v924 = vpop.f32.mrf.mxu0
        %v925 = vadd.f32 0.0, %v924
        %v926 = vpop.f32.mrf.mxu0
        %v927 = vpop.f32.mrf.mxu0
        %v928 = vadd.f32 0.0, %v927
        %v929 = vpop.f32.mrf.mxu0
        %930 = vmatprep.mubr.bf16.mxu0 %v600
        %931 = vmatmul.mubr.bf16.gmra.mxu0 %v599
        %v932 = vpop.f32.mrf.mxu0
        %v933 = vadd.f32 0.0, %v932
        %v934 = vpop.f32.mrf.mxu0
        %v935 = vpop.f32.mrf.mxu0
        %v936 = vadd.f32 0.0, %v935
        %v937 = vpop.f32.mrf.mxu0
        %938 = vmatprep.mubr.bf16.mxu0 %v603
        %939 = vmatmul.mubr.bf16.gmra.mxu0 %v602
        %v940 = vpop.f32.mrf.mxu0
        %v941 = vadd.f32 0.0, %v940
        %v942 = vpop.f32.mrf.mxu0
        %v943 = vpop.f32.mrf.mxu0
        %v944 = vadd.f32 0.0, %v943
        %v945 = vpop.f32.mrf.mxu0
        %946 = vmatprep.mubr.bf16.mxu0 %v606
        %947 = vmatmul.mubr.bf16.gmra.mxu0 %v605
        %v948 = vpop.f32.mrf.mxu0
        %v949 = vadd.f32 0.0, %v948
        %v950 = vpop.f32.mrf.mxu0
        %v951 = vpop.f32.mrf.mxu0
        %v952 = vadd.f32 0.0, %v951
        %v953 = vpop.f32.mrf.mxu0
        %954 = vmatprep.mubr.bf16.mxu0 %v609
        %955 = vmatmul.mubr.bf16.gmra.mxu0 %v608
        %v956 = vpop.f32.mrf.mxu0
        %v957 = vadd.f32 0.0, %v956
        %v958 = vpop.f32.mrf.mxu0
        %v959 = vpop.f32.mrf.mxu0
        %v960 = vadd.f32 0.0, %v959
        %v961 = vpop.f32.mrf.mxu0
        %962 = vmatprep.mubr.bf16.mxu0 %v612
        %963 = vmatmul.mubr.bf16.gmra.mxu0 %v611
        %v964 = vpop.f32.mrf.mxu0
        %v965 = vadd.f32 0.0, %v964
        %v966 = vpop.f32.mrf.mxu0
        %v967 = vpop.f32.mrf.mxu0
        %v968 = vadd.f32 0.0, %v967
        %v969 = vpop.f32.mrf.mxu0
        %970 = vmatprep.mubr.bf16.mxu0 %v615
        %971 = vmatmul.mubr.bf16.gmra.mxu0 %v614
        %v972 = vpop.f32.mrf.mxu0
        %v973 = vadd.f32 0.0, %v972
        %v974 = vpop.f32.mrf.mxu0
        %v975 = vpop.f32.mrf.mxu0
        %v976 = vadd.f32 0.0, %v975
        %v977 = vpop.f32.mrf.mxu0
        %978 = vmatprep.mubr.bf16.mxu0 %v618
        %979 = vmatmul.mubr.bf16.gmra.mxu0 %v617
        %v980 = vpop.f32.mrf.mxu0
        %v981 = vadd.f32 0.0, %v980
        %v982 = vpop.f32.mrf.mxu0
        %v983 = vpop.f32.mrf.mxu0
        %v984 = vadd.f32 0.0, %v983
        %v985 = vpop.f32.mrf.mxu0
        %986 = vmatprep.mubr.bf16.mxu0 %v621
        %987 = vmatmul.mubr.bf16.gmra.mxu0 %v620
        %v988 = vpop.f32.mrf.mxu0
        %v989 = vadd.f32 0.0, %v988
        %v990 = vpop.f32.mrf.mxu0
        %v991 = vpop.f32.mrf.mxu0
        %v992 = vadd.f32 0.0, %v991
        %v993 = vpop.f32.mrf.mxu0
        %994 = vmatprep.mubr.bf16.mxu0 %v624
        %995 = vmatmul.mubr.bf16.gmra.mxu0 %v623
        %v996 = vpop.f32.mrf.mxu0
        %v997 = vadd.f32 0.0, %v996
        %v998 = vpop.f32.mrf.mxu0
        %v999 = vpop.f32.mrf.mxu0
        %v1000 = vadd.f32 0.0, %v999
        %v1001 = vpop.f32.mrf.mxu0
        %1002 = vmatprep.mubr.bf16.mxu0 %v627
        %1003 = vmatmul.mubr.bf16.gmra.mxu0 %v626
        %v1004 = vpop.f32.mrf.mxu0
        %v1005 = vadd.f32 0.0, %v1004
        %v1006 = vpop.f32.mrf.mxu0
        %v1007 = vpop.f32.mrf.mxu0
        %v1008 = vadd.f32 0.0, %v1007
        %v1009 = vpop.f32.mrf.mxu0
        %1010 = vmatprep.mubr.bf16.mxu0 %v630
        %1011 = vmatmul.mubr.bf16.gmra.mxu0 %v629
        %v1012 = vpop.f32.mrf.mxu0
        %v1013 = vadd.f32 0.0, %v1012
        %v1014 = vpop.f32.mrf.mxu0
        %v1015 = vpop.f32.mrf.mxu0
        %v1016 = vadd.f32 0.0, %v1015
        %v1017 = vpop.f32.mrf.mxu0
        %1018 = vmatprep.mubr.bf16.mxu0 %v633
        %1019 = vmatmul.mubr.bf16.gmra.mxu0 %v632
        %v1020 = vpop.f32.mrf.mxu0
        %v1021 = vadd.f32 0.0, %v1020
        %v1022 = vpop.f32.mrf.mxu0
        %v1023 = vpop.f32.mrf.mxu0
        %v1024 = vadd.f32 0.0, %v1023
        %v1025 = vpop.f32.mrf.mxu0
        %1026 = vmatprep.mubr.bf16.mxu0 %v636
        %1027 = vmatmul.mubr.bf16.gmra.mxu0 %v635
        %v1028 = vpop.f32.mrf.mxu0
        %v1029 = vadd.f32 0.0, %v1028
        %v1030 = vpop.f32.mrf.mxu0
        %v1031 = vpop.f32.mrf.mxu0
        %v1032 = vadd.f32 0.0, %v1031
        %v1033 = vpop.f32.mrf.mxu0
        %1034 = vmatprep.mubr.bf16.mxu0 %v687
        %1035 = vmatmul.mubr.bf16.gmra.mxu0 %v686
        %v1036 = vpop.f32.mrf.mxu0
        %v1037 = vadd.f32 0.0, %v1036
        %v1038 = vpop.f32.mrf.mxu0
        %v1039 = vpop.f32.mrf.mxu0
        %v1040 = vadd.f32 0.0, %v1039
        %v1041 = vpop.f32.mrf.mxu0
        %1042 = vdwg.mxu0
        %1043 = vmatprep.subr.bf16.mxu0 0
        %1044 = vmatpush1.bf16.msra.mxu0 %v857
        %1045 = vmatprep.subr.bf16.mxu0 0
        %1046 = vmatpush1.bf16.msra.mxu0 %v856
        %1047 = vmatprep.subr.bf16.mxu0 0
        %1048 = vmatpush1.bf16.msra.mxu0 %v855
        %1049 = vmatprep.subr.bf16.mxu0 0
        %1050 = vmatpush1.bf16.msra.mxu0 %v854
        %1051 = vmatprep.subr.bf16.mxu0 0
        %1052 = vmatpush1.bf16.msra.mxu0 %v853
        %1053 = vmatprep.subr.bf16.mxu0 0
        %1054 = vmatpush1.bf16.msra.mxu0 %v852
        %1055 = vmatprep.subr.bf16.mxu0 0
        %1056 = vmatpush1.bf16.msra.mxu0 %v851
        %1057 = vmatprep.subr.bf16.mxu0 0
        %1058 = vmatpush1.bf16.msra.mxu0 %v850
        %1059 = vmatprep.subr.bf16.mxu0 0
        %1060 = vmatpush2.bf16.msra.mxu0 0
        %1061 = vmatprep.subr.bf16.mxu0 0
        %1062 = vmatpush2.bf16.msra.mxu0 0
        %1063 = vmatprep.subr.bf16.mxu0 0
        %1064 = vmatpush2.bf16.msra.mxu0 0
        %1065 = vmatprep.subr.bf16.mxu0 0
        %1066 = vmatpush2.bf16.msra.mxu0 0
        %1067 = vmatprep.subr.bf16.mxu0 0
        %1068 = vmatpush2.bf16.msra.mxu0 0
        %1069 = vmatprep.subr.bf16.mxu0 0
        %1070 = vmatpush2.bf16.msra.mxu0 0
        %1071 = vmatprep.subr.bf16.mxu0 0
        %1072 = vmatpush2.bf16.msra.mxu0 0
        %1073 = vmatprep.subr.bf16.mxu0 0
        %1074 = vmatpush2.bf16.msra.mxu0 0
        %1075 = vmatprep.mubr.bf16.mxu0 0
        %1076 = vmatmul.mubr.bf16.gmra.mxu0 %v595
        %v1077 = vpop.f32.mrf.mxu0
        %v1078 = vadd.f32 %v917, %v1077
        %v1079 = vpop.f32.mrf.mxu0
        %v1080 = vpop.f32.mrf.mxu0
        %v1081 = vadd.f32 %v920, %v1080
        %v1082 = vpop.f32.mrf.mxu0
        %1083 = vmatprep.mubr.bf16.mxu0 0
        %1084 = vmatmul.mubr.bf16.gmra.mxu0 %v598
        %v1085 = vpop.f32.mrf.mxu0
        %v1086 = vadd.f32 %v925, %v1085
        %v1087 = vpop.f32.mrf.mxu0
        %v1088 = vpop.f32.mrf.mxu0
        %v1089 = vadd.f32 %v928, %v1088
        %v1090 = vpop.f32.mrf.mxu0
        %1091 = vmatprep.mubr.bf16.mxu0 0
        %1092 = vmatmul.mubr.bf16.gmra.mxu0 %v601
        %v1093 = vpop.f32.mrf.mxu0
        %v1094 = vadd.f32 %v933, %v1093
        %v1095 = vpop.f32.mrf.mxu0
        %v1096 = vpop.f32.mrf.mxu0
        %v1097 = vadd.f32 %v936, %v1096
        %v1098 = vpop.f32.mrf.mxu0
        %1099 = vmatprep.mubr.bf16.mxu0 0
        %1100 = vmatmul.mubr.bf16.gmra.mxu0 %v604
        %v1101 = vpop.f32.mrf.mxu0
        %v1102 = vadd.f32 %v941, %v1101
        %v1103 = vpop.f32.mrf.mxu0
        %v1104 = vpop.f32.mrf.mxu0
        %v1105 = vadd.f32 %v944, %v1104
        %v1106 = vpop.f32.mrf.mxu0
        %1107 = vmatprep.mubr.bf16.mxu0 0
        %1108 = vmatmul.mubr.bf16.gmra.mxu0 %v607
        %v1109 = vpop.f32.mrf.mxu0
        %v1110 = vadd.f32 %v949, %v1109
        %v1111 = vpop.f32.mrf.mxu0
        %v1112 = vpop.f32.mrf.mxu0
        %v1113 = vadd.f32 %v952, %v1112
        %v1114 = vpop.f32.mrf.mxu0
        %1115 = vmatprep.mubr.bf16.mxu0 0
        %1116 = vmatmul.mubr.bf16.gmra.mxu0 %v610
        %v1117 = vpop.f32.mrf.mxu0
        %v1118 = vadd.f32 %v957, %v1117
        %v1119 = vpop.f32.mrf.mxu0
        %v1120 = vpop.f32.mrf.mxu0
        %v1121 = vadd.f32 %v960, %v1120
        %v1122 = vpop.f32.mrf.mxu0
        %1123 = vmatprep.mubr.bf16.mxu0 0
        %1124 = vmatmul.mubr.bf16.gmra.mxu0 %v613
        %v1125 = vpop.f32.mrf.mxu0
        %v1126 = vadd.f32 %v965, %v1125
        %v1127 = vpop.f32.mrf.mxu0
        %v1128 = vpop.f32.mrf.mxu0
        %v1129 = vadd.f32 %v968, %v1128
        %v1130 = vpop.f32.mrf.mxu0
        %1131 = vmatprep.mubr.bf16.mxu0 0
        %1132 = vmatmul.mubr.bf16.gmra.mxu0 %v616
        %v1133 = vpop.f32.mrf.mxu0
        %v1134 = vadd.f32 %v973, %v1133
        %v1135 = vpop.f32.mrf.mxu0
        %v1136 = vpop.f32.mrf.mxu0
        %v1137 = vadd.f32 %v976, %v1136
        %v1138 = vpop.f32.mrf.mxu0
        %1139 = vmatprep.mubr.bf16.mxu0 0
        %1140 = vmatmul.mubr.bf16.gmra.mxu0 %v619
        %v1141 = vpop.f32.mrf.mxu0
        %v1142 = vadd.f32 %v981, %v1141
        %v1143 = vpop.f32.mrf.mxu0
        %v1144 = vpop.f32.mrf.mxu0
        %v1145 = vadd.f32 %v984, %v1144
        %v1146 = vpop.f32.mrf.mxu0
        %1147 = vmatprep.mubr.bf16.mxu0 0
        %1148 = vmatmul.mubr.bf16.gmra.mxu0 %v622
        %v1149 = vpop.f32.mrf.mxu0
        %v1150 = vadd.f32 %v989, %v1149
        %v1151 = vpop.f32.mrf.mxu0
        %v1152 = vpop.f32.mrf.mxu0
        %v1153 = vadd.f32 %v992, %v1152
        %v1154 = vpop.f32.mrf.mxu0
        %1155 = vmatprep.mubr.bf16.mxu0 0
        %1156 = vmatmul.mubr.bf16.gmra.mxu0 %v625
        %v1157 = vpop.f32.mrf.mxu0
        %v1158 = vadd.f32 %v997, %v1157
        %v1159 = vpop.f32.mrf.mxu0
        %v1160 = vpop.f32.mrf.mxu0
        %v1161 = vadd.f32 %v1000, %v1160
        %v1162 = vpop.f32.mrf.mxu0
        %1163 = vmatprep.mubr.bf16.mxu0 0
        %1164 = vmatmul.mubr.bf16.gmra.mxu0 %v628
        %v1165 = vpop.f32.mrf.mxu0
        %v1166 = vadd.f32 %v1005, %v1165
        %v1167 = vpop.f32.mrf.mxu0
        %v1168 = vpop.f32.mrf.mxu0
        %v1169 = vadd.f32 %v1008, %v1168
        %v1170 = vpop.f32.mrf.mxu0
        %1171 = vmatprep.mubr.bf16.mxu0 0
        %1172 = vmatmul.mubr.bf16.gmra.mxu0 %v631
        %v1173 = vpop.f32.mrf.mxu0
        %v1174 = vadd.f32 %v1013, %v1173
        %v1175 = vpop.f32.mrf.mxu0
        %v1176 = vpop.f32.mrf.mxu0
        %v1177 = vadd.f32 %v1016, %v1176
        %v1178 = vpop.f32.mrf.mxu0
        %1179 = vmatprep.mubr.bf16.mxu0 0
        %1180 = vmatmul.mubr.bf16.gmra.mxu0 %v634
        %v1181 = vpop.f32.mrf.mxu0
        %v1182 = vadd.f32 %v1021, %v1181
        %v1183 = vpop.f32.mrf.mxu0
        %v1184 = vpop.f32.mrf.mxu0
        %v1185 = vadd.f32 %v1024, %v1184
        %v1186 = vpop.f32.mrf.mxu0
        %1187 = vmatprep.mubr.bf16.mxu0 0
        %1188 = vmatmul.mubr.bf16.gmra.mxu0 %v637
        %v1189 = vpop.f32.mrf.mxu0
        %v1190 = vadd.f32 %v1029, %v1189
        %v1191 = vpop.f32.mrf.mxu0
        %v1192 = vpop.f32.mrf.mxu0
        %v1193 = vadd.f32 %v1032, %v1192
        %v1194 = vpop.f32.mrf.mxu0
        %1195 = vmatprep.mubr.bf16.mxu0 0
        %1196 = vmatmul.mubr.bf16.gmra.mxu0 %v688
        %v1197 = vpop.f32.mrf.mxu0
        %v1198 = vadd.f32 %v1037, %v1197
        %v1199 = vpop.f32.mrf.mxu0
        %v1200 = vpop.f32.mrf.mxu0
        %v1201 = vadd.f32 %v1040, %v1200
        %v1202 = vpop.f32.mrf.mxu0
        %1203 = vdwg.mxu0
        %v1252 = vunpack.c.l.b16 %v638
        %v1253 = vunpack.c.l.b16 %v639
        %v1254 = vunpack.c.l.b16 %v640
        %v1255 = vunpack.c.l.b16 %v641
        %v1256 = vunpack.c.l.b16 %v642
        %v1257 = vunpack.c.l.b16 %v643
        %v1258 = vunpack.c.l.b16 %v644
        %v1259 = vunpack.c.l.b16 %v645
        %v1260 = vunpack.c.l.b16 %v646
        %v1261 = vunpack.c.l.b16 %v647
        %v1262 = vunpack.c.l.b16 %v648
        %v1263 = vunpack.c.l.b16 %v649
        %v1264 = vunpack.c.l.b16 %v650
        %v1265 = vunpack.c.l.b16 %v651
        %v1266 = vunpack.c.l.b16 %v652
        %v1267 = vunpack.c.l.b16 %v653
        %v1268 = vunpack.c.l.b16 %v654
        %v1269 = vunpack.c.l.b16 %v655
        %v1270 = vunpack.c.l.b16 %v656
        %v1271 = vunpack.c.l.b16 %v657
        %v1272 = vunpack.c.l.b16 %v658
        %v1273 = vunpack.c.l.b16 %v659
        %v1274 = vunpack.c.l.b16 %v660
        %v1275 = vunpack.c.l.b16 %v661
        %v1276 = vunpack.c.l.b16 %v662
        %v1277 = vunpack.c.l.b16 %v663
        %v1278 = vunpack.c.l.b16 %v664
        %v1279 = vunpack.c.l.b16 %v665
        %v1280 = vunpack.c.l.b16 %v666
        %v1281 = vunpack.c.l.b16 %v667
        %v1282 = vunpack.c.l.b16 %v668
        %v1283 = vunpack.c.l.b16 %v669
        %v1284 = vunpack.c.l.b16 %v670
        %v1285 = vunpack.c.l.b16 %v671
        %v1286 = vunpack.c.l.b16 %v672
        %v1287 = vunpack.c.l.b16 %v673
        %v1288 = vunpack.c.l.b16 %v674
        %v1289 = vunpack.c.l.b16 %v675
        %v1290 = vunpack.c.l.b16 %v676
        %v1291 = vunpack.c.l.b16 %v677
        %v1292 = vunpack.c.l.b16 %v678
        %v1293 = vunpack.c.l.b16 %v679
        %v1294 = vunpack.c.l.b16 %v680
        %v1295 = vunpack.c.l.b16 %v681
        %v1296 = vunpack.c.l.b16 %v682
        %v1297 = vunpack.c.l.b16 %v683
        %v1298 = vunpack.c.l.b16 %v684
        %v1299 = vunpack.c.l.b16 %v685
        %v1300 = vpack.c.b16 %v1253, %v1252
        %v1301 = vpack.c.b16 %v1255, %v1254
        %v1302 = vpack.c.b16 %v1257, %v1256
        %v1303 = vpack.c.b16 %v1259, %v1258
        %v1304 = vpack.c.b16 %v1261, %v1260
        %v1305 = vpack.c.b16 %v1263, %v1262
        %v1306 = vpack.c.b16 %v1265, %v1264
        %v1307 = vpack.c.b16 %v1267, %v1266
        %v1308 = vpack.c.b16 %v1269, %v1268
        %v1309 = vpack.c.b16 %v1271, %v1270
        %v1310 = vpack.c.b16 %v1273, %v1272
        %v1311 = vpack.c.b16 %v1275, %v1274
        %v1312 = vpack.c.b16 %v1277, %v1276
        %v1313 = vpack.c.b16 %v1279, %v1278
        %v1314 = vpack.c.b16 %v1281, %v1280
        %v1315 = vpack.c.b16 %v1283, %v1282
        %v1316 = vpack.c.b16 %v1285, %v1284
        %v1317 = vpack.c.b16 %v1287, %v1286
        %v1318 = vpack.c.b16 %v1289, %v1288
        %v1319 = vpack.c.b16 %v1291, %v1290
        %v1320 = vpack.c.b16 %v1293, %v1292
        %v1321 = vpack.c.b16 %v1295, %v1294
        %v1322 = vpack.c.b16 %v1297, %v1296
        %v1323 = vpack.c.b16 %v1299, %v1298
        %1348 = vmatprep.subr.bf16.mxu0 0
        %1349 = vmatpush1.bf16.msra.mxu0 %v1307
        %1350 = vmatprep.subr.bf16.mxu0 0
        %1351 = vmatpush1.bf16.msra.mxu0 %v1306
        %1352 = vmatprep.subr.bf16.mxu0 0
        %1353 = vmatpush1.bf16.msra.mxu0 %v1305
        %1354 = vmatprep.subr.bf16.mxu0 0
        %1355 = vmatpush1.bf16.msra.mxu0 %v1304
        %1356 = vmatprep.subr.bf16.mxu0 0
        %1357 = vmatpush1.bf16.msra.mxu0 %v1303
        %1358 = vmatprep.subr.bf16.mxu0 0
        %1359 = vmatpush1.bf16.msra.mxu0 %v1302
        %1360 = vmatprep.subr.bf16.mxu0 0
        %1361 = vmatpush1.bf16.msra.mxu0 %v1301
        %1362 = vmatprep.subr.bf16.mxu0 0
        %1363 = vmatpush1.bf16.msra.mxu0 %v1300
        %1364 = vmatprep.subr.bf16.mxu0 0
        %1365 = vmatpush2.bf16.msra.mxu0 %v1315
        %1366 = vmatprep.subr.bf16.mxu0 0
        %1367 = vmatpush2.bf16.msra.mxu0 %v1314
        %1368 = vmatprep.subr.bf16.mxu0 0
        %1369 = vmatpush2.bf16.msra.mxu0 %v1313
        %1370 = vmatprep.subr.bf16.mxu0 0
        %1371 = vmatpush2.bf16.msra.mxu0 %v1312
        %1372 = vmatprep.subr.bf16.mxu0 0
        %1373 = vmatpush2.bf16.msra.mxu0 %v1311
        %1374 = vmatprep.subr.bf16.mxu0 0
        %1375 = vmatpush2.bf16.msra.mxu0 %v1310
        %1376 = vmatprep.subr.bf16.mxu0 0
        %1377 = vmatpush2.bf16.msra.mxu0 %v1309
        %1378 = vmatprep.subr.bf16.mxu0 0
        %1379 = vmatpush2.bf16.msra.mxu0 %v1308
        %1380 = vmatprep.mubr.bf16.mxu0 %v592
        %1381 = vmatmul.mubr.bf16.gmra.mxu0 %v592
        %v1382 = vpop.f32.mrf.mxu0
        %v1383 = vadd.f32 %v1078, %v1382
        %v1384 = vpop.f32.mrf.mxu0
        %v1385 = vpop.f32.mrf.mxu0
        %v1386 = vadd.f32 %v1081, %v1385
        %v1387 = vpop.f32.mrf.mxu0
        %1388 = vmatprep.mubr.bf16.mxu0 %v594
        %1389 = vmatmul.mubr.bf16.gmra.mxu0 %v593
        %v1390 = vpop.f32.mrf.mxu0
        %v1391 = vadd.f32 %v1086, %v1390
        %v1392 = vpop.f32.mrf.mxu0
        %v1393 = vpop.f32.mrf.mxu0
        %v1394 = vadd.f32 %v1089, %v1393
        %v1395 = vpop.f32.mrf.mxu0
        %1396 = vmatprep.mubr.bf16.mxu0 %v597
        %1397 = vmatmul.mubr.bf16.gmra.mxu0 %v596
        %v1398 = vpop.f32.mrf.mxu0
        %v1399 = vadd.f32 %v1094, %v1398
        %v1400 = vpop.f32.mrf.mxu0
        %v1401 = vpop.f32.mrf.mxu0
        %v1402 = vadd.f32 %v1097, %v1401
        %v1403 = vpop.f32.mrf.mxu0
        %1404 = vmatprep.mubr.bf16.mxu0 %v600
        %1405 = vmatmul.mubr.bf16.gmra.mxu0 %v599
        %v1406 = vpop.f32.mrf.mxu0
        %v1407 = vadd.f32 %v1102, %v1406
        %v1408 = vpop.f32.mrf.mxu0
        %v1409 = vpop.f32.mrf.mxu0
        %v1410 = vadd.f32 %v1105, %v1409
        %v1411 = vpop.f32.mrf.mxu0
        %1412 = vmatprep.mubr.bf16.mxu0 %v603
        %1413 = vmatmul.mubr.bf16.gmra.mxu0 %v602
        %v1414 = vpop.f32.mrf.mxu0
        %v1415 = vadd.f32 %v1110, %v1414
        %v1416 = vpop.f32.mrf.mxu0
        %v1417 = vpop.f32.mrf.mxu0
        %v1418 = vadd.f32 %v1113, %v1417
        %v1419 = vpop.f32.mrf.mxu0
        %1420 = vmatprep.mubr.bf16.mxu0 %v606
        %1421 = vmatmul.mubr.bf16.gmra.mxu0 %v605
        %v1422 = vpop.f32.mrf.mxu0
        %v1423 = vadd.f32 %v1118, %v1422
        %v1424 = vpop.f32.mrf.mxu0
        %v1425 = vpop.f32.mrf.mxu0
        %v1426 = vadd.f32 %v1121, %v1425
        %v1427 = vpop.f32.mrf.mxu0
        %1428 = vmatprep.mubr.bf16.mxu0 %v609
        %1429 = vmatmul.mubr.bf16.gmra.mxu0 %v608
        %v1430 = vpop.f32.mrf.mxu0
        %v1431 = vadd.f32 %v1126, %v1430
        %v1432 = vpop.f32.mrf.mxu0
        %v1433 = vpop.f32.mrf.mxu0
        %v1434 = vadd.f32 %v1129, %v1433
        %v1435 = vpop.f32.mrf.mxu0
        %1436 = vmatprep.mubr.bf16.mxu0 %v612
        %1437 = vmatmul.mubr.bf16.gmra.mxu0 %v611
        %v1438 = vpop.f32.mrf.mxu0
        %v1439 = vadd.f32 %v1134, %v1438
        %v1440 = vpop.f32.mrf.mxu0
        %v1441 = vpop.f32.mrf.mxu0
        %v1442 = vadd.f32 %v1137, %v1441
        %v1443 = vpop.f32.mrf.mxu0
        %1444 = vmatprep.mubr.bf16.mxu0 %v615
        %1445 = vmatmul.mubr.bf16.gmra.mxu0 %v614
        %v1446 = vpop.f32.mrf.mxu0
        %v1447 = vadd.f32 %v1142, %v1446
        %v1448 = vpop.f32.mrf.mxu0
        %v1449 = vpop.f32.mrf.mxu0
        %v1450 = vadd.f32 %v1145, %v1449
        %v1451 = vpop.f32.mrf.mxu0
        %1452 = vmatprep.mubr.bf16.mxu0 %v618
        %1453 = vmatmul.mubr.bf16.gmra.mxu0 %v617
        %v1454 = vpop.f32.mrf.mxu0
        %v1455 = vadd.f32 %v1150, %v1454
        %v1456 = vpop.f32.mrf.mxu0
        %v1457 = vpop.f32.mrf.mxu0
        %v1458 = vadd.f32 %v1153, %v1457
        %v1459 = vpop.f32.mrf.mxu0
        %1460 = vmatprep.mubr.bf16.mxu0 %v621
        %1461 = vmatmul.mubr.bf16.gmra.mxu0 %v620
        %v1462 = vpop.f32.mrf.mxu0
        %v1463 = vadd.f32 %v1158, %v1462
        %v1464 = vpop.f32.mrf.mxu0
        %v1465 = vpop.f32.mrf.mxu0
        %v1466 = vadd.f32 %v1161, %v1465
        %v1467 = vpop.f32.mrf.mxu0
        %1468 = vmatprep.mubr.bf16.mxu0 %v624
        %1469 = vmatmul.mubr.bf16.gmra.mxu0 %v623
        %v1470 = vpop.f32.mrf.mxu0
        %v1471 = vadd.f32 %v1166, %v1470
        %v1472 = vpop.f32.mrf.mxu0
        %v1473 = vpop.f32.mrf.mxu0
        %v1474 = vadd.f32 %v1169, %v1473
        %v1475 = vpop.f32.mrf.mxu0
        %1476 = vmatprep.mubr.bf16.mxu0 %v627
        %1477 = vmatmul.mubr.bf16.gmra.mxu0 %v626
        %v1478 = vpop.f32.mrf.mxu0
        %v1479 = vadd.f32 %v1174, %v1478
        %v1480 = vpop.f32.mrf.mxu0
        %v1481 = vpop.f32.mrf.mxu0
        %v1482 = vadd.f32 %v1177, %v1481
        %v1483 = vpop.f32.mrf.mxu0
        %1484 = vmatprep.mubr.bf16.mxu0 %v630
        %1485 = vmatmul.mubr.bf16.gmra.mxu0 %v629
        %v1486 = vpop.f32.mrf.mxu0
        %v1487 = vadd.f32 %v1182, %v1486
        %v1488 = vpop.f32.mrf.mxu0
        %v1489 = vpop.f32.mrf.mxu0
        %v1490 = vadd.f32 %v1185, %v1489
        %v1491 = vpop.f32.mrf.mxu0
        %1492 = vmatprep.mubr.bf16.mxu0 %v633
        %1493 = vmatmul.mubr.bf16.gmra.mxu0 %v632
        %v1494 = vpop.f32.mrf.mxu0
        %v1495 = vadd.f32 %v1190, %v1494
        %v1496 = vpop.f32.mrf.mxu0
        %v1497 = vpop.f32.mrf.mxu0
        %v1498 = vadd.f32 %v1193, %v1497
        %v1499 = vpop.f32.mrf.mxu0
        %1500 = vmatprep.mubr.bf16.mxu0 %v636
        %1501 = vmatmul.mubr.bf16.gmra.mxu0 %v635
        %v1502 = vpop.f32.mrf.mxu0
        %v1503 = vadd.f32 %v1198, %v1502
        %v1504 = vpop.f32.mrf.mxu0
        %v1505 = vpop.f32.mrf.mxu0
        %v1506 = vadd.f32 %v1201, %v1505
        %v1507 = vpop.f32.mrf.mxu0
        %1508 = vdwg.mxu0
        %1509 = vmatprep.subr.bf16.mxu0 0
        %1510 = vmatpush1.bf16.msra.mxu0 %v1323
        %1511 = vmatprep.subr.bf16.mxu0 0
        %1512 = vmatpush1.bf16.msra.mxu0 %v1322
        %1513 = vmatprep.subr.bf16.mxu0 0
        %1514 = vmatpush1.bf16.msra.mxu0 %v1321
        %1515 = vmatprep.subr.bf16.mxu0 0
        %1516 = vmatpush1.bf16.msra.mxu0 %v1320
        %1517 = vmatprep.subr.bf16.mxu0 0
        %1518 = vmatpush1.bf16.msra.mxu0 %v1319
        %1519 = vmatprep.subr.bf16.mxu0 0
        %1520 = vmatpush1.bf16.msra.mxu0 %v1318
        %1521 = vmatprep.subr.bf16.mxu0 0
        %1522 = vmatpush1.bf16.msra.mxu0 %v1317
        %1523 = vmatprep.subr.bf16.mxu0 0
        %1524 = vmatpush1.bf16.msra.mxu0 %v1316
        %1525 = vmatprep.subr.bf16.mxu0 0
        %1526 = vmatpush2.bf16.msra.mxu0 0
        %1527 = vmatprep.subr.bf16.mxu0 0
        %1528 = vmatpush2.bf16.msra.mxu0 0
        %1529 = vmatprep.subr.bf16.mxu0 0
        %1530 = vmatpush2.bf16.msra.mxu0 0
        %1531 = vmatprep.subr.bf16.mxu0 0
        %1532 = vmatpush2.bf16.msra.mxu0 0
        %1533 = vmatprep.subr.bf16.mxu0 0
        %1534 = vmatpush2.bf16.msra.mxu0 0
        %1535 = vmatprep.subr.bf16.mxu0 0
        %1536 = vmatpush2.bf16.msra.mxu0 0
        %1537 = vmatprep.subr.bf16.mxu0 0
        %1538 = vmatpush2.bf16.msra.mxu0 0
        %1539 = vmatprep.subr.bf16.mxu0 0
        %1540 = vmatpush2.bf16.msra.mxu0 0
        %1541 = vmatprep.mubr.bf16.mxu0 0
        %1542 = vmatmul.mubr.bf16.gmra.mxu0 %v592
        %v1543 = vpop.f32.mrf.mxu0
        %v1544 = vadd.f32 %v1383, %v1543
        %v1545 = vpop.f32.mrf.mxu0
        %v1546 = vpop.f32.mrf.mxu0
        %v1547 = vadd.f32 %v1386, %v1546
        %v1548 = vpop.f32.mrf.mxu0
        %1549 = vmatprep.mubr.bf16.mxu0 0
        %1550 = vmatmul.mubr.bf16.gmra.mxu0 %v595
        %v1551 = vpop.f32.mrf.mxu0
        %v1552 = vadd.f32 %v1391, %v1551
        %v1553 = vpop.f32.mrf.mxu0
        %v1554 = vpop.f32.mrf.mxu0
        %v1555 = vadd.f32 %v1394, %v1554
        %v1556 = vpop.f32.mrf.mxu0
        %1557 = vmatprep.mubr.bf16.mxu0 0
        %1558 = vmatmul.mubr.bf16.gmra.mxu0 %v598
        %v1559 = vpop.f32.mrf.mxu0
        %v1560 = vadd.f32 %v1399, %v1559
        %v1561 = vpop.f32.mrf.mxu0
        %v1562 = vpop.f32.mrf.mxu0
        %v1563 = vadd.f32 %v1402, %v1562
        %v1564 = vpop.f32.mrf.mxu0
        %1565 = vmatprep.mubr.bf16.mxu0 0
        %1566 = vmatmul.mubr.bf16.gmra.mxu0 %v601
        %v1567 = vpop.f32.mrf.mxu0
        %v1568 = vadd.f32 %v1407, %v1567
        %v1569 = vpop.f32.mrf.mxu0
        %v1570 = vpop.f32.mrf.mxu0
        %v1571 = vadd.f32 %v1410, %v1570
        %v1572 = vpop.f32.mrf.mxu0
        %1573 = vmatprep.mubr.bf16.mxu0 0
        %1574 = vmatmul.mubr.bf16.gmra.mxu0 %v604
        %v1575 = vpop.f32.mrf.mxu0
        %v1576 = vadd.f32 %v1415, %v1575
        %v1577 = vpop.f32.mrf.mxu0
        %v1578 = vpop.f32.mrf.mxu0
        %v1579 = vadd.f32 %v1418, %v1578
        %v1580 = vpop.f32.mrf.mxu0
        %1581 = vmatprep.mubr.bf16.mxu0 0
        %1582 = vmatmul.mubr.bf16.gmra.mxu0 %v607
        %v1583 = vpop.f32.mrf.mxu0
        %v1584 = vadd.f32 %v1423, %v1583
        %v1585 = vpop.f32.mrf.mxu0
        %v1586 = vpop.f32.mrf.mxu0
        %v1587 = vadd.f32 %v1426, %v1586
        %v1588 = vpop.f32.mrf.mxu0
        %1589 = vmatprep.mubr.bf16.mxu0 0
        %1590 = vmatmul.mubr.bf16.gmra.mxu0 %v610
        %v1591 = vpop.f32.mrf.mxu0
        %v1592 = vadd.f32 %v1431, %v1591
        %v1593 = vpop.f32.mrf.mxu0
        %v1594 = vpop.f32.mrf.mxu0
        %v1595 = vadd.f32 %v1434, %v1594
        %v1596 = vpop.f32.mrf.mxu0
        %1597 = vmatprep.mubr.bf16.mxu0 0
        %1598 = vmatmul.mubr.bf16.gmra.mxu0 %v613
        %v1599 = vpop.f32.mrf.mxu0
        %v1600 = vadd.f32 %v1439, %v1599
        %v1601 = vpop.f32.mrf.mxu0
        %v1602 = vpop.f32.mrf.mxu0
        %v1603 = vadd.f32 %v1442, %v1602
        %v1604 = vpop.f32.mrf.mxu0
        %1605 = vmatprep.mubr.bf16.mxu0 0
        %1606 = vmatmul.mubr.bf16.gmra.mxu0 %v616
        %v1607 = vpop.f32.mrf.mxu0
        %v1608 = vadd.f32 %v1447, %v1607
        %v1609 = vpop.f32.mrf.mxu0
        %v1610 = vpop.f32.mrf.mxu0
        %v1611 = vadd.f32 %v1450, %v1610
        %v1612 = vpop.f32.mrf.mxu0
        %1613 = vmatprep.mubr.bf16.mxu0 0
        %1614 = vmatmul.mubr.bf16.gmra.mxu0 %v619
        %v1615 = vpop.f32.mrf.mxu0
        %v1616 = vadd.f32 %v1455, %v1615
        %v1617 = vpop.f32.mrf.mxu0
        %v1618 = vpop.f32.mrf.mxu0
        %v1619 = vadd.f32 %v1458, %v1618
        %v1620 = vpop.f32.mrf.mxu0
        %1621 = vmatprep.mubr.bf16.mxu0 0
        %1622 = vmatmul.mubr.bf16.gmra.mxu0 %v622
        %v1623 = vpop.f32.mrf.mxu0
        %v1624 = vadd.f32 %v1463, %v1623
        %v1625 = vpop.f32.mrf.mxu0
        %v1626 = vpop.f32.mrf.mxu0
        %v1627 = vadd.f32 %v1466, %v1626
        %v1628 = vpop.f32.mrf.mxu0
        %1629 = vmatprep.mubr.bf16.mxu0 0
        %1630 = vmatmul.mubr.bf16.gmra.mxu0 %v625
        %v1631 = vpop.f32.mrf.mxu0
        %v1632 = vadd.f32 %v1471, %v1631
        %v1633 = vpop.f32.mrf.mxu0
        %v1634 = vpop.f32.mrf.mxu0
        %v1635 = vadd.f32 %v1474, %v1634
        %v1636 = vpop.f32.mrf.mxu0
        %1637 = vmatprep.mubr.bf16.mxu0 0
        %1638 = vmatmul.mubr.bf16.gmra.mxu0 %v628
        %v1639 = vpop.f32.mrf.mxu0
        %v1640 = vadd.f32 %v1479, %v1639
        %v1641 = vpop.f32.mrf.mxu0
        %v1642 = vpop.f32.mrf.mxu0
        %v1643 = vadd.f32 %v1482, %v1642
        %v1644 = vpop.f32.mrf.mxu0
        %1645 = vmatprep.mubr.bf16.mxu0 0
        %1646 = vmatmul.mubr.bf16.gmra.mxu0 %v631
        %v1647 = vpop.f32.mrf.mxu0
        %v1648 = vadd.f32 %v1487, %v1647
        %v1649 = vpop.f32.mrf.mxu0
        %v1650 = vpop.f32.mrf.mxu0
        %v1651 = vadd.f32 %v1490, %v1650
        %v1652 = vpop.f32.mrf.mxu0
        %1653 = vmatprep.mubr.bf16.mxu0 0
        %1654 = vmatmul.mubr.bf16.gmra.mxu0 %v634
        %v1655 = vpop.f32.mrf.mxu0
        %v1656 = vadd.f32 %v1495, %v1655
        %v1657 = vpop.f32.mrf.mxu0
        %v1658 = vpop.f32.mrf.mxu0
        %v1659 = vadd.f32 %v1498, %v1658
        %v1660 = vpop.f32.mrf.mxu0
        %1661 = vmatprep.mubr.bf16.mxu0 0
        %1662 = vmatmul.mubr.bf16.gmra.mxu0 %v637
        %v1663 = vpop.f32.mrf.mxu0
        %v1664 = vadd.f32 %v1503, %v1663
        %v1665 = vpop.f32.mrf.mxu0
        %v1666 = vpop.f32.mrf.mxu0
        %v1667 = vadd.f32 %v1506, %v1666
        %v1668 = vpop.f32.mrf.mxu0
        %1669 = vdwg.mxu0
        %s1670 = scalar_lea.vmem [#allocation5], 384
        %v1671 = vld [vmem:[%s1670] sm:$0xf]
        %v1672 = vld [vmem:[%s1670 + $0x4] sm:$0xf]
        %v1673 = vld [vmem:[%s1670 + $0x8] sm:$0xf]
        %v1674 = vld [vmem:[%s1670 + $0xc] sm:$0xf]
        %v1675 = vld [vmem:[%s1670 + $0x10] sm:$0xf]
        %v1676 = vld [vmem:[%s1670 + $0x14] sm:$0xf]
        %v1677 = vld [vmem:[%s1670 + $0x18] sm:$0xf]
        %v1678 = vld [vmem:[%s1670 + $0x1c] sm:$0xf]
        %v1679 = vld [vmem:[%s1670 + $0x20] sm:$0xf]
        %v1680 = vld [vmem:[%s1670 + $0x24] sm:$0xf]
        %v1681 = vld [vmem:[%s1670 + $0x28] sm:$0xf]
        %v1682 = vld [vmem:[%s1670 + $0x2c] sm:$0xf]
        %v1683 = vld [vmem:[%s1670 + $0x30] sm:$0xf]
        %v1684 = vld [vmem:[%s1670 + $0x34] sm:$0xf]
        %v1685 = vld [vmem:[%s1670 + $0x38] sm:$0xf]
        %v1686 = vld [vmem:[%s1670 + $0x3c] sm:$0xf]
        %v1687 = vld [vmem:[%s1670 + $0x40] sm:$0xf]
        %v1688 = vld [vmem:[%s1670 + $0x44] sm:$0xf]
        %v1689 = vld [vmem:[%s1670 + $0x48] sm:$0xf]
        %v1690 = vld [vmem:[%s1670 + $0x4c] sm:$0xf]
        %v1691 = vld [vmem:[%s1670 + $0x50] sm:$0xf]
        %v1692 = vld [vmem:[%s1670 + $0x54] sm:$0xf]
        %v1693 = vld [vmem:[%s1670 + $0x58] sm:$0xf]
        %v1694 = vld [vmem:[%s1670 + $0x5c] sm:$0xf]
        %v1695 = vld [vmem:[%s1670 + $0x60] sm:$0xf]
        %v1696 = vld [vmem:[%s1670 + $0x64] sm:$0xf]
        %v1697 = vld [vmem:[%s1670 + $0x68] sm:$0xf]
        %v1698 = vld [vmem:[%s1670 + $0x6c] sm:$0xf]
        %v1699 = vld [vmem:[%s1670 + $0x70] sm:$0xf]
        %v1700 = vld [vmem:[%s1670 + $0x74] sm:$0xf]
        %v1701 = vld [vmem:[%s1670 + $0x78] sm:$0xf]
        %v1702 = vld [vmem:[%s1670 + $0x7c] sm:$0xf]
        %v1703 = vld [vmem:[%s1670 + $0x80] sm:$0xf]
        %v1704 = vld [vmem:[%s1670 + $0x84] sm:$0xf]
        %v1705 = vld [vmem:[%s1670 + $0x88] sm:$0xf]
        %v1706 = vld [vmem:[%s1670 + $0x8c] sm:$0xf]
        %v1707 = vld [vmem:[%s1670 + $0x90] sm:$0xf]
        %v1708 = vld [vmem:[%s1670 + $0x94] sm:$0xf]
        %v1709 = vld [vmem:[%s1670 + $0x98] sm:$0xf]
        %v1710 = vld [vmem:[%s1670 + $0x9c] sm:$0xf]
        %v1711 = vld [vmem:[%s1670 + $0xa0] sm:$0xf]
        %v1712 = vld [vmem:[%s1670 + $0xa4] sm:$0xf]
        %v1713 = vld [vmem:[%s1670 + $0xa8] sm:$0xf]
        %v1714 = vld [vmem:[%s1670 + $0xac] sm:$0xf]
        %v1715 = vld [vmem:[%s1670 + $0xb0] sm:$0xf]
        %v1716 = vld [vmem:[%s1670 + $0xb4] sm:$0xf]
        %v1717 = vld [vmem:[%s1670 + $0xb8] sm:$0xf]
        %v1718 = vld [vmem:[%s1670 + $0xbc] sm:$0xf]
        %v1767 = vunpack.c.l.b16 %v1671
        %v1768 = vunpack.c.l.b16 %v1672
        %v1769 = vunpack.c.l.b16 %v1673
        %v1770 = vunpack.c.l.b16 %v1674
        %v1771 = vunpack.c.l.b16 %v1675
        %v1772 = vunpack.c.l.b16 %v1676
        %v1773 = vunpack.c.l.b16 %v1677
        %v1774 = vunpack.c.l.b16 %v1678
        %v1775 = vunpack.c.l.b16 %v1679
        %v1776 = vunpack.c.l.b16 %v1680
        %v1777 = vunpack.c.l.b16 %v1681
        %v1778 = vunpack.c.l.b16 %v1682
        %v1779 = vunpack.c.l.b16 %v1683
        %v1780 = vunpack.c.l.b16 %v1684
        %v1781 = vunpack.c.l.b16 %v1685
        %v1782 = vunpack.c.l.b16 %v1686
        %v1783 = vunpack.c.l.b16 %v1687
        %v1784 = vunpack.c.l.b16 %v1688
        %v1785 = vunpack.c.l.b16 %v1689
        %v1786 = vunpack.c.l.b16 %v1690
        %v1787 = vunpack.c.l.b16 %v1691
        %v1788 = vunpack.c.l.b16 %v1692
        %v1789 = vunpack.c.l.b16 %v1693
        %v1790 = vunpack.c.l.b16 %v1694
        %v1791 = vunpack.c.l.b16 %v1695
        %v1792 = vunpack.c.l.b16 %v1696
        %v1793 = vunpack.c.l.b16 %v1697
        %v1794 = vunpack.c.l.b16 %v1698
        %v1795 = vunpack.c.l.b16 %v1699
        %v1796 = vunpack.c.l.b16 %v1700
        %v1797 = vunpack.c.l.b16 %v1701
        %v1798 = vunpack.c.l.b16 %v1702
        %v1799 = vunpack.c.l.b16 %v1703
        %v1800 = vunpack.c.l.b16 %v1704
        %v1801 = vunpack.c.l.b16 %v1705
        %v1802 = vunpack.c.l.b16 %v1706
        %v1803 = vunpack.c.l.b16 %v1707
        %v1804 = vunpack.c.l.b16 %v1708
        %v1805 = vunpack.c.l.b16 %v1709
        %v1806 = vunpack.c.l.b16 %v1710
        %v1807 = vunpack.c.l.b16 %v1711
        %v1808 = vunpack.c.l.b16 %v1712
        %v1809 = vunpack.c.l.b16 %v1713
        %v1810 = vunpack.c.l.b16 %v1714
        %v1811 = vunpack.c.l.b16 %v1715
        %v1812 = vunpack.c.l.b16 %v1716
        %v1813 = vunpack.c.l.b16 %v1717
        %v1814 = vunpack.c.l.b16 %v1718
        %v1815 = vpack.c.b16 %v1768, %v1767
        %v1816 = vpack.c.b16 %v1770, %v1769
        %v1817 = vpack.c.b16 %v1772, %v1771
        %v1818 = vpack.c.b16 %v1774, %v1773
        %v1819 = vpack.c.b16 %v1776, %v1775
        %v1820 = vpack.c.b16 %v1778, %v1777
        %v1821 = vpack.c.b16 %v1780, %v1779
        %v1822 = vpack.c.b16 %v1782, %v1781
        %v1823 = vpack.c.b16 %v1784, %v1783
        %v1824 = vpack.c.b16 %v1786, %v1785
        %v1825 = vpack.c.b16 %v1788, %v1787
        %v1826 = vpack.c.b16 %v1790, %v1789
        %v1827 = vpack.c.b16 %v1792, %v1791
        %v1828 = vpack.c.b16 %v1794, %v1793
        %v1829 = vpack.c.b16 %v1796, %v1795
        %v1830 = vpack.c.b16 %v1798, %v1797
        %v1831 = vpack.c.b16 %v1800, %v1799
        %v1832 = vpack.c.b16 %v1802, %v1801
        %v1833 = vpack.c.b16 %v1804, %v1803
        %v1834 = vpack.c.b16 %v1806, %v1805
        %v1835 = vpack.c.b16 %v1808, %v1807
        %v1836 = vpack.c.b16 %v1810, %v1809
        %v1837 = vpack.c.b16 %v1812, %v1811
        %v1838 = vpack.c.b16 %v1814, %v1813
        %1863 = vmatprep.subr.bf16.mxu0 0
        %1864 = vmatpush1.bf16.msra.mxu0 %v1822
        %1865 = vmatprep.subr.bf16.mxu0 0
        %1866 = vmatpush1.bf16.msra.mxu0 %v1821
        %1867 = vmatprep.subr.bf16.mxu0 0
        %1868 = vmatpush1.bf16.msra.mxu0 %v1820
        %1869 = vmatprep.subr.bf16.mxu0 0
        %1870 = vmatpush1.bf16.msra.mxu0 %v1819
        %1871 = vmatprep.subr.bf16.mxu0 0
        %1872 = vmatpush1.bf16.msra.mxu0 %v1818
        %1873 = vmatprep.subr.bf16.mxu0 0
        %1874 = vmatpush1.bf16.msra.mxu0 %v1817
        %1875 = vmatprep.subr.bf16.mxu0 0
        %1876 = vmatpush1.bf16.msra.mxu0 %v1816
        %1877 = vmatprep.subr.bf16.mxu0 0
        %1878 = vmatpush1.bf16.msra.mxu0 %v1815
        %1879 = vmatprep.subr.bf16.mxu0 0
        %1880 = vmatpush2.bf16.msra.mxu0 %v1830
        %1881 = vmatprep.subr.bf16.mxu0 0
        %1882 = vmatpush2.bf16.msra.mxu0 %v1829
        %1883 = vmatprep.subr.bf16.mxu0 0
        %1884 = vmatpush2.bf16.msra.mxu0 %v1828
        %1885 = vmatprep.subr.bf16.mxu0 0
        %1886 = vmatpush2.bf16.msra.mxu0 %v1827
        %1887 = vmatprep.subr.bf16.mxu0 0
        %1888 = vmatpush2.bf16.msra.mxu0 %v1826
        %1889 = vmatprep.subr.bf16.mxu0 0
        %1890 = vmatpush2.bf16.msra.mxu0 %v1825
        %1891 = vmatprep.subr.bf16.mxu0 0
        %1892 = vmatpush2.bf16.msra.mxu0 %v1824
        %1893 = vmatprep.subr.bf16.mxu0 0
        %1894 = vmatpush2.bf16.msra.mxu0 %v1823
        %1895 = vmatprep.mubr.bf16.mxu0 %v597
        %1896 = vmatmul.mubr.bf16.gmra.mxu0 %v596
        %v1897 = vpop.f32.mrf.mxu0
        %v1898 = vadd.f32 0.0, %v1897
        %v1899 = vpop.f32.mrf.mxu0
        %v1900 = vpop.f32.mrf.mxu0
        %v1901 = vadd.f32 0.0, %v1900
        %v1902 = vpop.f32.mrf.mxu0
        %1903 = vmatprep.mubr.bf16.mxu0 %v600
        %1904 = vmatmul.mubr.bf16.gmra.mxu0 %v599
        %v1905 = vpop.f32.mrf.mxu0
        %v1906 = vadd.f32 0.0, %v1905
        %v1907 = vpop.f32.mrf.mxu0
        %v1908 = vpop.f32.mrf.mxu0
        %v1909 = vadd.f32 0.0, %v1908
        %v1910 = vpop.f32.mrf.mxu0
        %1911 = vmatprep.mubr.bf16.mxu0 %v603
        %1912 = vmatmul.mubr.bf16.gmra.mxu0 %v602
        %v1913 = vpop.f32.mrf.mxu0
        %v1914 = vadd.f32 0.0, %v1913
        %v1915 = vpop.f32.mrf.mxu0
        %v1916 = vpop.f32.mrf.mxu0
        %v1917 = vadd.f32 0.0, %v1916
        %v1918 = vpop.f32.mrf.mxu0
        %1919 = vmatprep.mubr.bf16.mxu0 %v606
        %1920 = vmatmul.mubr.bf16.gmra.mxu0 %v605
        %v1921 = vpop.f32.mrf.mxu0
        %v1922 = vadd.f32 0.0, %v1921
        %v1923 = vpop.f32.mrf.mxu0
        %v1924 = vpop.f32.mrf.mxu0
        %v1925 = vadd.f32 0.0, %v1924
        %v1926 = vpop.f32.mrf.mxu0
        %1927 = vmatprep.mubr.bf16.mxu0 %v609
        %1928 = vmatmul.mubr.bf16.gmra.mxu0 %v608
        %v1929 = vpop.f32.mrf.mxu0
        %v1930 = vadd.f32 0.0, %v1929
        %v1931 = vpop.f32.mrf.mxu0
        %v1932 = vpop.f32.mrf.mxu0
        %v1933 = vadd.f32 0.0, %v1932
        %v1934 = vpop.f32.mrf.mxu0
        %1935 = vmatprep.mubr.bf16.mxu0 %v612
        %1936 = vmatmul.mubr.bf16.gmra.mxu0 %v611
        %v1937 = vpop.f32.mrf.mxu0
        %v1938 = vadd.f32 0.0, %v1937
        %v1939 = vpop.f32.mrf.mxu0
        %v1940 = vpop.f32.mrf.mxu0
        %v1941 = vadd.f32 0.0, %v1940
        %v1942 = vpop.f32.mrf.mxu0
        %1943 = vmatprep.mubr.bf16.mxu0 %v615
        %1944 = vmatmul.mubr.bf16.gmra.mxu0 %v614
        %v1945 = vpop.f32.mrf.mxu0
        %v1946 = vadd.f32 0.0, %v1945
        %v1947 = vpop.f32.mrf.mxu0
        %v1948 = vpop.f32.mrf.mxu0
        %v1949 = vadd.f32 0.0, %v1948
        %v1950 = vpop.f32.mrf.mxu0
        %1951 = vmatprep.mubr.bf16.mxu0 %v618
        %1952 = vmatmul.mubr.bf16.gmra.mxu0 %v617
        %v1953 = vpop.f32.mrf.mxu0
        %v1954 = vadd.f32 0.0, %v1953
        %v1955 = vpop.f32.mrf.mxu0
        %v1956 = vpop.f32.mrf.mxu0
        %v1957 = vadd.f32 0.0, %v1956
        %v1958 = vpop.f32.mrf.mxu0
        %1959 = vmatprep.mubr.bf16.mxu0 %v621
        %1960 = vmatmul.mubr.bf16.gmra.mxu0 %v620
        %v1961 = vpop.f32.mrf.mxu0
        %v1962 = vadd.f32 0.0, %v1961
        %v1963 = vpop.f32.mrf.mxu0
        %v1964 = vpop.f32.mrf.mxu0
        %v1965 = vadd.f32 0.0, %v1964
        %v1966 = vpop.f32.mrf.mxu0
        %1967 = vmatprep.mubr.bf16.mxu0 %v624
        %1968 = vmatmul.mubr.bf16.gmra.mxu0 %v623
        %v1969 = vpop.f32.mrf.mxu0
        %v1970 = vadd.f32 0.0, %v1969
        %v1971 = vpop.f32.mrf.mxu0
        %v1972 = vpop.f32.mrf.mxu0
        %v1973 = vadd.f32 0.0, %v1972
        %v1974 = vpop.f32.mrf.mxu0
        %1975 = vmatprep.mubr.bf16.mxu0 %v627
        %1976 = vmatmul.mubr.bf16.gmra.mxu0 %v626
        %v1977 = vpop.f32.mrf.mxu0
        %v1978 = vadd.f32 0.0, %v1977
        %v1979 = vpop.f32.mrf.mxu0
        %v1980 = vpop.f32.mrf.mxu0
        %v1981 = vadd.f32 0.0, %v1980
        %v1982 = vpop.f32.mrf.mxu0
        %1983 = vmatprep.mubr.bf16.mxu0 %v630
        %1984 = vmatmul.mubr.bf16.gmra.mxu0 %v629
        %v1985 = vpop.f32.mrf.mxu0
        %v1986 = vadd.f32 0.0, %v1985
        %v1987 = vpop.f32.mrf.mxu0
        %v1988 = vpop.f32.mrf.mxu0
        %v1989 = vadd.f32 0.0, %v1988
        %v1990 = vpop.f32.mrf.mxu0
        %1991 = vmatprep.mubr.bf16.mxu0 %v633
        %1992 = vmatmul.mubr.bf16.gmra.mxu0 %v632
        %v1993 = vpop.f32.mrf.mxu0
        %v1994 = vadd.f32 0.0, %v1993
        %v1995 = vpop.f32.mrf.mxu0
        %v1996 = vpop.f32.mrf.mxu0
        %v1997 = vadd.f32 0.0, %v1996
        %v1998 = vpop.f32.mrf.mxu0
        %1999 = vmatprep.mubr.bf16.mxu0 %v636
        %2000 = vmatmul.mubr.bf16.gmra.mxu0 %v635
        %v2001 = vpop.f32.mrf.mxu0
        %v2002 = vadd.f32 0.0, %v2001
        %v2003 = vpop.f32.mrf.mxu0
        %v2004 = vpop.f32.mrf.mxu0
        %v2005 = vadd.f32 0.0, %v2004
        %v2006 = vpop.f32.mrf.mxu0
        %2007 = vmatprep.mubr.bf16.mxu0 %v687
        %2008 = vmatmul.mubr.bf16.gmra.mxu0 %v686
        %v2009 = vpop.f32.mrf.mxu0
        %v2010 = vadd.f32 0.0, %v2009
        %v2011 = vpop.f32.mrf.mxu0
        %v2012 = vpop.f32.mrf.mxu0
        %v2013 = vadd.f32 0.0, %v2012
        %v2014 = vpop.f32.mrf.mxu0
        %2015 = vmatprep.mubr.bf16.mxu0 %v592
        %2016 = vmatmul.mubr.bf16.gmra.mxu0 %v592
        %v2017 = vpop.f32.mrf.mxu0
        %v2018 = vadd.f32 0.0, %v2017
        %v2019 = vpop.f32.mrf.mxu0
        %v2020 = vpop.f32.mrf.mxu0
        %v2021 = vadd.f32 0.0, %v2020
        %v2022 = vpop.f32.mrf.mxu0
        %2023 = vdwg.mxu0
        %2024 = vmatprep.subr.bf16.mxu0 0
        %2025 = vmatpush1.bf16.msra.mxu0 %v1838
        %2026 = vmatprep.subr.bf16.mxu0 0
        %2027 = vmatpush1.bf16.msra.mxu0 %v1837
        %2028 = vmatprep.subr.bf16.mxu0 0
        %2029 = vmatpush1.bf16.msra.mxu0 %v1836
        %2030 = vmatprep.subr.bf16.mxu0 0
        %2031 = vmatpush1.bf16.msra.mxu0 %v1835
        %2032 = vmatprep.subr.bf16.mxu0 0
        %2033 = vmatpush1.bf16.msra.mxu0 %v1834
        %2034 = vmatprep.subr.bf16.mxu0 0
        %2035 = vmatpush1.bf16.msra.mxu0 %v1833
        %2036 = vmatprep.subr.bf16.mxu0 0
        %2037 = vmatpush1.bf16.msra.mxu0 %v1832
        %2038 = vmatprep.subr.bf16.mxu0 0
        %2039 = vmatpush1.bf16.msra.mxu0 %v1831
        %2040 = vmatprep.subr.bf16.mxu0 0
        %2041 = vmatpush2.bf16.msra.mxu0 0
        %2042 = vmatprep.subr.bf16.mxu0 0
        %2043 = vmatpush2.bf16.msra.mxu0 0
        %2044 = vmatprep.subr.bf16.mxu0 0
        %2045 = vmatpush2.bf16.msra.mxu0 0
        %2046 = vmatprep.subr.bf16.mxu0 0
        %2047 = vmatpush2.bf16.msra.mxu0 0
        %2048 = vmatprep.subr.bf16.mxu0 0
        %2049 = vmatpush2.bf16.msra.mxu0 0
        %2050 = vmatprep.subr.bf16.mxu0 0
        %2051 = vmatpush2.bf16.msra.mxu0 0
        %2052 = vmatprep.subr.bf16.mxu0 0
        %2053 = vmatpush2.bf16.msra.mxu0 0
        %2054 = vmatprep.subr.bf16.mxu0 0
        %2055 = vmatpush2.bf16.msra.mxu0 0
        %2056 = vmatprep.mubr.bf16.mxu0 0
        %2057 = vmatmul.mubr.bf16.gmra.mxu0 %v598
        %v2058 = vpop.f32.mrf.mxu0
        %v2059 = vadd.f32 %v1898, %v2058
        %v2060 = vpop.f32.mrf.mxu0
        %v2061 = vpop.f32.mrf.mxu0
        %v2062 = vadd.f32 %v1901, %v2061
        %v2063 = vpop.f32.mrf.mxu0
        %2064 = vmatprep.mubr.bf16.mxu0 0
        %2065 = vmatmul.mubr.bf16.gmra.mxu0 %v601
        %v2066 = vpop.f32.mrf.mxu0
        %v2067 = vadd.f32 %v1906, %v2066
        %v2068 = vpop.f32.mrf.mxu0
        %v2069 = vpop.f32.mrf.mxu0
        %v2070 = vadd.f32 %v1909, %v2069
        %v2071 = vpop.f32.mrf.mxu0
        %2072 = vmatprep.mubr.bf16.mxu0 0
        %2073 = vmatmul.mubr.bf16.gmra.mxu0 %v604
        %v2074 = vpop.f32.mrf.mxu0
        %v2075 = vadd.f32 %v1914, %v2074
        %v2076 = vpop.f32.mrf.mxu0
        %v2077 = vpop.f32.mrf.mxu0
        %v2078 = vadd.f32 %v1917, %v2077
        %v2079 = vpop.f32.mrf.mxu0
        %2080 = vmatprep.mubr.bf16.mxu0 0
        %2081 = vmatmul.mubr.bf16.gmra.mxu0 %v607
        %v2082 = vpop.f32.mrf.mxu0
        %v2083 = vadd.f32 %v1922, %v2082
        %v2084 = vpop.f32.mrf.mxu0
        %v2085 = vpop.f32.mrf.mxu0
        %v2086 = vadd.f32 %v1925, %v2085
        %v2087 = vpop.f32.mrf.mxu0
        %2088 = vmatprep.mubr.bf16.mxu0 0
        %2089 = vmatmul.mubr.bf16.gmra.mxu0 %v610
        %v2090 = vpop.f32.mrf.mxu0
        %v2091 = vadd.f32 %v1930, %v2090
        %v2092 = vpop.f32.mrf.mxu0
        %v2093 = vpop.f32.mrf.mxu0
        %v2094 = vadd.f32 %v1933, %v2093
        %v2095 = vpop.f32.mrf.mxu0
        %2096 = vmatprep.mubr.bf16.mxu0 0
        %2097 = vmatmul.mubr.bf16.gmra.mxu0 %v613
        %v2098 = vpop.f32.mrf.mxu0
        %v2099 = vadd.f32 %v1938, %v2098
        %v2100 = vpop.f32.mrf.mxu0
        %v2101 = vpop.f32.mrf.mxu0
        %v2102 = vadd.f32 %v1941, %v2101
        %v2103 = vpop.f32.mrf.mxu0
        %2104 = vmatprep.mubr.bf16.mxu0 0
        %2105 = vmatmul.mubr.bf16.gmra.mxu0 %v616
        %v2106 = vpop.f32.mrf.mxu0
        %v2107 = vadd.f32 %v1946, %v2106
        %v2108 = vpop.f32.mrf.mxu0
        %v2109 = vpop.f32.mrf.mxu0
        %v2110 = vadd.f32 %v1949, %v2109
        %v2111 = vpop.f32.mrf.mxu0
        %2112 = vmatprep.mubr.bf16.mxu0 0
        %2113 = vmatmul.mubr.bf16.gmra.mxu0 %v619
        %v2114 = vpop.f32.mrf.mxu0
        %v2115 = vadd.f32 %v1954, %v2114
        %v2116 = vpop.f32.mrf.mxu0
        %v2117 = vpop.f32.mrf.mxu0
        %v2118 = vadd.f32 %v1957, %v2117
        %v2119 = vpop.f32.mrf.mxu0
        %2120 = vmatprep.mubr.bf16.mxu0 0
        %2121 = vmatmul.mubr.bf16.gmra.mxu0 %v622
        %v2122 = vpop.f32.mrf.mxu0
        %v2123 = vadd.f32 %v1962, %v2122
        %v2124 = vpop.f32.mrf.mxu0
        %v2125 = vpop.f32.mrf.mxu0
        %v2126 = vadd.f32 %v1965, %v2125
        %v2127 = vpop.f32.mrf.mxu0
        %2128 = vmatprep.mubr.bf16.mxu0 0
        %2129 = vmatmul.mubr.bf16.gmra.mxu0 %v625
        %v2130 = vpop.f32.mrf.mxu0
        %v2131 = vadd.f32 %v1970, %v2130
        %v2132 = vpop.f32.mrf.mxu0
        %v2133 = vpop.f32.mrf.mxu0
        %v2134 = vadd.f32 %v1973, %v2133
        %v2135 = vpop.f32.mrf.mxu0
        %2136 = vmatprep.mubr.bf16.mxu0 0
        %2137 = vmatmul.mubr.bf16.gmra.mxu0 %v628
        %v2138 = vpop.f32.mrf.mxu0
        %v2139 = vadd.f32 %v1978, %v2138
        %v2140 = vpop.f32.mrf.mxu0
        %v2141 = vpop.f32.mrf.mxu0
        %v2142 = vadd.f32 %v1981, %v2141
        %v2143 = vpop.f32.mrf.mxu0
        %2144 = vmatprep.mubr.bf16.mxu0 0
        %2145 = vmatmul.mubr.bf16.gmra.mxu0 %v631
        %v2146 = vpop.f32.mrf.mxu0
        %v2147 = vadd.f32 %v1986, %v2146
        %v2148 = vpop.f32.mrf.mxu0
        %v2149 = vpop.f32.mrf.mxu0
        %v2150 = vadd.f32 %v1989, %v2149
        %v2151 = vpop.f32.mrf.mxu0
        %2152 = vmatprep.mubr.bf16.mxu0 0
        %2153 = vmatmul.mubr.bf16.gmra.mxu0 %v634
        %v2154 = vpop.f32.mrf.mxu0
        %v2155 = vadd.f32 %v1994, %v2154
        %v2156 = vpop.f32.mrf.mxu0
        %v2157 = vpop.f32.mrf.mxu0
        %v2158 = vadd.f32 %v1997, %v2157
        %v2159 = vpop.f32.mrf.mxu0
        %2160 = vmatprep.mubr.bf16.mxu0 0
        %2161 = vmatmul.mubr.bf16.gmra.mxu0 %v637
        %v2162 = vpop.f32.mrf.mxu0
        %v2163 = vadd.f32 %v2002, %v2162
        %v2164 = vpop.f32.mrf.mxu0
        %v2165 = vpop.f32.mrf.mxu0
        %v2166 = vadd.f32 %v2005, %v2165
        %v2167 = vpop.f32.mrf.mxu0
        %2168 = vmatprep.mubr.bf16.mxu0 0
        %2169 = vmatmul.mubr.bf16.gmra.mxu0 %v688
        %v2170 = vpop.f32.mrf.mxu0
        %v2171 = vadd.f32 %v2010, %v2170
        %v2172 = vpop.f32.mrf.mxu0
        %v2173 = vpop.f32.mrf.mxu0
        %v2174 = vadd.f32 %v2013, %v2173
        %v2175 = vpop.f32.mrf.mxu0
        %2176 = vmatprep.mubr.bf16.mxu0 0
        %2177 = vmatmul.mubr.bf16.gmra.mxu0 %v592
        %v2178 = vpop.f32.mrf.mxu0
        %v2179 = vadd.f32 %v2018, %v2178
        %v2180 = vpop.f32.mrf.mxu0
        %v2181 = vpop.f32.mrf.mxu0
        %v2182 = vadd.f32 %v2021, %v2181
        %v2183 = vpop.f32.mrf.mxu0
        %2184 = vdwg.mxu0
        %v2185 = vadd.f32 %v1544, %v2059
        %v2186 = vadd.f32 %v1547, %v2062
        %v2187 = vadd.f32 %v1552, %v2067
        %v2188 = vadd.f32 %v1555, %v2070
        %v2189 = vadd.f32 %v1560, %v2075
        %v2190 = vadd.f32 %v1563, %v2078
        %v2191 = vadd.f32 %v1568, %v2083
        %v2192 = vadd.f32 %v1571, %v2086
        %v2193 = vadd.f32 %v1576, %v2091
        %v2194 = vadd.f32 %v1579, %v2094
        %v2195 = vadd.f32 %v1584, %v2099
        %v2196 = vadd.f32 %v1587, %v2102
        %v2197 = vadd.f32 %v1592, %v2107
        %v2198 = vadd.f32 %v1595, %v2110
        %v2199 = vadd.f32 %v1600, %v2115
        %v2200 = vadd.f32 %v1603, %v2118
        %v2201 = vadd.f32 %v1608, %v2123
        %v2202 = vadd.f32 %v1611, %v2126
        %v2203 = vadd.f32 %v1616, %v2131
        %v2204 = vadd.f32 %v1619, %v2134
        %v2205 = vadd.f32 %v1624, %v2139
        %v2206 = vadd.f32 %v1627, %v2142
        %v2207 = vadd.f32 %v1632, %v2147
        %v2208 = vadd.f32 %v1635, %v2150
        %v2209 = vadd.f32 %v1640, %v2155
        %v2210 = vadd.f32 %v1643, %v2158
        %v2211 = vadd.f32 %v1648, %v2163
        %v2212 = vadd.f32 %v1651, %v2166
        %v2213 = vadd.f32 %v1656, %v2171
        %v2214 = vadd.f32 %v1659, %v2174
        %v2215 = vadd.f32 %v1664, %v2179
        %v2216 = vadd.f32 %v1667, %v2182
        %v2217 = vld [vmem:[%s2] sm:$0x1]
        %v2219 = vlaneseq
        %v2220 = vshrl.u32 %v2219, 7
        %v2221 = vsub.s32 0, %v2220
        %v2222 = vrot.slane %v2217, %v2221
        %v2224 = vmul.f32 %v2185, %v2222
        %v2225 = vmul.f32 %v2186, %v2222
        %v2226 = vmul.f32 %v2187, %v2222
        %v2227 = vmul.f32 %v2188, %v2222
        %v2228 = vmul.f32 %v2189, %v2222
        %v2229 = vmul.f32 %v2190, %v2222
        %v2230 = vmul.f32 %v2191, %v2222
        %v2231 = vmul.f32 %v2192, %v2222
        %v2232 = vmul.f32 %v2193, %v2222
        %v2233 = vmul.f32 %v2194, %v2222
        %v2234 = vmul.f32 %v2195, %v2222
        %v2235 = vmul.f32 %v2196, %v2222
        %v2236 = vmul.f32 %v2197, %v2222
        %v2237 = vmul.f32 %v2198, %v2222
        %v2238 = vmul.f32 %v2199, %v2222
        %v2239 = vmul.f32 %v2200, %v2222
        %v2240 = vmul.f32 %v2201, %v2222
        %v2241 = vmul.f32 %v2202, %v2222
        %v2242 = vmul.f32 %v2203, %v2222
        %v2243 = vmul.f32 %v2204, %v2222
        %v2244 = vmul.f32 %v2205, %v2222
        %v2245 = vmul.f32 %v2206, %v2222
        %v2246 = vmul.f32 %v2207, %v2222
        %v2247 = vmul.f32 %v2208, %v2222
        %v2248 = vmul.f32 %v2209, %v2222
        %v2249 = vmul.f32 %v2210, %v2222
        %v2250 = vmul.f32 %v2211, %v2222
        %v2251 = vmul.f32 %v2212, %v2222
        %v2252 = vmul.f32 %v2213, %v2222
        %v2253 = vmul.f32 %v2214, %v2222
        %v2254 = vmul.f32 %v2215, %v2222
        %v2255 = vmul.f32 %v2216, %v2222
        %v2256 = vld [vmem:[%s3] sm:$0x1]
        %v2258 = vlaneseq
        %v2259 = vshrl.u32 %v2258, 7
        %v2260 = vsub.s32 0, %v2259
        %v2261 = vrot.slane %v2256, %v2260
        %v2263 = vadd.f32 %v2224, %v2261
        %v2264 = vadd.f32 %v2225, %v2261
        %v2265 = vadd.f32 %v2226, %v2261
        %v2266 = vadd.f32 %v2227, %v2261
        %v2267 = vadd.f32 %v2228, %v2261
        %v2268 = vadd.f32 %v2229, %v2261
        %v2269 = vadd.f32 %v2230, %v2261
        %v2270 = vadd.f32 %v2231, %v2261
        %v2271 = vadd.f32 %v2232, %v2261
        %v2272 = vadd.f32 %v2233, %v2261
        %v2273 = vadd.f32 %v2234, %v2261
        %v2274 = vadd.f32 %v2235, %v2261
        %v2275 = vadd.f32 %v2236, %v2261
        %v2276 = vadd.f32 %v2237, %v2261
        %v2277 = vadd.f32 %v2238, %v2261
        %v2278 = vadd.f32 %v2239, %v2261
        %v2279 = vadd.f32 %v2240, %v2261
        %v2280 = vadd.f32 %v2241, %v2261
        %v2281 = vadd.f32 %v2242, %v2261
        %v2282 = vadd.f32 %v2243, %v2261
        %v2283 = vadd.f32 %v2244, %v2261
        %v2284 = vadd.f32 %v2245, %v2261
        %v2285 = vadd.f32 %v2246, %v2261
        %v2286 = vadd.f32 %v2247, %v2261
        %v2287 = vadd.f32 %v2248, %v2261
        %v2288 = vadd.f32 %v2249, %v2261
        %v2289 = vadd.f32 %v2250, %v2261
        %v2290 = vadd.f32 %v2251, %v2261
        %v2291 = vadd.f32 %v2252, %v2261
        %v2292 = vadd.f32 %v2253, %v2261
        %v2293 = vadd.f32 %v2254, %v2261
        %v2294 = vadd.f32 %v2255, %v2261
        %v2295 = vmax.f32 %v2263, 0.0
        %v2296 = vmax.f32 %v2264, 0.0
        %v2297 = vmax.f32 %v2265, 0.0
        %v2298 = vmax.f32 %v2266, 0.0
        %v2299 = vmax.f32 %v2267, 0.0
        %v2300 = vmax.f32 %v2268, 0.0
        %v2301 = vmax.f32 %v2269, 0.0
        %v2302 = vmax.f32 %v2270, 0.0
        %v2303 = vmax.f32 %v2271, 0.0
        %v2304 = vmax.f32 %v2272, 0.0
        %v2305 = vmax.f32 %v2273, 0.0
        %v2306 = vmax.f32 %v2274, 0.0
        %v2307 = vmax.f32 %v2275, 0.0
        %v2308 = vmax.f32 %v2276, 0.0
        %v2309 = vmax.f32 %v2277, 0.0
        %v2310 = vmax.f32 %v2278, 0.0
        %v2311 = vmax.f32 %v2279, 0.0
        %v2312 = vmax.f32 %v2280, 0.0
        %v2313 = vmax.f32 %v2281, 0.0
        %v2314 = vmax.f32 %v2282, 0.0
        %v2315 = vmax.f32 %v2283, 0.0
        %v2316 = vmax.f32 %v2284, 0.0
        %v2317 = vmax.f32 %v2285, 0.0
        %v2318 = vmax.f32 %v2286, 0.0
        %v2319 = vmax.f32 %v2287, 0.0
        %v2320 = vmax.f32 %v2288, 0.0
        %v2321 = vmax.f32 %v2289, 0.0
        %v2322 = vmax.f32 %v2290, 0.0
        %v2323 = vmax.f32 %v2291, 0.0
        %v2324 = vmax.f32 %v2292, 0.0
        %v2325 = vmax.f32 %v2293, 0.0
        %v2326 = vmax.f32 %v2294, 0.0
        %v2327 = vrot.slane %v2295, 7
        %v2328 = vrot.slane %v2297, 7
        %v2329 = vrot.slane %v2299, 7
        %v2330 = vrot.slane %v2301, 7
        %v2331 = vrot.slane %v2303, 7
        %v2332 = vrot.slane %v2305, 7
        %v2333 = vrot.slane %v2307, 7
        %v2334 = vrot.slane %v2309, 7
        %v2335 = vrot.slane %v2311, 7
        %v2336 = vrot.slane %v2313, 7
        %v2337 = vrot.slane %v2315, 7
        %v2338 = vrot.slane %v2317, 7
        %v2339 = vrot.slane %v2319, 7
        %v2340 = vrot.slane %v2321, 7
        %v2341 = vrot.slane %v2323, 7
        %v2342 = vrot.slane %v2325, 7
        %v2343 = vrot.slane %v2296, 7
        %v2344 = vrot.slane %v2298, 7
        %v2345 = vrot.slane %v2300, 7
        %v2346 = vrot.slane %v2302, 7
        %v2347 = vrot.slane %v2304, 7
        %v2348 = vrot.slane %v2306, 7
        %v2349 = vrot.slane %v2308, 7
        %v2350 = vrot.slane %v2310, 7
        %v2351 = vrot.slane %v2312, 7
        %v2352 = vrot.slane %v2314, 7
        %v2353 = vrot.slane %v2316, 7
        %v2354 = vrot.slane %v2318, 7
        %v2355 = vrot.slane %v2320, 7
        %v2356 = vrot.slane %v2322, 7
        %v2357 = vrot.slane %v2324, 7
        %v2358 = vrot.slane %v2326, 7
        %v2359 = vsel %vm428, %v2327, %v2343
        %v2360 = vsel %vm428, %v2328, %v2344
        %v2361 = vsel %vm428, %v2329, %v2345
        %v2362 = vsel %vm428, %v2330, %v2346
        %v2363 = vsel %vm428, %v2331, %v2347
        %v2364 = vsel %vm428, %v2332, %v2348
        %v2365 = vsel %vm428, %v2333, %v2349
        %v2366 = vsel %vm428, %v2334, %v2350
        %v2367 = vsel %vm428, %v2335, %v2351
        %v2368 = vsel %vm428, %v2336, %v2352
        %v2369 = vsel %vm428, %v2337, %v2353
        %v2370 = vsel %vm428, %v2338, %v2354
        %v2371 = vsel %vm428, %v2339, %v2355
        %v2372 = vsel %vm428, %v2340, %v2356
        %v2373 = vsel %vm428, %v2341, %v2357
        %v2374 = vsel %vm428, %v2342, %v2358
        %v2375 = vsel %vm428, %v2343, %v2327
        %v2376 = vsel %vm428, %v2344, %v2328
        %v2377 = vsel %vm428, %v2345, %v2329
        %v2378 = vsel %vm428, %v2346, %v2330
        %v2379 = vsel %vm428, %v2347, %v2331
        %v2380 = vsel %vm428, %v2348, %v2332
        %v2381 = vsel %vm428, %v2349, %v2333
        %v2382 = vsel %vm428, %v2350, %v2334
        %v2383 = vsel %vm428, %v2351, %v2335
        %v2384 = vsel %vm428, %v2352, %v2336
        %v2385 = vsel %vm428, %v2353, %v2337
        %v2386 = vsel %vm428, %v2354, %v2338
        %v2387 = vsel %vm428, %v2355, %v2339
        %v2388 = vsel %vm428, %v2356, %v2340
        %v2389 = vsel %vm428, %v2357, %v2341
        %v2390 = vsel %vm428, %v2358, %v2342
        %v2391 = vsel %vm394, %v2375, 0.0
        %v2392 = vsel %vm395, %v2359, 0.0
        %v2393 = vsel %vm394, %v2376, 0.0
        %v2394 = vsel %vm395, %v2360, 0.0
        %v2395 = vsel %vm394, %v2377, 0.0
        %v2396 = vsel %vm395, %v2361, 0.0
        %v2397 = vsel %vm394, %v2378, 0.0
        %v2398 = vsel %vm395, %v2362, 0.0
        %v2399 = vsel %vm394, %v2379, 0.0
        %v2400 = vsel %vm395, %v2363, 0.0
        %v2401 = vsel %vm394, %v2380, 0.0
        %v2402 = vsel %vm395, %v2364, 0.0
        %v2403 = vsel %vm394, %v2381, 0.0
        %v2404 = vsel %vm395, %v2365, 0.0
        %v2405 = vsel %vm394, %v2382, 0.0
        %v2406 = vsel %vm395, %v2366, 0.0
        %v2407 = vsel %vm394, %v2383, 0.0
        %v2408 = vsel %vm395, %v2367, 0.0
        %v2409 = vsel %vm394, %v2384, 0.0
        %v2410 = vsel %vm395, %v2368, 0.0
        %v2411 = vsel %vm394, %v2385, 0.0
        %v2412 = vsel %vm395, %v2369, 0.0
        %v2413 = vsel %vm394, %v2386, 0.0
        %v2414 = vsel %vm395, %v2370, 0.0
        %v2415 = vsel %vm394, %v2387, 0.0
        %v2416 = vsel %vm395, %v2371, 0.0
        %v2417 = vsel %vm394, %v2388, 0.0
        %v2418 = vsel %vm395, %v2372, 0.0
        %v2419 = vsel %vm394, %v2389, 0.0
        %v2420 = vsel %vm395, %v2373, 0.0
        %v2421 = vsel %vm394, %v2390, 0.0
        %v2422 = vsel %vm395, %v2374, 0.0
        %v2423 = vrot.slane %v2295, 1
        %v2424 = vrot.slane %v2297, 1
        %v2425 = vrot.slane %v2299, 1
        %v2426 = vrot.slane %v2301, 1
        %v2427 = vrot.slane %v2303, 1
        %v2428 = vrot.slane %v2305, 1
        %v2429 = vrot.slane %v2307, 1
        %v2430 = vrot.slane %v2309, 1
        %v2431 = vrot.slane %v2311, 1
        %v2432 = vrot.slane %v2313, 1
        %v2433 = vrot.slane %v2315, 1
        %v2434 = vrot.slane %v2317, 1
        %v2435 = vrot.slane %v2319, 1
        %v2436 = vrot.slane %v2321, 1
        %v2437 = vrot.slane %v2323, 1
        %v2438 = vrot.slane %v2325, 1
        %v2439 = vrot.slane %v2296, 1
        %v2440 = vrot.slane %v2298, 1
        %v2441 = vrot.slane %v2300, 1
        %v2442 = vrot.slane %v2302, 1
        %v2443 = vrot.slane %v2304, 1
        %v2444 = vrot.slane %v2306, 1
        %v2445 = vrot.slane %v2308, 1
        %v2446 = vrot.slane %v2310, 1
        %v2447 = vrot.slane %v2312, 1
        %v2448 = vrot.slane %v2314, 1
        %v2449 = vrot.slane %v2316, 1
        %v2450 = vrot.slane %v2318, 1
        %v2451 = vrot.slane %v2320, 1
        %v2452 = vrot.slane %v2322, 1
        %v2453 = vrot.slane %v2324, 1
        %v2454 = vrot.slane %v2326, 1
        %v2455 = vsel %vm527, %v2423, %v2439
        %v2456 = vsel %vm527, %v2424, %v2440
        %v2457 = vsel %vm527, %v2425, %v2441
        %v2458 = vsel %vm527, %v2426, %v2442
        %v2459 = vsel %vm527, %v2427, %v2443
        %v2460 = vsel %vm527, %v2428, %v2444
        %v2461 = vsel %vm527, %v2429, %v2445
        %v2462 = vsel %vm527, %v2430, %v2446
        %v2463 = vsel %vm527, %v2431, %v2447
        %v2464 = vsel %vm527, %v2432, %v2448
        %v2465 = vsel %vm527, %v2433, %v2449
        %v2466 = vsel %vm527, %v2434, %v2450
        %v2467 = vsel %vm527, %v2435, %v2451
        %v2468 = vsel %vm527, %v2436, %v2452
        %v2469 = vsel %vm527, %v2437, %v2453
        %v2470 = vsel %vm527, %v2438, %v2454
        %v2471 = vsel %vm527, %v2439, %v2423
        %v2472 = vsel %vm527, %v2440, %v2424
        %v2473 = vsel %vm527, %v2441, %v2425
        %v2474 = vsel %vm527, %v2442, %v2426
        %v2475 = vsel %vm527, %v2443, %v2427
        %v2476 = vsel %vm527, %v2444, %v2428
        %v2477 = vsel %vm527, %v2445, %v2429
        %v2478 = vsel %vm527, %v2446, %v2430
        %v2479 = vsel %vm527, %v2447, %v2431
        %v2480 = vsel %vm527, %v2448, %v2432
        %v2481 = vsel %vm527, %v2449, %v2433
        %v2482 = vsel %vm527, %v2450, %v2434
        %v2483 = vsel %vm527, %v2451, %v2435
        %v2484 = vsel %vm527, %v2452, %v2436
        %v2485 = vsel %vm527, %v2453, %v2437
        %v2486 = vsel %vm527, %v2454, %v2438
        %v2487 = vsel %vm493, %v2455, 0.0
        %v2488 = vsel %vm494, %v2471, 0.0
        %v2489 = vsel %vm493, %v2456, 0.0
        %v2490 = vsel %vm494, %v2472, 0.0
        %v2491 = vsel %vm493, %v2457, 0.0
        %v2492 = vsel %vm494, %v2473, 0.0
        %v2493 = vsel %vm493, %v2458, 0.0
        %v2494 = vsel %vm494, %v2474, 0.0
        %v2495 = vsel %vm493, %v2459, 0.0
        %v2496 = vsel %vm494, %v2475, 0.0
        %v2497 = vsel %vm493, %v2460, 0.0
        %v2498 = vsel %vm494, %v2476, 0.0
        %v2499 = vsel %vm493, %v2461, 0.0
        %v2500 = vsel %vm494, %v2477, 0.0
        %v2501 = vsel %vm493, %v2462, 0.0
        %v2502 = vsel %vm494, %v2478, 0.0
        %v2503 = vsel %vm493, %v2463, 0.0
        %v2504 = vsel %vm494, %v2479, 0.0
        %v2505 = vsel %vm493, %v2464, 0.0
        %v2506 = vsel %vm494, %v2480, 0.0
        %v2507 = vsel %vm493, %v2465, 0.0
        %v2508 = vsel %vm494, %v2481, 0.0
        %v2509 = vsel %vm493, %v2466, 0.0
        %v2510 = vsel %vm494, %v2482, 0.0
        %v2511 = vsel %vm493, %v2467, 0.0
        %v2512 = vsel %vm494, %v2483, 0.0
        %v2513 = vsel %vm493, %v2468, 0.0
        %v2514 = vsel %vm494, %v2484, 0.0
        %v2515 = vsel %vm493, %v2469, 0.0
        %v2516 = vsel %vm494, %v2485, 0.0
        %v2517 = vsel %vm493, %v2470, 0.0
        %v2518 = vsel %vm494, %v2486, 0.0
        %v2519 = vpack.c.bf16 %v2392, %v2391
        %v2520 = vpack.c.bf16 %v2296, %v2295
        %v2521 = vpack.c.bf16 %v2488, %v2487
        %v2522 = vpack.c.bf16 %v2394, %v2393
        %v2523 = vpack.c.bf16 %v2298, %v2297
        %v2524 = vpack.c.bf16 %v2490, %v2489
        %v2525 = vpack.c.bf16 %v2396, %v2395
        %v2526 = vpack.c.bf16 %v2300, %v2299
        %v2527 = vpack.c.bf16 %v2492, %v2491
        %v2528 = vpack.c.bf16 %v2398, %v2397
        %v2529 = vpack.c.bf16 %v2302, %v2301
        %v2530 = vpack.c.bf16 %v2494, %v2493
        %v2531 = vpack.c.bf16 %v2400, %v2399
        %v2532 = vpack.c.bf16 %v2304, %v2303
        %v2533 = vpack.c.bf16 %v2496, %v2495
        %v2534 = vpack.c.bf16 %v2402, %v2401
        %v2535 = vpack.c.bf16 %v2306, %v2305
        %v2536 = vpack.c.bf16 %v2498, %v2497
        %v2537 = vpack.c.bf16 %v2404, %v2403
        %v2538 = vpack.c.bf16 %v2308, %v2307
        %v2539 = vpack.c.bf16 %v2500, %v2499
        %v2540 = vpack.c.bf16 %v2406, %v2405
        %v2541 = vpack.c.bf16 %v2310, %v2309
        %v2542 = vpack.c.bf16 %v2502, %v2501
        %v2543 = vpack.c.bf16 %v2408, %v2407
        %v2544 = vpack.c.bf16 %v2312, %v2311
        %v2545 = vpack.c.bf16 %v2504, %v2503
        %v2546 = vpack.c.bf16 %v2410, %v2409
        %v2547 = vpack.c.bf16 %v2314, %v2313
        %v2548 = vpack.c.bf16 %v2506, %v2505
        %v2549 = vpack.c.bf16 %v2412, %v2411
        %v2550 = vpack.c.bf16 %v2316, %v2315
        %v2551 = vpack.c.bf16 %v2508, %v2507
        %v2552 = vpack.c.bf16 %v2414, %v2413
        %v2553 = vpack.c.bf16 %v2318, %v2317
        %v2554 = vpack.c.bf16 %v2510, %v2509
        %v2555 = vpack.c.bf16 %v2416, %v2415
        %v2556 = vpack.c.bf16 %v2320, %v2319
        %v2557 = vpack.c.bf16 %v2512, %v2511
        %v2558 = vpack.c.bf16 %v2418, %v2417
        %v2559 = vpack.c.bf16 %v2322, %v2321
        %v2560 = vpack.c.bf16 %v2514, %v2513
        %v2561 = vpack.c.bf16 %v2420, %v2419
        %v2562 = vpack.c.bf16 %v2324, %v2323
        %v2563 = vpack.c.bf16 %v2516, %v2515
        %v2564 = vld [vmem:[#allocation7] sm:$0xf]
        %v2565 = vld [vmem:[#allocation7 + $0x4] sm:$0xf]
        %v2566 = vld [vmem:[#allocation7 + $0x8] sm:$0xf]
        %v2567 = vld [vmem:[#allocation7 + $0xc] sm:$0xf]
        %v2568 = vld [vmem:[#allocation7 + $0x10] sm:$0xf]
        %v2569 = vld [vmem:[#allocation7 + $0x14] sm:$0xf]
        %v2570 = vld [vmem:[#allocation7 + $0x18] sm:$0xf]
        %v2571 = vld [vmem:[#allocation7 + $0x1c] sm:$0xf]
        %v2572 = vld [vmem:[#allocation7 + $0x20] sm:$0xf]
        %v2573 = vld [vmem:[#allocation7 + $0x24] sm:$0xf]
        %v2574 = vld [vmem:[#allocation7 + $0x28] sm:$0xf]
        %v2575 = vld [vmem:[#allocation7 + $0x2c] sm:$0xf]
        %v2576 = vld [vmem:[#allocation7 + $0x30] sm:$0xf]
        %v2577 = vld [vmem:[#allocation7 + $0x34] sm:$0xf]
        %v2578 = vld [vmem:[#allocation7 + $0x38] sm:$0xf]
        %v2579 = vld [vmem:[#allocation7 + $0x3c] sm:$0xf]
        %v2580 = vld [vmem:[#allocation7 + $0x40] sm:$0xf]
        %v2581 = vld [vmem:[#allocation7 + $0x44] sm:$0xf]
        %v2582 = vld [vmem:[#allocation7 + $0x48] sm:$0xf]
        %v2583 = vld [vmem:[#allocation7 + $0x4c] sm:$0xf]
        %v2584 = vld [vmem:[#allocation7 + $0x50] sm:$0xf]
        %v2585 = vld [vmem:[#allocation7 + $0x54] sm:$0xf]
        %v2586 = vld [vmem:[#allocation7 + $0x58] sm:$0xf]
        %v2587 = vld [vmem:[#allocation7 + $0x5c] sm:$0xf]
        %v2588 = vld [vmem:[#allocation7 + $0x60] sm:$0xf]
        %v2589 = vld [vmem:[#allocation7 + $0x64] sm:$0xf]
        %v2590 = vld [vmem:[#allocation7 + $0x68] sm:$0xf]
        %v2591 = vld [vmem:[#allocation7 + $0x6c] sm:$0xf]
        %v2592 = vld [vmem:[#allocation7 + $0x70] sm:$0xf]
        %v2593 = vld [vmem:[#allocation7 + $0x74] sm:$0xf]
        %v2594 = vld [vmem:[#allocation7 + $0x78] sm:$0xf]
        %v2595 = vld [vmem:[#allocation7 + $0x7c] sm:$0xf]
        %v2596 = vld [vmem:[#allocation7 + $0x80] sm:$0xf]
        %v2597 = vld [vmem:[#allocation7 + $0x84] sm:$0xf]
        %v2598 = vld [vmem:[#allocation7 + $0x88] sm:$0xf]
        %v2599 = vld [vmem:[#allocation7 + $0x8c] sm:$0xf]
        %v2600 = vld [vmem:[#allocation7 + $0x90] sm:$0xf]
        %v2601 = vld [vmem:[#allocation7 + $0x94] sm:$0xf]
        %v2602 = vld [vmem:[#allocation7 + $0x98] sm:$0xf]
        %v2603 = vld [vmem:[#allocation7 + $0x9c] sm:$0xf]
        %v2604 = vld [vmem:[#allocation7 + $0xa0] sm:$0xf]
        %v2605 = vld [vmem:[#allocation7 + $0xa4] sm:$0xf]
        %v2606 = vld [vmem:[#allocation7 + $0xa8] sm:$0xf]
        %v2607 = vld [vmem:[#allocation7 + $0xac] sm:$0xf]
        %v2608 = vld [vmem:[#allocation7 + $0xb0] sm:$0xf]
        %v2609 = vld [vmem:[#allocation7 + $0xb4] sm:$0xf]
        %v2610 = vld [vmem:[#allocation7 + $0xb8] sm:$0xf]
        %v2611 = vld [vmem:[#allocation7 + $0xbc] sm:$0xf]
        %v2612 = vpack.c.bf16 %v2422, %v2421
        %v2613 = vpack.c.bf16 %v2326, %v2325
        %v2614 = vpack.c.bf16 %v2518, %v2517
        %s2615 = scalar_lea.vmem [#allocation7], 192
        %v2616 = vld [vmem:[%s2615] sm:$0xf]
        %v2617 = vld [vmem:[%s2615 + $0x4] sm:$0xf]
        %v2618 = vld [vmem:[%s2615 + $0x8] sm:$0xf]
        %v2619 = vld [vmem:[%s2615 + $0xc] sm:$0xf]
        %v2620 = vld [vmem:[%s2615 + $0x10] sm:$0xf]
        %v2621 = vld [vmem:[%s2615 + $0x14] sm:$0xf]
        %v2622 = vld [vmem:[%s2615 + $0x18] sm:$0xf]
        %v2623 = vld [vmem:[%s2615 + $0x1c] sm:$0xf]
        %v2624 = vld [vmem:[%s2615 + $0x20] sm:$0xf]
        %v2625 = vld [vmem:[%s2615 + $0x24] sm:$0xf]
        %v2626 = vld [vmem:[%s2615 + $0x28] sm:$0xf]
        %v2627 = vld [vmem:[%s2615 + $0x2c] sm:$0xf]
        %v2628 = vld [vmem:[%s2615 + $0x30] sm:$0xf]
        %v2629 = vld [vmem:[%s2615 + $0x34] sm:$0xf]
        %v2630 = vld [vmem:[%s2615 + $0x38] sm:$0xf]
        %v2631 = vld [vmem:[%s2615 + $0x3c] sm:$0xf]
        %v2632 = vld [vmem:[%s2615 + $0x40] sm:$0xf]
        %v2633 = vld [vmem:[%s2615 + $0x44] sm:$0xf]
        %v2634 = vld [vmem:[%s2615 + $0x48] sm:$0xf]
        %v2635 = vld [vmem:[%s2615 + $0x4c] sm:$0xf]
        %v2636 = vld [vmem:[%s2615 + $0x50] sm:$0xf]
        %v2637 = vld [vmem:[%s2615 + $0x54] sm:$0xf]
        %v2638 = vld [vmem:[%s2615 + $0x58] sm:$0xf]
        %v2639 = vld [vmem:[%s2615 + $0x5c] sm:$0xf]
        %v2640 = vld [vmem:[%s2615 + $0x60] sm:$0xf]
        %v2641 = vld [vmem:[%s2615 + $0x64] sm:$0xf]
        %v2642 = vld [vmem:[%s2615 + $0x68] sm:$0xf]
        %v2643 = vld [vmem:[%s2615 + $0x6c] sm:$0xf]
        %v2644 = vld [vmem:[%s2615 + $0x70] sm:$0xf]
        %v2645 = vld [vmem:[%s2615 + $0x74] sm:$0xf]
        %v2646 = vld [vmem:[%s2615 + $0x78] sm:$0xf]
        %v2647 = vld [vmem:[%s2615 + $0x7c] sm:$0xf]
        %v2648 = vld [vmem:[%s2615 + $0x80] sm:$0xf]
        %v2649 = vld [vmem:[%s2615 + $0x84] sm:$0xf]
        %v2650 = vld [vmem:[%s2615 + $0x88] sm:$0xf]
        %v2651 = vld [vmem:[%s2615 + $0x8c] sm:$0xf]
        %v2652 = vld [vmem:[%s2615 + $0x90] sm:$0xf]
        %v2653 = vld [vmem:[%s2615 + $0x94] sm:$0xf]
        %v2654 = vld [vmem:[%s2615 + $0x98] sm:$0xf]
        %v2655 = vld [vmem:[%s2615 + $0x9c] sm:$0xf]
        %v2656 = vld [vmem:[%s2615 + $0xa0] sm:$0xf]
        %v2657 = vld [vmem:[%s2615 + $0xa4] sm:$0xf]
        %v2658 = vld [vmem:[%s2615 + $0xa8] sm:$0xf]
        %v2659 = vld [vmem:[%s2615 + $0xac] sm:$0xf]
        %v2660 = vld [vmem:[%s2615 + $0xb0] sm:$0xf]
        %v2661 = vld [vmem:[%s2615 + $0xb4] sm:$0xf]
        %v2662 = vld [vmem:[%s2615 + $0xb8] sm:$0xf]
        %v2663 = vld [vmem:[%s2615 + $0xbc] sm:$0xf]
        %v2712 = vunpack.c.l.b16 %v2616
        %v2713 = vunpack.c.l.b16 %v2617
        %v2714 = vunpack.c.l.b16 %v2618
        %v2715 = vunpack.c.l.b16 %v2619
        %v2716 = vunpack.c.l.b16 %v2620
        %v2717 = vunpack.c.l.b16 %v2621
        %v2718 = vunpack.c.l.b16 %v2622
        %v2719 = vunpack.c.l.b16 %v2623
        %v2720 = vunpack.c.l.b16 %v2624
        %v2721 = vunpack.c.l.b16 %v2625
        %v2722 = vunpack.c.l.b16 %v2626
        %v2723 = vunpack.c.l.b16 %v2627
        %v2724 = vunpack.c.l.b16 %v2628
        %v2725 = vunpack.c.l.b16 %v2629
        %v2726 = vunpack.c.l.b16 %v2630
        %v2727 = vunpack.c.l.b16 %v2631
        %v2728 = vunpack.c.l.b16 %v2632
        %v2729 = vunpack.c.l.b16 %v2633
        %v2730 = vunpack.c.l.b16 %v2634
        %v2731 = vunpack.c.l.b16 %v2635
        %v2732 = vunpack.c.l.b16 %v2636
        %v2733 = vunpack.c.l.b16 %v2637
        %v2734 = vunpack.c.l.b16 %v2638
        %v2735 = vunpack.c.l.b16 %v2639
        %v2736 = vunpack.c.l.b16 %v2640
        %v2737 = vunpack.c.l.b16 %v2641
        %v2738 = vunpack.c.l.b16 %v2642
        %v2739 = vunpack.c.l.b16 %v2643
        %v2740 = vunpack.c.l.b16 %v2644
        %v2741 = vunpack.c.l.b16 %v2645
        %v2742 = vunpack.c.l.b16 %v2646
        %v2743 = vunpack.c.l.b16 %v2647
        %v2744 = vunpack.c.l.b16 %v2648
        %v2745 = vunpack.c.l.b16 %v2649
        %v2746 = vunpack.c.l.b16 %v2650
        %v2747 = vunpack.c.l.b16 %v2651
        %v2748 = vunpack.c.l.b16 %v2652
        %v2749 = vunpack.c.l.b16 %v2653
        %v2750 = vunpack.c.l.b16 %v2654
        %v2751 = vunpack.c.l.b16 %v2655
        %v2752 = vunpack.c.l.b16 %v2656
        %v2753 = vunpack.c.l.b16 %v2657
        %v2754 = vunpack.c.l.b16 %v2658
        %v2755 = vunpack.c.l.b16 %v2659
        %v2756 = vunpack.c.l.b16 %v2660
        %v2757 = vunpack.c.l.b16 %v2661
        %v2758 = vunpack.c.l.b16 %v2662
        %v2759 = vunpack.c.l.b16 %v2663
        %v2760 = vpack.c.b16 %v2713, %v2712
        %v2761 = vpack.c.b16 %v2715, %v2714
        %v2762 = vpack.c.b16 %v2717, %v2716
        %v2763 = vpack.c.b16 %v2719, %v2718
        %v2764 = vpack.c.b16 %v2721, %v2720
        %v2765 = vpack.c.b16 %v2723, %v2722
        %v2766 = vpack.c.b16 %v2725, %v2724
        %v2767 = vpack.c.b16 %v2727, %v2726
        %v2768 = vpack.c.b16 %v2729, %v2728
        %v2769 = vpack.c.b16 %v2731, %v2730
        %v2770 = vpack.c.b16 %v2733, %v2732
        %v2771 = vpack.c.b16 %v2735, %v2734
        %v2772 = vpack.c.b16 %v2737, %v2736
        %v2773 = vpack.c.b16 %v2739, %v2738
        %v2774 = vpack.c.b16 %v2741, %v2740
        %v2775 = vpack.c.b16 %v2743, %v2742
        %v2776 = vpack.c.b16 %v2745, %v2744
        %v2777 = vpack.c.b16 %v2747, %v2746
        %v2778 = vpack.c.b16 %v2749, %v2748
        %v2779 = vpack.c.b16 %v2751, %v2750
        %v2780 = vpack.c.b16 %v2753, %v2752
        %v2781 = vpack.c.b16 %v2755, %v2754
        %v2782 = vpack.c.b16 %v2757, %v2756
        %v2783 = vpack.c.b16 %v2759, %v2758
        %2808 = vmatprep.subr.bf16.mxu0 0
        %2809 = vmatpush1.bf16.msra.mxu0 %v2767
        %2810 = vmatprep.subr.bf16.mxu0 0
        %2811 = vmatpush1.bf16.msra.mxu0 %v2766
        %2812 = vmatprep.subr.bf16.mxu0 0
        %2813 = vmatpush1.bf16.msra.mxu0 %v2765
        %2814 = vmatprep.subr.bf16.mxu0 0
        %2815 = vmatpush1.bf16.msra.mxu0 %v2764
        %2816 = vmatprep.subr.bf16.mxu0 0
        %2817 = vmatpush1.bf16.msra.mxu0 %v2763
        %2818 = vmatprep.subr.bf16.mxu0 0
        %2819 = vmatpush1.bf16.msra.mxu0 %v2762
        %2820 = vmatprep.subr.bf16.mxu0 0
        %2821 = vmatpush1.bf16.msra.mxu0 %v2761
        %2822 = vmatprep.subr.bf16.mxu0 0
        %2823 = vmatpush1.bf16.msra.mxu0 %v2760
        %2824 = vmatprep.subr.bf16.mxu0 0
        %2825 = vmatpush2.bf16.msra.mxu0 %v2775
        %2826 = vmatprep.subr.bf16.mxu0 0
        %2827 = vmatpush2.bf16.msra.mxu0 %v2774
        %2828 = vmatprep.subr.bf16.mxu0 0
        %2829 = vmatpush2.bf16.msra.mxu0 %v2773
        %2830 = vmatprep.subr.bf16.mxu0 0
        %2831 = vmatpush2.bf16.msra.mxu0 %v2772
        %2832 = vmatprep.subr.bf16.mxu0 0
        %2833 = vmatpush2.bf16.msra.mxu0 %v2771
        %2834 = vmatprep.subr.bf16.mxu0 0
        %2835 = vmatpush2.bf16.msra.mxu0 %v2770
        %2836 = vmatprep.subr.bf16.mxu0 0
        %2837 = vmatpush2.bf16.msra.mxu0 %v2769
        %2838 = vmatprep.subr.bf16.mxu0 0
        %2839 = vmatpush2.bf16.msra.mxu0 %v2768
        %2840 = vmatprep.mubr.bf16.mxu0 %v2520
        %2841 = vmatmul.mubr.bf16.gmra.mxu0 %v2519
        %v2842 = vpop.f32.mrf.mxu0
        %v2843 = vadd.f32 0.0, %v2842
        %v2844 = vpop.f32.mrf.mxu0
        %v2845 = vpop.f32.mrf.mxu0
        %v2846 = vadd.f32 0.0, %v2845
        %v2847 = vpop.f32.mrf.mxu0
        %2848 = vmatprep.mubr.bf16.mxu0 %v2523
        %2849 = vmatmul.mubr.bf16.gmra.mxu0 %v2522
        %v2850 = vpop.f32.mrf.mxu0
        %v2851 = vadd.f32 0.0, %v2850
        %v2852 = vpop.f32.mrf.mxu0
        %v2853 = vpop.f32.mrf.mxu0
        %v2854 = vadd.f32 0.0, %v2853
        %v2855 = vpop.f32.mrf.mxu0
        %2856 = vmatprep.mubr.bf16.mxu0 %v2526
        %2857 = vmatmul.mubr.bf16.gmra.mxu0 %v2525
        %v2858 = vpop.f32.mrf.mxu0
        %v2859 = vadd.f32 0.0, %v2858
        %v2860 = vpop.f32.mrf.mxu0
        %v2861 = vpop.f32.mrf.mxu0
        %v2862 = vadd.f32 0.0, %v2861
        %v2863 = vpop.f32.mrf.mxu0
        %2864 = vmatprep.mubr.bf16.mxu0 %v2529
        %2865 = vmatmul.mubr.bf16.gmra.mxu0 %v2528
        %v2866 = vpop.f32.mrf.mxu0
        %v2867 = vadd.f32 0.0, %v2866
        %v2868 = vpop.f32.mrf.mxu0
        %v2869 = vpop.f32.mrf.mxu0
        %v2870 = vadd.f32 0.0, %v2869
        %v2871 = vpop.f32.mrf.mxu0
        %2872 = vmatprep.mubr.bf16.mxu0 %v2532
        %2873 = vmatmul.mubr.bf16.gmra.mxu0 %v2531
        %v2874 = vpop.f32.mrf.mxu0
        %v2875 = vadd.f32 0.0, %v2874
        %v2876 = vpop.f32.mrf.mxu0
        %v2877 = vpop.f32.mrf.mxu0
        %v2878 = vadd.f32 0.0, %v2877
        %v2879 = vpop.f32.mrf.mxu0
        %2880 = vmatprep.mubr.bf16.mxu0 %v2535
        %2881 = vmatmul.mubr.bf16.gmra.mxu0 %v2534
        %v2882 = vpop.f32.mrf.mxu0
        %v2883 = vadd.f32 0.0, %v2882
        %v2884 = vpop.f32.mrf.mxu0
        %v2885 = vpop.f32.mrf.mxu0
        %v2886 = vadd.f32 0.0, %v2885
        %v2887 = vpop.f32.mrf.mxu0
        %2888 = vmatprep.mubr.bf16.mxu0 %v2538
        %2889 = vmatmul.mubr.bf16.gmra.mxu0 %v2537
        %v2890 = vpop.f32.mrf.mxu0
        %v2891 = vadd.f32 0.0, %v2890
        %v2892 = vpop.f32.mrf.mxu0
        %v2893 = vpop.f32.mrf.mxu0
        %v2894 = vadd.f32 0.0, %v2893
        %v2895 = vpop.f32.mrf.mxu0
        %2896 = vmatprep.mubr.bf16.mxu0 %v2541
        %2897 = vmatmul.mubr.bf16.gmra.mxu0 %v2540
        %v2898 = vpop.f32.mrf.mxu0
        %v2899 = vadd.f32 0.0, %v2898
        %v2900 = vpop.f32.mrf.mxu0
        %v2901 = vpop.f32.mrf.mxu0
        %v2902 = vadd.f32 0.0, %v2901
        %v2903 = vpop.f32.mrf.mxu0
        %2904 = vmatprep.mubr.bf16.mxu0 %v2544
        %2905 = vmatmul.mubr.bf16.gmra.mxu0 %v2543
        %v2906 = vpop.f32.mrf.mxu0
        %v2907 = vadd.f32 0.0, %v2906
        %v2908 = vpop.f32.mrf.mxu0
        %v2909 = vpop.f32.mrf.mxu0
        %v2910 = vadd.f32 0.0, %v2909
        %v2911 = vpop.f32.mrf.mxu0
        %2912 = vmatprep.mubr.bf16.mxu0 %v2547
        %2913 = vmatmul.mubr.bf16.gmra.mxu0 %v2546
        %v2914 = vpop.f32.mrf.mxu0
        %v2915 = vadd.f32 0.0, %v2914
        %v2916 = vpop.f32.mrf.mxu0
        %v2917 = vpop.f32.mrf.mxu0
        %v2918 = vadd.f32 0.0, %v2917
        %v2919 = vpop.f32.mrf.mxu0
        %2920 = vmatprep.mubr.bf16.mxu0 %v2550
        %2921 = vmatmul.mubr.bf16.gmra.mxu0 %v2549
        %v2922 = vpop.f32.mrf.mxu0
        %v2923 = vadd.f32 0.0, %v2922
        %v2924 = vpop.f32.mrf.mxu0
        %v2925 = vpop.f32.mrf.mxu0
        %v2926 = vadd.f32 0.0, %v2925
        %v2927 = vpop.f32.mrf.mxu0
        %2928 = vmatprep.mubr.bf16.mxu0 %v2553
        %2929 = vmatmul.mubr.bf16.gmra.mxu0 %v2552
        %v2930 = vpop.f32.mrf.mxu0
        %v2931 = vadd.f32 0.0, %v2930
        %v2932 = vpop.f32.mrf.mxu0
        %v2933 = vpop.f32.mrf.mxu0
        %v2934 = vadd.f32 0.0, %v2933
        %v2935 = vpop.f32.mrf.mxu0
        %2936 = vmatprep.mubr.bf16.mxu0 %v2556
        %2937 = vmatmul.mubr.bf16.gmra.mxu0 %v2555
        %v2938 = vpop.f32.mrf.mxu0
        %v2939 = vadd.f32 0.0, %v2938
        %v2940 = vpop.f32.mrf.mxu0
        %v2941 = vpop.f32.mrf.mxu0
        %v2942 = vadd.f32 0.0, %v2941
        %v2943 = vpop.f32.mrf.mxu0
        %2944 = vmatprep.mubr.bf16.mxu0 %v2559
        %2945 = vmatmul.mubr.bf16.gmra.mxu0 %v2558
        %v2946 = vpop.f32.mrf.mxu0
        %v2947 = vadd.f32 0.0, %v2946
        %v2948 = vpop.f32.mrf.mxu0
        %v2949 = vpop.f32.mrf.mxu0
        %v2950 = vadd.f32 0.0, %v2949
        %v2951 = vpop.f32.mrf.mxu0
        %2952 = vmatprep.mubr.bf16.mxu0 %v2562
        %2953 = vmatmul.mubr.bf16.gmra.mxu0 %v2561
        %v2954 = vpop.f32.mrf.mxu0
        %v2955 = vadd.f32 0.0, %v2954
        %v2956 = vpop.f32.mrf.mxu0
        %v2957 = vpop.f32.mrf.mxu0
        %v2958 = vadd.f32 0.0, %v2957
        %v2959 = vpop.f32.mrf.mxu0
        %2960 = vmatprep.mubr.bf16.mxu0 %v2613
        %2961 = vmatmul.mubr.bf16.gmra.mxu0 %v2612
        %v2962 = vpop.f32.mrf.mxu0
        %v2963 = vadd.f32 0.0, %v2962
        %v2964 = vpop.f32.mrf.mxu0
        %v2965 = vpop.f32.mrf.mxu0
        %v2966 = vadd.f32 0.0, %v2965
        %v2967 = vpop.f32.mrf.mxu0
        %2968 = vdwg.mxu0
        %2969 = vmatprep.subr.bf16.mxu0 0
        %2970 = vmatpush1.bf16.msra.mxu0 %v2783
        %2971 = vmatprep.subr.bf16.mxu0 0
        %2972 = vmatpush1.bf16.msra.mxu0 %v2782
        %2973 = vmatprep.subr.bf16.mxu0 0
        %2974 = vmatpush1.bf16.msra.mxu0 %v2781
        %2975 = vmatprep.subr.bf16.mxu0 0
        %2976 = vmatpush1.bf16.msra.mxu0 %v2780
        %2977 = vmatprep.subr.bf16.mxu0 0
        %2978 = vmatpush1.bf16.msra.mxu0 %v2779
        %2979 = vmatprep.subr.bf16.mxu0 0
        %2980 = vmatpush1.bf16.msra.mxu0 %v2778
        %2981 = vmatprep.subr.bf16.mxu0 0
        %2982 = vmatpush1.bf16.msra.mxu0 %v2777
        %2983 = vmatprep.subr.bf16.mxu0 0
        %2984 = vmatpush1.bf16.msra.mxu0 %v2776
        %2985 = vmatprep.subr.bf16.mxu0 0
        %2986 = vmatpush2.bf16.msra.mxu0 0
        %2987 = vmatprep.subr.bf16.mxu0 0
        %2988 = vmatpush2.bf16.msra.mxu0 0
        %2989 = vmatprep.subr.bf16.mxu0 0
        %2990 = vmatpush2.bf16.msra.mxu0 0
        %2991 = vmatprep.subr.bf16.mxu0 0
        %2992 = vmatpush2.bf16.msra.mxu0 0
        %2993 = vmatprep.subr.bf16.mxu0 0
        %2994 = vmatpush2.bf16.msra.mxu0 0
        %2995 = vmatprep.subr.bf16.mxu0 0
        %2996 = vmatpush2.bf16.msra.mxu0 0
        %2997 = vmatprep.subr.bf16.mxu0 0
        %2998 = vmatpush2.bf16.msra.mxu0 0
        %2999 = vmatprep.subr.bf16.mxu0 0
        %3000 = vmatpush2.bf16.msra.mxu0 0
        %3001 = vmatprep.mubr.bf16.mxu0 0
        %3002 = vmatmul.mubr.bf16.gmra.mxu0 %v2521
        %v3003 = vpop.f32.mrf.mxu0
        %v3004 = vadd.f32 %v2843, %v3003
        %v3005 = vpop.f32.mrf.mxu0
        %v3006 = vpop.f32.mrf.mxu0
        %v3007 = vadd.f32 %v2846, %v3006
        %v3008 = vpop.f32.mrf.mxu0
        %3009 = vmatprep.mubr.bf16.mxu0 0
        %3010 = vmatmul.mubr.bf16.gmra.mxu0 %v2524
        %v3011 = vpop.f32.mrf.mxu0
        %v3012 = vadd.f32 %v2851, %v3011
        %v3013 = vpop.f32.mrf.mxu0
        %v3014 = vpop.f32.mrf.mxu0
        %v3015 = vadd.f32 %v2854, %v3014
        %v3016 = vpop.f32.mrf.mxu0
        %3017 = vmatprep.mubr.bf16.mxu0 0
        %3018 = vmatmul.mubr.bf16.gmra.mxu0 %v2527
        %v3019 = vpop.f32.mrf.mxu0
        %v3020 = vadd.f32 %v2859, %v3019
        %v3021 = vpop.f32.mrf.mxu0
        %v3022 = vpop.f32.mrf.mxu0
        %v3023 = vadd.f32 %v2862, %v3022
        %v3024 = vpop.f32.mrf.mxu0
        %3025 = vmatprep.mubr.bf16.mxu0 0
        %3026 = vmatmul.mubr.bf16.gmra.mxu0 %v2530
        %v3027 = vpop.f32.mrf.mxu0
        %v3028 = vadd.f32 %v2867, %v3027
        %v3029 = vpop.f32.mrf.mxu0
        %v3030 = vpop.f32.mrf.mxu0
        %v3031 = vadd.f32 %v2870, %v3030
        %v3032 = vpop.f32.mrf.mxu0
        %3033 = vmatprep.mubr.bf16.mxu0 0
        %3034 = vmatmul.mubr.bf16.gmra.mxu0 %v2533
        %v3035 = vpop.f32.mrf.mxu0
        %v3036 = vadd.f32 %v2875, %v3035
        %v3037 = vpop.f32.mrf.mxu0
        %v3038 = vpop.f32.mrf.mxu0
        %v3039 = vadd.f32 %v2878, %v3038
        %v3040 = vpop.f32.mrf.mxu0
        %3041 = vmatprep.mubr.bf16.mxu0 0
        %3042 = vmatmul.mubr.bf16.gmra.mxu0 %v2536
        %v3043 = vpop.f32.mrf.mxu0
        %v3044 = vadd.f32 %v2883, %v3043
        %v3045 = vpop.f32.mrf.mxu0
        %v3046 = vpop.f32.mrf.mxu0
        %v3047 = vadd.f32 %v2886, %v3046
        %v3048 = vpop.f32.mrf.mxu0
        %3049 = vmatprep.mubr.bf16.mxu0 0
        %3050 = vmatmul.mubr.bf16.gmra.mxu0 %v2539
        %v3051 = vpop.f32.mrf.mxu0
        %v3052 = vadd.f32 %v2891, %v3051
        %v3053 = vpop.f32.mrf.mxu0
        %v3054 = vpop.f32.mrf.mxu0
        %v3055 = vadd.f32 %v2894, %v3054
        %v3056 = vpop.f32.mrf.mxu0
        %3057 = vmatprep.mubr.bf16.mxu0 0
        %3058 = vmatmul.mubr.bf16.gmra.mxu0 %v2542
        %v3059 = vpop.f32.mrf.mxu0
        %v3060 = vadd.f32 %v2899, %v3059
        %v3061 = vpop.f32.mrf.mxu0
        %v3062 = vpop.f32.mrf.mxu0
        %v3063 = vadd.f32 %v2902, %v3062
        %v3064 = vpop.f32.mrf.mxu0
        %3065 = vmatprep.mubr.bf16.mxu0 0
        %3066 = vmatmul.mubr.bf16.gmra.mxu0 %v2545
        %v3067 = vpop.f32.mrf.mxu0
        %v3068 = vadd.f32 %v2907, %v3067
        %v3069 = vpop.f32.mrf.mxu0
        %v3070 = vpop.f32.mrf.mxu0
        %v3071 = vadd.f32 %v2910, %v3070
        %v3072 = vpop.f32.mrf.mxu0
        %3073 = vmatprep.mubr.bf16.mxu0 0
        %3074 = vmatmul.mubr.bf16.gmra.mxu0 %v2548
        %v3075 = vpop.f32.mrf.mxu0
        %v3076 = vadd.f32 %v2915, %v3075
        %v3077 = vpop.f32.mrf.mxu0
        %v3078 = vpop.f32.mrf.mxu0
        %v3079 = vadd.f32 %v2918, %v3078
        %v3080 = vpop.f32.mrf.mxu0
        %3081 = vmatprep.mubr.bf16.mxu0 0
        %3082 = vmatmul.mubr.bf16.gmra.mxu0 %v2551
        %v3083 = vpop.f32.mrf.mxu0
        %v3084 = vadd.f32 %v2923, %v3083
        %v3085 = vpop.f32.mrf.mxu0
        %v3086 = vpop.f32.mrf.mxu0
        %v3087 = vadd.f32 %v2926, %v3086
        %v3088 = vpop.f32.mrf.mxu0
        %3089 = vmatprep.mubr.bf16.mxu0 0
        %3090 = vmatmul.mubr.bf16.gmra.mxu0 %v2554
        %v3091 = vpop.f32.mrf.mxu0
        %v3092 = vadd.f32 %v2931, %v3091
        %v3093 = vpop.f32.mrf.mxu0
        %v3094 = vpop.f32.mrf.mxu0
        %v3095 = vadd.f32 %v2934, %v3094
        %v3096 = vpop.f32.mrf.mxu0
        %3097 = vmatprep.mubr.bf16.mxu0 0
        %3098 = vmatmul.mubr.bf16.gmra.mxu0 %v2557
        %v3099 = vpop.f32.mrf.mxu0
        %v3100 = vadd.f32 %v2939, %v3099
        %v3101 = vpop.f32.mrf.mxu0
        %v3102 = vpop.f32.mrf.mxu0
        %v3103 = vadd.f32 %v2942, %v3102
        %v3104 = vpop.f32.mrf.mxu0
        %3105 = vmatprep.mubr.bf16.mxu0 0
        %3106 = vmatmul.mubr.bf16.gmra.mxu0 %v2560
        %v3107 = vpop.f32.mrf.mxu0
        %v3108 = vadd.f32 %v2947, %v3107
        %v3109 = vpop.f32.mrf.mxu0
        %v3110 = vpop.f32.mrf.mxu0
        %v3111 = vadd.f32 %v2950, %v3110
        %v3112 = vpop.f32.mrf.mxu0
        %3113 = vmatprep.mubr.bf16.mxu0 0
        %3114 = vmatmul.mubr.bf16.gmra.mxu0 %v2563
        %v3115 = vpop.f32.mrf.mxu0
        %v3116 = vadd.f32 %v2955, %v3115
        %v3117 = vpop.f32.mrf.mxu0
        %v3118 = vpop.f32.mrf.mxu0
        %v3119 = vadd.f32 %v2958, %v3118
        %v3120 = vpop.f32.mrf.mxu0
        %3121 = vmatprep.mubr.bf16.mxu0 0
        %3122 = vmatmul.mubr.bf16.gmra.mxu0 %v2614
        %v3123 = vpop.f32.mrf.mxu0
        %v3124 = vadd.f32 %v2963, %v3123
        %v3125 = vpop.f32.mrf.mxu0
        %v3126 = vpop.f32.mrf.mxu0
        %v3127 = vadd.f32 %v2966, %v3126
        %v3128 = vpop.f32.mrf.mxu0
        %3129 = vdwg.mxu0
        %v3178 = vunpack.c.l.b16 %v2564
        %v3179 = vunpack.c.l.b16 %v2565
        %v3180 = vunpack.c.l.b16 %v2566
        %v3181 = vunpack.c.l.b16 %v2567
        %v3182 = vunpack.c.l.b16 %v2568
        %v3183 = vunpack.c.l.b16 %v2569
        %v3184 = vunpack.c.l.b16 %v2570
        %v3185 = vunpack.c.l.b16 %v2571
        %v3186 = vunpack.c.l.b16 %v2572
        %v3187 = vunpack.c.l.b16 %v2573
        %v3188 = vunpack.c.l.b16 %v2574
        %v3189 = vunpack.c.l.b16 %v2575
        %v3190 = vunpack.c.l.b16 %v2576
        %v3191 = vunpack.c.l.b16 %v2577
        %v3192 = vunpack.c.l.b16 %v2578
        %v3193 = vunpack.c.l.b16 %v2579
        %v3194 = vunpack.c.l.b16 %v2580
        %v3195 = vunpack.c.l.b16 %v2581
        %v3196 = vunpack.c.l.b16 %v2582
        %v3197 = vunpack.c.l.b16 %v2583
        %v3198 = vunpack.c.l.b16 %v2584
        %v3199 = vunpack.c.l.b16 %v2585
        %v3200 = vunpack.c.l.b16 %v2586
        %v3201 = vunpack.c.l.b16 %v2587
        %v3202 = vunpack.c.l.b16 %v2588
        %v3203 = vunpack.c.l.b16 %v2589
        %v3204 = vunpack.c.l.b16 %v2590
        %v3205 = vunpack.c.l.b16 %v2591
        %v3206 = vunpack.c.l.b16 %v2592
        %v3207 = vunpack.c.l.b16 %v2593
        %v3208 = vunpack.c.l.b16 %v2594
        %v3209 = vunpack.c.l.b16 %v2595
        %v3210 = vunpack.c.l.b16 %v2596
        %v3211 = vunpack.c.l.b16 %v2597
        %v3212 = vunpack.c.l.b16 %v2598
        %v3213 = vunpack.c.l.b16 %v2599
        %v3214 = vunpack.c.l.b16 %v2600
        %v3215 = vunpack.c.l.b16 %v2601
        %v3216 = vunpack.c.l.b16 %v2602
        %v3217 = vunpack.c.l.b16 %v2603
        %v3218 = vunpack.c.l.b16 %v2604
        %v3219 = vunpack.c.l.b16 %v2605
        %v3220 = vunpack.c.l.b16 %v2606
        %v3221 = vunpack.c.l.b16 %v2607
        %v3222 = vunpack.c.l.b16 %v2608
        %v3223 = vunpack.c.l.b16 %v2609
        %v3224 = vunpack.c.l.b16 %v2610
        %v3225 = vunpack.c.l.b16 %v2611
        %v3226 = vpack.c.b16 %v3179, %v3178
        %v3227 = vpack.c.b16 %v3181, %v3180
        %v3228 = vpack.c.b16 %v3183, %v3182
        %v3229 = vpack.c.b16 %v3185, %v3184
        %v3230 = vpack.c.b16 %v3187, %v3186
        %v3231 = vpack.c.b16 %v3189, %v3188
        %v3232 = vpack.c.b16 %v3191, %v3190
        %v3233 = vpack.c.b16 %v3193, %v3192
        %v3234 = vpack.c.b16 %v3195, %v3194
        %v3235 = vpack.c.b16 %v3197, %v3196
        %v3236 = vpack.c.b16 %v3199, %v3198
        %v3237 = vpack.c.b16 %v3201, %v3200
        %v3238 = vpack.c.b16 %v3203, %v3202
        %v3239 = vpack.c.b16 %v3205, %v3204
        %v3240 = vpack.c.b16 %v3207, %v3206
        %v3241 = vpack.c.b16 %v3209, %v3208
        %v3242 = vpack.c.b16 %v3211, %v3210
        %v3243 = vpack.c.b16 %v3213, %v3212
        %v3244 = vpack.c.b16 %v3215, %v3214
        %v3245 = vpack.c.b16 %v3217, %v3216
        %v3246 = vpack.c.b16 %v3219, %v3218
        %v3247 = vpack.c.b16 %v3221, %v3220
        %v3248 = vpack.c.b16 %v3223, %v3222
        %v3249 = vpack.c.b16 %v3225, %v3224
        %3274 = vmatprep.subr.bf16.mxu0 0
        %3275 = vmatpush1.bf16.msra.mxu0 %v3233
        %3276 = vmatprep.subr.bf16.mxu0 0
        %3277 = vmatpush1.bf16.msra.mxu0 %v3232
        %3278 = vmatprep.subr.bf16.mxu0 0
        %3279 = vmatpush1.bf16.msra.mxu0 %v3231
        %3280 = vmatprep.subr.bf16.mxu0 0
        %3281 = vmatpush1.bf16.msra.mxu0 %v3230
        %3282 = vmatprep.subr.bf16.mxu0 0
        %3283 = vmatpush1.bf16.msra.mxu0 %v3229
        %3284 = vmatprep.subr.bf16.mxu0 0
        %3285 = vmatpush1.bf16.msra.mxu0 %v3228
        %3286 = vmatprep.subr.bf16.mxu0 0
        %3287 = vmatpush1.bf16.msra.mxu0 %v3227
        %3288 = vmatprep.subr.bf16.mxu0 0
        %3289 = vmatpush1.bf16.msra.mxu0 %v3226
        %3290 = vmatprep.subr.bf16.mxu0 0
        %3291 = vmatpush2.bf16.msra.mxu0 %v3241
        %3292 = vmatprep.subr.bf16.mxu0 0
        %3293 = vmatpush2.bf16.msra.mxu0 %v3240
        %3294 = vmatprep.subr.bf16.mxu0 0
        %3295 = vmatpush2.bf16.msra.mxu0 %v3239
        %3296 = vmatprep.subr.bf16.mxu0 0
        %3297 = vmatpush2.bf16.msra.mxu0 %v3238
        %3298 = vmatprep.subr.bf16.mxu0 0
        %3299 = vmatpush2.bf16.msra.mxu0 %v3237
        %3300 = vmatprep.subr.bf16.mxu0 0
        %3301 = vmatpush2.bf16.msra.mxu0 %v3236
        %3302 = vmatprep.subr.bf16.mxu0 0
        %3303 = vmatpush2.bf16.msra.mxu0 %v3235
        %3304 = vmatprep.subr.bf16.mxu0 0
        %3305 = vmatpush2.bf16.msra.mxu0 %v3234
        %3306 = vmatprep.mubr.bf16.mxu0 %v592
        %3307 = vmatmul.mubr.bf16.gmra.mxu0 %v592
        %v3308 = vpop.f32.mrf.mxu0
        %v3309 = vadd.f32 %v3004, %v3308
        %v3310 = vpop.f32.mrf.mxu0
        %v3311 = vpop.f32.mrf.mxu0
        %v3312 = vadd.f32 %v3007, %v3311
        %v3313 = vpop.f32.mrf.mxu0
        %3314 = vmatprep.mubr.bf16.mxu0 %v2520
        %3315 = vmatmul.mubr.bf16.gmra.mxu0 %v2519
        %v3316 = vpop.f32.mrf.mxu0
        %v3317 = vadd.f32 %v3012, %v3316
        %v3318 = vpop.f32.mrf.mxu0
        %v3319 = vpop.f32.mrf.mxu0
        %v3320 = vadd.f32 %v3015, %v3319
        %v3321 = vpop.f32.mrf.mxu0
        %3322 = vmatprep.mubr.bf16.mxu0 %v2523
        %3323 = vmatmul.mubr.bf16.gmra.mxu0 %v2522
        %v3324 = vpop.f32.mrf.mxu0
        %v3325 = vadd.f32 %v3020, %v3324
        %v3326 = vpop.f32.mrf.mxu0
        %v3327 = vpop.f32.mrf.mxu0
        %v3328 = vadd.f32 %v3023, %v3327
        %v3329 = vpop.f32.mrf.mxu0
        %3330 = vmatprep.mubr.bf16.mxu0 %v2526
        %3331 = vmatmul.mubr.bf16.gmra.mxu0 %v2525
        %v3332 = vpop.f32.mrf.mxu0
        %v3333 = vadd.f32 %v3028, %v3332
        %v3334 = vpop.f32.mrf.mxu0
        %v3335 = vpop.f32.mrf.mxu0
        %v3336 = vadd.f32 %v3031, %v3335
        %v3337 = vpop.f32.mrf.mxu0
        %3338 = vmatprep.mubr.bf16.mxu0 %v2529
        %3339 = vmatmul.mubr.bf16.gmra.mxu0 %v2528
        %v3340 = vpop.f32.mrf.mxu0
        %v3341 = vadd.f32 %v3036, %v3340
        %v3342 = vpop.f32.mrf.mxu0
        %v3343 = vpop.f32.mrf.mxu0
        %v3344 = vadd.f32 %v3039, %v3343
        %v3345 = vpop.f32.mrf.mxu0
        %3346 = vmatprep.mubr.bf16.mxu0 %v2532
        %3347 = vmatmul.mubr.bf16.gmra.mxu0 %v2531
        %v3348 = vpop.f32.mrf.mxu0
        %v3349 = vadd.f32 %v3044, %v3348
        %v3350 = vpop.f32.mrf.mxu0
        %v3351 = vpop.f32.mrf.mxu0
        %v3352 = vadd.f32 %v3047, %v3351
        %v3353 = vpop.f32.mrf.mxu0
        %3354 = vmatprep.mubr.bf16.mxu0 %v2535
        %3355 = vmatmul.mubr.bf16.gmra.mxu0 %v2534
        %v3356 = vpop.f32.mrf.mxu0
        %v3357 = vadd.f32 %v3052, %v3356
        %v3358 = vpop.f32.mrf.mxu0
        %v3359 = vpop.f32.mrf.mxu0
        %v3360 = vadd.f32 %v3055, %v3359
        %v3361 = vpop.f32.mrf.mxu0
        %3362 = vmatprep.mubr.bf16.mxu0 %v2538
        %3363 = vmatmul.mubr.bf16.gmra.mxu0 %v2537
        %v3364 = vpop.f32.mrf.mxu0
        %v3365 = vadd.f32 %v3060, %v3364
        %v3366 = vpop.f32.mrf.mxu0
        %v3367 = vpop.f32.mrf.mxu0
        %v3368 = vadd.f32 %v3063, %v3367
        %v3369 = vpop.f32.mrf.mxu0
        %3370 = vmatprep.mubr.bf16.mxu0 %v2541
        %3371 = vmatmul.mubr.bf16.gmra.mxu0 %v2540
        %v3372 = vpop.f32.mrf.mxu0
        %v3373 = vadd.f32 %v3068, %v3372
        %v3374 = vpop.f32.mrf.mxu0
        %v3375 = vpop.f32.mrf.mxu0
        %v3376 = vadd.f32 %v3071, %v3375
        %v3377 = vpop.f32.mrf.mxu0
        %3378 = vmatprep.mubr.bf16.mxu0 %v2544
        %3379 = vmatmul.mubr.bf16.gmra.mxu0 %v2543
        %v3380 = vpop.f32.mrf.mxu0
        %v3381 = vadd.f32 %v3076, %v3380
        %v3382 = vpop.f32.mrf.mxu0
        %v3383 = vpop.f32.mrf.mxu0
        %v3384 = vadd.f32 %v3079, %v3383
        %v3385 = vpop.f32.mrf.mxu0
        %3386 = vmatprep.mubr.bf16.mxu0 %v2547
        %3387 = vmatmul.mubr.bf16.gmra.mxu0 %v2546
        %v3388 = vpop.f32.mrf.mxu0
        %v3389 = vadd.f32 %v3084, %v3388
        %v3390 = vpop.f32.mrf.mxu0
        %v3391 = vpop.f32.mrf.mxu0
        %v3392 = vadd.f32 %v3087, %v3391
        %v3393 = vpop.f32.mrf.mxu0
        %3394 = vmatprep.mubr.bf16.mxu0 %v2550
        %3395 = vmatmul.mubr.bf16.gmra.mxu0 %v2549
        %v3396 = vpop.f32.mrf.mxu0
        %v3397 = vadd.f32 %v3092, %v3396
        %v3398 = vpop.f32.mrf.mxu0
        %v3399 = vpop.f32.mrf.mxu0
        %v3400 = vadd.f32 %v3095, %v3399
        %v3401 = vpop.f32.mrf.mxu0
        %3402 = vmatprep.mubr.bf16.mxu0 %v2553
        %3403 = vmatmul.mubr.bf16.gmra.mxu0 %v2552
        %v3404 = vpop.f32.mrf.mxu0
        %v3405 = vadd.f32 %v3100, %v3404
        %v3406 = vpop.f32.mrf.mxu0
        %v3407 = vpop.f32.mrf.mxu0
        %v3408 = vadd.f32 %v3103, %v3407
        %v3409 = vpop.f32.mrf.mxu0
        %3410 = vmatprep.mubr.bf16.mxu0 %v2556
        %3411 = vmatmul.mubr.bf16.gmra.mxu0 %v2555
        %v3412 = vpop.f32.mrf.mxu0
        %v3413 = vadd.f32 %v3108, %v3412
        %v3414 = vpop.f32.mrf.mxu0
        %v3415 = vpop.f32.mrf.mxu0
        %v3416 = vadd.f32 %v3111, %v3415
        %v3417 = vpop.f32.mrf.mxu0
        %3418 = vmatprep.mubr.bf16.mxu0 %v2559
        %3419 = vmatmul.mubr.bf16.gmra.mxu0 %v2558
        %v3420 = vpop.f32.mrf.mxu0
        %v3421 = vadd.f32 %v3116, %v3420
        %v3422 = vpop.f32.mrf.mxu0
        %v3423 = vpop.f32.mrf.mxu0
        %v3424 = vadd.f32 %v3119, %v3423
        %v3425 = vpop.f32.mrf.mxu0
        %3426 = vmatprep.mubr.bf16.mxu0 %v2562
        %3427 = vmatmul.mubr.bf16.gmra.mxu0 %v2561
        %v3428 = vpop.f32.mrf.mxu0
        %v3429 = vadd.f32 %v3124, %v3428
        %v3430 = vpop.f32.mrf.mxu0
        %v3431 = vpop.f32.mrf.mxu0
        %v3432 = vadd.f32 %v3127, %v3431
        %v3433 = vpop.f32.mrf.mxu0
        %3434 = vdwg.mxu0
        %3435 = vmatprep.subr.bf16.mxu0 0
        %3436 = vmatpush1.bf16.msra.mxu0 %v3249
        %3437 = vmatprep.subr.bf16.mxu0 0
        %3438 = vmatpush1.bf16.msra.mxu0 %v3248
        %3439 = vmatprep.subr.bf16.mxu0 0
        %3440 = vmatpush1.bf16.msra.mxu0 %v3247
        %3441 = vmatprep.subr.bf16.mxu0 0
        %3442 = vmatpush1.bf16.msra.mxu0 %v3246
        %3443 = vmatprep.subr.bf16.mxu0 0
        %3444 = vmatpush1.bf16.msra.mxu0 %v3245
        %3445 = vmatprep.subr.bf16.mxu0 0
        %3446 = vmatpush1.bf16.msra.mxu0 %v3244
        %3447 = vmatprep.subr.bf16.mxu0 0
        %3448 = vmatpush1.bf16.msra.mxu0 %v3243
        %3449 = vmatprep.subr.bf16.mxu0 0
        %3450 = vmatpush1.bf16.msra.mxu0 %v3242
        %3451 = vmatprep.subr.bf16.mxu0 0
        %3452 = vmatpush2.bf16.msra.mxu0 0
        %3453 = vmatprep.subr.bf16.mxu0 0
        %3454 = vmatpush2.bf16.msra.mxu0 0
        %3455 = vmatprep.subr.bf16.mxu0 0
        %3456 = vmatpush2.bf16.msra.mxu0 0
        %3457 = vmatprep.subr.bf16.mxu0 0
        %3458 = vmatpush2.bf16.msra.mxu0 0
        %3459 = vmatprep.subr.bf16.mxu0 0
        %3460 = vmatpush2.bf16.msra.mxu0 0
        %3461 = vmatprep.subr.bf16.mxu0 0
        %3462 = vmatpush2.bf16.msra.mxu0 0
        %3463 = vmatprep.subr.bf16.mxu0 0
        %3464 = vmatpush2.bf16.msra.mxu0 0
        %3465 = vmatprep.subr.bf16.mxu0 0
        %3466 = vmatpush2.bf16.msra.mxu0 0
        %3467 = vmatprep.mubr.bf16.mxu0 0
        %3468 = vmatmul.mubr.bf16.gmra.mxu0 %v592
        %v3469 = vpop.f32.mrf.mxu0
        %v3470 = vadd.f32 %v3309, %v3469
        %v3471 = vpop.f32.mrf.mxu0
        %v3472 = vpop.f32.mrf.mxu0
        %v3473 = vadd.f32 %v3312, %v3472
        %v3474 = vpop.f32.mrf.mxu0
        %3475 = vmatprep.mubr.bf16.mxu0 0
        %3476 = vmatmul.mubr.bf16.gmra.mxu0 %v2521
        %v3477 = vpop.f32.mrf.mxu0
        %v3478 = vadd.f32 %v3317, %v3477
        %v3479 = vpop.f32.mrf.mxu0
        %v3480 = vpop.f32.mrf.mxu0
        %v3481 = vadd.f32 %v3320, %v3480
        %v3482 = vpop.f32.mrf.mxu0
        %3483 = vmatprep.mubr.bf16.mxu0 0
        %3484 = vmatmul.mubr.bf16.gmra.mxu0 %v2524
        %v3485 = vpop.f32.mrf.mxu0
        %v3486 = vadd.f32 %v3325, %v3485
        %v3487 = vpop.f32.mrf.mxu0
        %v3488 = vpop.f32.mrf.mxu0
        %v3489 = vadd.f32 %v3328, %v3488
        %v3490 = vpop.f32.mrf.mxu0
        %3491 = vmatprep.mubr.bf16.mxu0 0
        %3492 = vmatmul.mubr.bf16.gmra.mxu0 %v2527
        %v3493 = vpop.f32.mrf.mxu0
        %v3494 = vadd.f32 %v3333, %v3493
        %v3495 = vpop.f32.mrf.mxu0
        %v3496 = vpop.f32.mrf.mxu0
        %v3497 = vadd.f32 %v3336, %v3496
        %v3498 = vpop.f32.mrf.mxu0
        %3499 = vmatprep.mubr.bf16.mxu0 0
        %3500 = vmatmul.mubr.bf16.gmra.mxu0 %v2530
        %v3501 = vpop.f32.mrf.mxu0
        %v3502 = vadd.f32 %v3341, %v3501
        %v3503 = vpop.f32.mrf.mxu0
        %v3504 = vpop.f32.mrf.mxu0
        %v3505 = vadd.f32 %v3344, %v3504
        %v3506 = vpop.f32.mrf.mxu0
        %3507 = vmatprep.mubr.bf16.mxu0 0
        %3508 = vmatmul.mubr.bf16.gmra.mxu0 %v2533
        %v3509 = vpop.f32.mrf.mxu0
        %v3510 = vadd.f32 %v3349, %v3509
        %v3511 = vpop.f32.mrf.mxu0
        %v3512 = vpop.f32.mrf.mxu0
        %v3513 = vadd.f32 %v3352, %v3512
        %v3514 = vpop.f32.mrf.mxu0
        %3515 = vmatprep.mubr.bf16.mxu0 0
        %3516 = vmatmul.mubr.bf16.gmra.mxu0 %v2536
        %v3517 = vpop.f32.mrf.mxu0
        %v3518 = vadd.f32 %v3357, %v3517
        %v3519 = vpop.f32.mrf.mxu0
        %v3520 = vpop.f32.mrf.mxu0
        %v3521 = vadd.f32 %v3360, %v3520
        %v3522 = vpop.f32.mrf.mxu0
        %3523 = vmatprep.mubr.bf16.mxu0 0
        %3524 = vmatmul.mubr.bf16.gmra.mxu0 %v2539
        %v3525 = vpop.f32.mrf.mxu0
        %v3526 = vadd.f32 %v3365, %v3525
        %v3527 = vpop.f32.mrf.mxu0
        %v3528 = vpop.f32.mrf.mxu0
        %v3529 = vadd.f32 %v3368, %v3528
        %v3530 = vpop.f32.mrf.mxu0
        %3531 = vmatprep.mubr.bf16.mxu0 0
        %3532 = vmatmul.mubr.bf16.gmra.mxu0 %v2542
        %v3533 = vpop.f32.mrf.mxu0
        %v3534 = vadd.f32 %v3373, %v3533
        %v3535 = vpop.f32.mrf.mxu0
        %v3536 = vpop.f32.mrf.mxu0
        %v3537 = vadd.f32 %v3376, %v3536
        %v3538 = vpop.f32.mrf.mxu0
        %3539 = vmatprep.mubr.bf16.mxu0 0
        %3540 = vmatmul.mubr.bf16.gmra.mxu0 %v2545
        %v3541 = vpop.f32.mrf.mxu0
        %v3542 = vadd.f32 %v3381, %v3541
        %v3543 = vpop.f32.mrf.mxu0
        %v3544 = vpop.f32.mrf.mxu0
        %v3545 = vadd.f32 %v3384, %v3544
        %v3546 = vpop.f32.mrf.mxu0
        %3547 = vmatprep.mubr.bf16.mxu0 0
        %3548 = vmatmul.mubr.bf16.gmra.mxu0 %v2548
        %v3549 = vpop.f32.mrf.mxu0
        %v3550 = vadd.f32 %v3389, %v3549
        %v3551 = vpop.f32.mrf.mxu0
        %v3552 = vpop.f32.mrf.mxu0
        %v3553 = vadd.f32 %v3392, %v3552
        %v3554 = vpop.f32.mrf.mxu0
        %3555 = vmatprep.mubr.bf16.mxu0 0
        %3556 = vmatmul.mubr.bf16.gmra.mxu0 %v2551
        %v3557 = vpop.f32.mrf.mxu0
        %v3558 = vadd.f32 %v3397, %v3557
        %v3559 = vpop.f32.mrf.mxu0
        %v3560 = vpop.f32.mrf.mxu0
        %v3561 = vadd.f32 %v3400, %v3560
        %v3562 = vpop.f32.mrf.mxu0
        %3563 = vmatprep.mubr.bf16.mxu0 0
        %3564 = vmatmul.mubr.bf16.gmra.mxu0 %v2554
        %v3565 = vpop.f32.mrf.mxu0
        %v3566 = vadd.f32 %v3405, %v3565
        %v3567 = vpop.f32.mrf.mxu0
        %v3568 = vpop.f32.mrf.mxu0
        %v3569 = vadd.f32 %v3408, %v3568
        %v3570 = vpop.f32.mrf.mxu0
        %3571 = vmatprep.mubr.bf16.mxu0 0
        %3572 = vmatmul.mubr.bf16.gmra.mxu0 %v2557
        %v3573 = vpop.f32.mrf.mxu0
        %v3574 = vadd.f32 %v3413, %v3573
        %v3575 = vpop.f32.mrf.mxu0
        %v3576 = vpop.f32.mrf.mxu0
        %v3577 = vadd.f32 %v3416, %v3576
        %v3578 = vpop.f32.mrf.mxu0
        %3579 = vmatprep.mubr.bf16.mxu0 0
        %3580 = vmatmul.mubr.bf16.gmra.mxu0 %v2560
        %v3581 = vpop.f32.mrf.mxu0
        %v3582 = vadd.f32 %v3421, %v3581
        %v3583 = vpop.f32.mrf.mxu0
        %v3584 = vpop.f32.mrf.mxu0
        %v3585 = vadd.f32 %v3424, %v3584
        %v3586 = vpop.f32.mrf.mxu0
        %3587 = vmatprep.mubr.bf16.mxu0 0
        %3588 = vmatmul.mubr.bf16.gmra.mxu0 %v2563
        %v3589 = vpop.f32.mrf.mxu0
        %v3590 = vadd.f32 %v3429, %v3589
        %v3591 = vpop.f32.mrf.mxu0
        %v3592 = vpop.f32.mrf.mxu0
        %v3593 = vadd.f32 %v3432, %v3592
        %v3594 = vpop.f32.mrf.mxu0
        %3595 = vdwg.mxu0
        %s3596 = scalar_lea.vmem [#allocation7], 384
        %v3597 = vld [vmem:[%s3596] sm:$0xf]
        %v3598 = vld [vmem:[%s3596 + $0x4] sm:$0xf]
        %v3599 = vld [vmem:[%s3596 + $0x8] sm:$0xf]
        %v3600 = vld [vmem:[%s3596 + $0xc] sm:$0xf]
        %v3601 = vld [vmem:[%s3596 + $0x10] sm:$0xf]
        %v3602 = vld [vmem:[%s3596 + $0x14] sm:$0xf]
        %v3603 = vld [vmem:[%s3596 + $0x18] sm:$0xf]
        %v3604 = vld [vmem:[%s3596 + $0x1c] sm:$0xf]
        %v3605 = vld [vmem:[%s3596 + $0x20] sm:$0xf]
        %v3606 = vld [vmem:[%s3596 + $0x24] sm:$0xf]
        %v3607 = vld [vmem:[%s3596 + $0x28] sm:$0xf]
        %v3608 = vld [vmem:[%s3596 + $0x2c] sm:$0xf]
        %v3609 = vld [vmem:[%s3596 + $0x30] sm:$0xf]
        %v3610 = vld [vmem:[%s3596 + $0x34] sm:$0xf]
        %v3611 = vld [vmem:[%s3596 + $0x38] sm:$0xf]
        %v3612 = vld [vmem:[%s3596 + $0x3c] sm:$0xf]
        %v3613 = vld [vmem:[%s3596 + $0x40] sm:$0xf]
        %v3614 = vld [vmem:[%s3596 + $0x44] sm:$0xf]
        %v3615 = vld [vmem:[%s3596 + $0x48] sm:$0xf]
        %v3616 = vld [vmem:[%s3596 + $0x4c] sm:$0xf]
        %v3617 = vld [vmem:[%s3596 + $0x50] sm:$0xf]
        %v3618 = vld [vmem:[%s3596 + $0x54] sm:$0xf]
        %v3619 = vld [vmem:[%s3596 + $0x58] sm:$0xf]
        %v3620 = vld [vmem:[%s3596 + $0x5c] sm:$0xf]
        %v3621 = vld [vmem:[%s3596 + $0x60] sm:$0xf]
        %v3622 = vld [vmem:[%s3596 + $0x64] sm:$0xf]
        %v3623 = vld [vmem:[%s3596 + $0x68] sm:$0xf]
        %v3624 = vld [vmem:[%s3596 + $0x6c] sm:$0xf]
        %v3625 = vld [vmem:[%s3596 + $0x70] sm:$0xf]
        %v3626 = vld [vmem:[%s3596 + $0x74] sm:$0xf]
        %v3627 = vld [vmem:[%s3596 + $0x78] sm:$0xf]
        %v3628 = vld [vmem:[%s3596 + $0x7c] sm:$0xf]
        %v3629 = vld [vmem:[%s3596 + $0x80] sm:$0xf]
        %v3630 = vld [vmem:[%s3596 + $0x84] sm:$0xf]
        %v3631 = vld [vmem:[%s3596 + $0x88] sm:$0xf]
        %v3632 = vld [vmem:[%s3596 + $0x8c] sm:$0xf]
        %v3633 = vld [vmem:[%s3596 + $0x90] sm:$0xf]
        %v3634 = vld [vmem:[%s3596 + $0x94] sm:$0xf]
        %v3635 = vld [vmem:[%s3596 + $0x98] sm:$0xf]
        %v3636 = vld [vmem:[%s3596 + $0x9c] sm:$0xf]
        %v3637 = vld [vmem:[%s3596 + $0xa0] sm:$0xf]
        %v3638 = vld [vmem:[%s3596 + $0xa4] sm:$0xf]
        %v3639 = vld [vmem:[%s3596 + $0xa8] sm:$0xf]
        %v3640 = vld [vmem:[%s3596 + $0xac] sm:$0xf]
        %v3641 = vld [vmem:[%s3596 + $0xb0] sm:$0xf]
        %v3642 = vld [vmem:[%s3596 + $0xb4] sm:$0xf]
        %v3643 = vld [vmem:[%s3596 + $0xb8] sm:$0xf]
        %v3644 = vld [vmem:[%s3596 + $0xbc] sm:$0xf]
        %v3693 = vunpack.c.l.b16 %v3597
        %v3694 = vunpack.c.l.b16 %v3598
        %v3695 = vunpack.c.l.b16 %v3599
        %v3696 = vunpack.c.l.b16 %v3600
        %v3697 = vunpack.c.l.b16 %v3601
        %v3698 = vunpack.c.l.b16 %v3602
        %v3699 = vunpack.c.l.b16 %v3603
        %v3700 = vunpack.c.l.b16 %v3604
        %v3701 = vunpack.c.l.b16 %v3605
        %v3702 = vunpack.c.l.b16 %v3606
        %v3703 = vunpack.c.l.b16 %v3607
        %v3704 = vunpack.c.l.b16 %v3608
        %v3705 = vunpack.c.l.b16 %v3609
        %v3706 = vunpack.c.l.b16 %v3610
        %v3707 = vunpack.c.l.b16 %v3611
        %v3708 = vunpack.c.l.b16 %v3612
        %v3709 = vunpack.c.l.b16 %v3613
        %v3710 = vunpack.c.l.b16 %v3614
        %v3711 = vunpack.c.l.b16 %v3615
        %v3712 = vunpack.c.l.b16 %v3616
        %v3713 = vunpack.c.l.b16 %v3617
        %v3714 = vunpack.c.l.b16 %v3618
        %v3715 = vunpack.c.l.b16 %v3619
        %v3716 = vunpack.c.l.b16 %v3620
        %v3717 = vunpack.c.l.b16 %v3621
        %v3718 = vunpack.c.l.b16 %v3622
        %v3719 = vunpack.c.l.b16 %v3623
        %v3720 = vunpack.c.l.b16 %v3624
        %v3721 = vunpack.c.l.b16 %v3625
        %v3722 = vunpack.c.l.b16 %v3626
        %v3723 = vunpack.c.l.b16 %v3627
        %v3724 = vunpack.c.l.b16 %v3628
        %v3725 = vunpack.c.l.b16 %v3629
        %v3726 = vunpack.c.l.b16 %v3630
        %v3727 = vunpack.c.l.b16 %v3631
        %v3728 = vunpack.c.l.b16 %v3632
        %v3729 = vunpack.c.l.b16 %v3633
        %v3730 = vunpack.c.l.b16 %v3634
        %v3731 = vunpack.c.l.b16 %v3635
        %v3732 = vunpack.c.l.b16 %v3636
        %v3733 = vunpack.c.l.b16 %v3637
        %v3734 = vunpack.c.l.b16 %v3638
        %v3735 = vunpack.c.l.b16 %v3639
        %v3736 = vunpack.c.l.b16 %v3640
        %v3737 = vunpack.c.l.b16 %v3641
        %v3738 = vunpack.c.l.b16 %v3642
        %v3739 = vunpack.c.l.b16 %v3643
        %v3740 = vunpack.c.l.b16 %v3644
        %v3741 = vpack.c.b16 %v3694, %v3693
        %v3742 = vpack.c.b16 %v3696, %v3695
        %v3743 = vpack.c.b16 %v3698, %v3697
        %v3744 = vpack.c.b16 %v3700, %v3699
        %v3745 = vpack.c.b16 %v3702, %v3701
        %v3746 = vpack.c.b16 %v3704, %v3703
        %v3747 = vpack.c.b16 %v3706, %v3705
        %v3748 = vpack.c.b16 %v3708, %v3707
        %v3749 = vpack.c.b16 %v3710, %v3709
        %v3750 = vpack.c.b16 %v3712, %v3711
        %v3751 = vpack.c.b16 %v3714, %v3713
        %v3752 = vpack.c.b16 %v3716, %v3715
        %v3753 = vpack.c.b16 %v3718, %v3717
        %v3754 = vpack.c.b16 %v3720, %v3719
        %v3755 = vpack.c.b16 %v3722, %v3721
        %v3756 = vpack.c.b16 %v3724, %v3723
        %v3757 = vpack.c.b16 %v3726, %v3725
        %v3758 = vpack.c.b16 %v3728, %v3727
        %v3759 = vpack.c.b16 %v3730, %v3729
        %v3760 = vpack.c.b16 %v3732, %v3731
        %v3761 = vpack.c.b16 %v3734, %v3733
        %v3762 = vpack.c.b16 %v3736, %v3735
        %v3763 = vpack.c.b16 %v3738, %v3737
        %v3764 = vpack.c.b16 %v3740, %v3739
        %3789 = vmatprep.subr.bf16.mxu0 0
        %3790 = vmatpush1.bf16.msra.mxu0 %v3748
        %3791 = vmatprep.subr.bf16.mxu0 0
        %3792 = vmatpush1.bf16.msra.mxu0 %v3747
        %3793 = vmatprep.subr.bf16.mxu0 0
        %3794 = vmatpush1.bf16.msra.mxu0 %v3746
        %3795 = vmatprep.subr.bf16.mxu0 0
        %3796 = vmatpush1.bf16.msra.mxu0 %v3745
        %3797 = vmatprep.subr.bf16.mxu0 0
        %3798 = vmatpush1.bf16.msra.mxu0 %v3744
        %3799 = vmatprep.subr.bf16.mxu0 0
        %3800 = vmatpush1.bf16.msra.mxu0 %v3743
        %3801 = vmatprep.subr.bf16.mxu0 0
        %3802 = vmatpush1.bf16.msra.mxu0 %v3742
        %3803 = vmatprep.subr.bf16.mxu0 0
        %3804 = vmatpush1.bf16.msra.mxu0 %v3741
        %3805 = vmatprep.subr.bf16.mxu0 0
        %3806 = vmatpush2.bf16.msra.mxu0 %v3756
        %3807 = vmatprep.subr.bf16.mxu0 0
        %3808 = vmatpush2.bf16.msra.mxu0 %v3755
        %3809 = vmatprep.subr.bf16.mxu0 0
        %3810 = vmatpush2.bf16.msra.mxu0 %v3754
        %3811 = vmatprep.subr.bf16.mxu0 0
        %3812 = vmatpush2.bf16.msra.mxu0 %v3753
        %3813 = vmatprep.subr.bf16.mxu0 0
        %3814 = vmatpush2.bf16.msra.mxu0 %v3752
        %3815 = vmatprep.subr.bf16.mxu0 0
        %3816 = vmatpush2.bf16.msra.mxu0 %v3751
        %3817 = vmatprep.subr.bf16.mxu0 0
        %3818 = vmatpush2.bf16.msra.mxu0 %v3750
        %3819 = vmatprep.subr.bf16.mxu0 0
        %3820 = vmatpush2.bf16.msra.mxu0 %v3749
        %3821 = vmatprep.mubr.bf16.mxu0 %v2523
        %3822 = vmatmul.mubr.bf16.gmra.mxu0 %v2522
        %v3823 = vpop.f32.mrf.mxu0
        %v3824 = vadd.f32 0.0, %v3823
        %v3825 = vpop.f32.mrf.mxu0
        %v3826 = vpop.f32.mrf.mxu0
        %v3827 = vadd.f32 0.0, %v3826
        %v3828 = vpop.f32.mrf.mxu0
        %3829 = vmatprep.mubr.bf16.mxu0 %v2526
        %3830 = vmatmul.mubr.bf16.gmra.mxu0 %v2525
        %v3831 = vpop.f32.mrf.mxu0
        %v3832 = vadd.f32 0.0, %v3831
        %v3833 = vpop.f32.mrf.mxu0
        %v3834 = vpop.f32.mrf.mxu0
        %v3835 = vadd.f32 0.0, %v3834
        %v3836 = vpop.f32.mrf.mxu0
        %3837 = vmatprep.mubr.bf16.mxu0 %v2529
        %3838 = vmatmul.mubr.bf16.gmra.mxu0 %v2528
        %v3839 = vpop.f32.mrf.mxu0
        %v3840 = vadd.f32 0.0, %v3839
        %v3841 = vpop.f32.mrf.mxu0
        %v3842 = vpop.f32.mrf.mxu0
        %v3843 = vadd.f32 0.0, %v3842
        %v3844 = vpop.f32.mrf.mxu0
        %3845 = vmatprep.mubr.bf16.mxu0 %v2532
        %3846 = vmatmul.mubr.bf16.gmra.mxu0 %v2531
        %v3847 = vpop.f32.mrf.mxu0
        %v3848 = vadd.f32 0.0, %v3847
        %v3849 = vpop.f32.mrf.mxu0
        %v3850 = vpop.f32.mrf.mxu0
        %v3851 = vadd.f32 0.0, %v3850
        %v3852 = vpop.f32.mrf.mxu0
        %3853 = vmatprep.mubr.bf16.mxu0 %v2535
        %3854 = vmatmul.mubr.bf16.gmra.mxu0 %v2534
        %v3855 = vpop.f32.mrf.mxu0
        %v3856 = vadd.f32 0.0, %v3855
        %v3857 = vpop.f32.mrf.mxu0
        %v3858 = vpop.f32.mrf.mxu0
        %v3859 = vadd.f32 0.0, %v3858
        %v3860 = vpop.f32.mrf.mxu0
        %3861 = vmatprep.mubr.bf16.mxu0 %v2538
        %3862 = vmatmul.mubr.bf16.gmra.mxu0 %v2537
        %v3863 = vpop.f32.mrf.mxu0
        %v3864 = vadd.f32 0.0, %v3863
        %v3865 = vpop.f32.mrf.mxu0
        %v3866 = vpop.f32.mrf.mxu0
        %v3867 = vadd.f32 0.0, %v3866
        %v3868 = vpop.f32.mrf.mxu0
        %3869 = vmatprep.mubr.bf16.mxu0 %v2541
        %3870 = vmatmul.mubr.bf16.gmra.mxu0 %v2540
        %v3871 = vpop.f32.mrf.mxu0
        %v3872 = vadd.f32 0.0, %v3871
        %v3873 = vpop.f32.mrf.mxu0
        %v3874 = vpop.f32.mrf.mxu0
        %v3875 = vadd.f32 0.0, %v3874
        %v3876 = vpop.f32.mrf.mxu0
        %3877 = vmatprep.mubr.bf16.mxu0 %v2544
        %3878 = vmatmul.mubr.bf16.gmra.mxu0 %v2543
        %v3879 = vpop.f32.mrf.mxu0
        %v3880 = vadd.f32 0.0, %v3879
        %v3881 = vpop.f32.mrf.mxu0
        %v3882 = vpop.f32.mrf.mxu0
        %v3883 = vadd.f32 0.0, %v3882
        %v3884 = vpop.f32.mrf.mxu0
        %3885 = vmatprep.mubr.bf16.mxu0 %v2547
        %3886 = vmatmul.mubr.bf16.gmra.mxu0 %v2546
        %v3887 = vpop.f32.mrf.mxu0
        %v3888 = vadd.f32 0.0, %v3887
        %v3889 = vpop.f32.mrf.mxu0
        %v3890 = vpop.f32.mrf.mxu0
        %v3891 = vadd.f32 0.0, %v3890
        %v3892 = vpop.f32.mrf.mxu0
        %3893 = vmatprep.mubr.bf16.mxu0 %v2550
        %3894 = vmatmul.mubr.bf16.gmra.mxu0 %v2549
        %v3895 = vpop.f32.mrf.mxu0
        %v3896 = vadd.f32 0.0, %v3895
        %v3897 = vpop.f32.mrf.mxu0
        %v3898 = vpop.f32.mrf.mxu0
        %v3899 = vadd.f32 0.0, %v3898
        %v3900 = vpop.f32.mrf.mxu0
        %3901 = vmatprep.mubr.bf16.mxu0 %v2553
        %3902 = vmatmul.mubr.bf16.gmra.mxu0 %v2552
        %v3903 = vpop.f32.mrf.mxu0
        %v3904 = vadd.f32 0.0, %v3903
        %v3905 = vpop.f32.mrf.mxu0
        %v3906 = vpop.f32.mrf.mxu0
        %v3907 = vadd.f32 0.0, %v3906
        %v3908 = vpop.f32.mrf.mxu0
        %3909 = vmatprep.mubr.bf16.mxu0 %v2556
        %3910 = vmatmul.mubr.bf16.gmra.mxu0 %v2555
        %v3911 = vpop.f32.mrf.mxu0
        %v3912 = vadd.f32 0.0, %v3911
        %v3913 = vpop.f32.mrf.mxu0
        %v3914 = vpop.f32.mrf.mxu0
        %v3915 = vadd.f32 0.0, %v3914
        %v3916 = vpop.f32.mrf.mxu0
        %3917 = vmatprep.mubr.bf16.mxu0 %v2559
        %3918 = vmatmul.mubr.bf16.gmra.mxu0 %v2558
        %v3919 = vpop.f32.mrf.mxu0
        %v3920 = vadd.f32 0.0, %v3919
        %v3921 = vpop.f32.mrf.mxu0
        %v3922 = vpop.f32.mrf.mxu0
        %v3923 = vadd.f32 0.0, %v3922
        %v3924 = vpop.f32.mrf.mxu0
        %3925 = vmatprep.mubr.bf16.mxu0 %v2562
        %3926 = vmatmul.mubr.bf16.gmra.mxu0 %v2561
        %v3927 = vpop.f32.mrf.mxu0
        %v3928 = vadd.f32 0.0, %v3927
        %v3929 = vpop.f32.mrf.mxu0
        %v3930 = vpop.f32.mrf.mxu0
        %v3931 = vadd.f32 0.0, %v3930
        %v3932 = vpop.f32.mrf.mxu0
        %3933 = vmatprep.mubr.bf16.mxu0 %v2613
        %3934 = vmatmul.mubr.bf16.gmra.mxu0 %v2612
        %v3935 = vpop.f32.mrf.mxu0
        %v3936 = vadd.f32 0.0, %v3935
        %v3937 = vpop.f32.mrf.mxu0
        %v3938 = vpop.f32.mrf.mxu0
        %v3939 = vadd.f32 0.0, %v3938
        %v3940 = vpop.f32.mrf.mxu0
        %3941 = vmatprep.mubr.bf16.mxu0 %v592
        %3942 = vmatmul.mubr.bf16.gmra.mxu0 %v592
        %v3943 = vpop.f32.mrf.mxu0
        %v3944 = vadd.f32 0.0, %v3943
        %v3945 = vpop.f32.mrf.mxu0
        %v3946 = vpop.f32.mrf.mxu0
        %v3947 = vadd.f32 0.0, %v3946
        %v3948 = vpop.f32.mrf.mxu0
        %3949 = vdwg.mxu0
        %3950 = vmatprep.subr.bf16.mxu0 0
        %3951 = vmatpush1.bf16.msra.mxu0 %v3764
        %3952 = vmatprep.subr.bf16.mxu0 0
        %3953 = vmatpush1.bf16.msra.mxu0 %v3763
        %3954 = vmatprep.subr.bf16.mxu0 0
        %3955 = vmatpush1.bf16.msra.mxu0 %v3762
        %3956 = vmatprep.subr.bf16.mxu0 0
        %3957 = vmatpush1.bf16.msra.mxu0 %v3761
        %3958 = vmatprep.subr.bf16.mxu0 0
        %3959 = vmatpush1.bf16.msra.mxu0 %v3760
        %3960 = vmatprep.subr.bf16.mxu0 0
        %3961 = vmatpush1.bf16.msra.mxu0 %v3759
        %3962 = vmatprep.subr.bf16.mxu0 0
        %3963 = vmatpush1.bf16.msra.mxu0 %v3758
        %3964 = vmatprep.subr.bf16.mxu0 0
        %3965 = vmatpush1.bf16.msra.mxu0 %v3757
        %3966 = vmatprep.subr.bf16.mxu0 0
        %3967 = vmatpush2.bf16.msra.mxu0 0
        %3968 = vmatprep.subr.bf16.mxu0 0
        %3969 = vmatpush2.bf16.msra.mxu0 0
        %3970 = vmatprep.subr.bf16.mxu0 0
        %3971 = vmatpush2.bf16.msra.mxu0 0
        %3972 = vmatprep.subr.bf16.mxu0 0
        %3973 = vmatpush2.bf16.msra.mxu0 0
        %3974 = vmatprep.subr.bf16.mxu0 0
        %3975 = vmatpush2.bf16.msra.mxu0 0
        %3976 = vmatprep.subr.bf16.mxu0 0
        %3977 = vmatpush2.bf16.msra.mxu0 0
        %3978 = vmatprep.subr.bf16.mxu0 0
        %3979 = vmatpush2.bf16.msra.mxu0 0
        %3980 = vmatprep.subr.bf16.mxu0 0
        %3981 = vmatpush2.bf16.msra.mxu0 0
        %3982 = vmatprep.mubr.bf16.mxu0 0
        %3983 = vmatmul.mubr.bf16.gmra.mxu0 %v2524
        %v3984 = vpop.f32.mrf.mxu0
        %v3985 = vadd.f32 %v3824, %v3984
        %v3986 = vpop.f32.mrf.mxu0
        %v3987 = vpop.f32.mrf.mxu0
        %v3988 = vadd.f32 %v3827, %v3987
        %v3989 = vpop.f32.mrf.mxu0
        %3990 = vmatprep.mubr.bf16.mxu0 0
        %3991 = vmatmul.mubr.bf16.gmra.mxu0 %v2527
        %v3992 = vpop.f32.mrf.mxu0
        %v3993 = vadd.f32 %v3832, %v3992
        %v3994 = vpop.f32.mrf.mxu0
        %v3995 = vpop.f32.mrf.mxu0
        %v3996 = vadd.f32 %v3835, %v3995
        %v3997 = vpop.f32.mrf.mxu0
        %3998 = vmatprep.mubr.bf16.mxu0 0
        %3999 = vmatmul.mubr.bf16.gmra.mxu0 %v2530
        %v4000 = vpop.f32.mrf.mxu0
        %v4001 = vadd.f32 %v3840, %v4000
        %v4002 = vpop.f32.mrf.mxu0
        %v4003 = vpop.f32.mrf.mxu0
        %v4004 = vadd.f32 %v3843, %v4003
        %v4005 = vpop.f32.mrf.mxu0
        %4006 = vmatprep.mubr.bf16.mxu0 0
        %4007 = vmatmul.mubr.bf16.gmra.mxu0 %v2533
        %v4008 = vpop.f32.mrf.mxu0
        %v4009 = vadd.f32 %v3848, %v4008
        %v4010 = vpop.f32.mrf.mxu0
        %v4011 = vpop.f32.mrf.mxu0
        %v4012 = vadd.f32 %v3851, %v4011
        %v4013 = vpop.f32.mrf.mxu0
        %4014 = vmatprep.mubr.bf16.mxu0 0
        %4015 = vmatmul.mubr.bf16.gmra.mxu0 %v2536
        %v4016 = vpop.f32.mrf.mxu0
        %v4017 = vadd.f32 %v3856, %v4016
        %v4018 = vpop.f32.mrf.mxu0
        %v4019 = vpop.f32.mrf.mxu0
        %v4020 = vadd.f32 %v3859, %v4019
        %v4021 = vpop.f32.mrf.mxu0
        %4022 = vmatprep.mubr.bf16.mxu0 0
        %4023 = vmatmul.mubr.bf16.gmra.mxu0 %v2539
        %v4024 = vpop.f32.mrf.mxu0
        %v4025 = vadd.f32 %v3864, %v4024
        %v4026 = vpop.f32.mrf.mxu0
        %v4027 = vpop.f32.mrf.mxu0
        %v4028 = vadd.f32 %v3867, %v4027
        %v4029 = vpop.f32.mrf.mxu0
        %4030 = vmatprep.mubr.bf16.mxu0 0
        %4031 = vmatmul.mubr.bf16.gmra.mxu0 %v2542
        %v4032 = vpop.f32.mrf.mxu0
        %v4033 = vadd.f32 %v3872, %v4032
        %v4034 = vpop.f32.mrf.mxu0
        %v4035 = vpop.f32.mrf.mxu0
        %v4036 = vadd.f32 %v3875, %v4035
        %v4037 = vpop.f32.mrf.mxu0
        %4038 = vmatprep.mubr.bf16.mxu0 0
        %4039 = vmatmul.mubr.bf16.gmra.mxu0 %v2545
        %v4040 = vpop.f32.mrf.mxu0
        %v4041 = vadd.f32 %v3880, %v4040
        %v4042 = vpop.f32.mrf.mxu0
        %v4043 = vpop.f32.mrf.mxu0
        %v4044 = vadd.f32 %v3883, %v4043
        %v4045 = vpop.f32.mrf.mxu0
        %4046 = vmatprep.mubr.bf16.mxu0 0
        %4047 = vmatmul.mubr.bf16.gmra.mxu0 %v2548
        %v4048 = vpop.f32.mrf.mxu0
        %v4049 = vadd.f32 %v3888, %v4048
        %v4050 = vpop.f32.mrf.mxu0
        %v4051 = vpop.f32.mrf.mxu0
        %v4052 = vadd.f32 %v3891, %v4051
        %v4053 = vpop.f32.mrf.mxu0
        %4054 = vmatprep.mubr.bf16.mxu0 0
        %4055 = vmatmul.mubr.bf16.gmra.mxu0 %v2551
        %v4056 = vpop.f32.mrf.mxu0
        %v4057 = vadd.f32 %v3896, %v4056
        %v4058 = vpop.f32.mrf.mxu0
        %v4059 = vpop.f32.mrf.mxu0
        %v4060 = vadd.f32 %v3899, %v4059
        %v4061 = vpop.f32.mrf.mxu0
        %4062 = vmatprep.mubr.bf16.mxu0 0
        %4063 = vmatmul.mubr.bf16.gmra.mxu0 %v2554
        %v4064 = vpop.f32.mrf.mxu0
        %v4065 = vadd.f32 %v3904, %v4064
        %v4066 = vpop.f32.mrf.mxu0
        %v4067 = vpop.f32.mrf.mxu0
        %v4068 = vadd.f32 %v3907, %v4067
        %v4069 = vpop.f32.mrf.mxu0
        %4070 = vmatprep.mubr.bf16.mxu0 0
        %4071 = vmatmul.mubr.bf16.gmra.mxu0 %v2557
        %v4072 = vpop.f32.mrf.mxu0
        %v4073 = vadd.f32 %v3912, %v4072
        %v4074 = vpop.f32.mrf.mxu0
        %v4075 = vpop.f32.mrf.mxu0
        %v4076 = vadd.f32 %v3915, %v4075
        %v4077 = vpop.f32.mrf.mxu0
        %4078 = vmatprep.mubr.bf16.mxu0 0
        %4079 = vmatmul.mubr.bf16.gmra.mxu0 %v2560
        %v4080 = vpop.f32.mrf.mxu0
        %v4081 = vadd.f32 %v3920, %v4080
        %v4082 = vpop.f32.mrf.mxu0
        %v4083 = vpop.f32.mrf.mxu0
        %v4084 = vadd.f32 %v3923, %v4083
        %v4085 = vpop.f32.mrf.mxu0
        %4086 = vmatprep.mubr.bf16.mxu0 0
        %4087 = vmatmul.mubr.bf16.gmra.mxu0 %v2563
        %v4088 = vpop.f32.mrf.mxu0
        %v4089 = vadd.f32 %v3928, %v4088
        %v4090 = vpop.f32.mrf.mxu0
        %v4091 = vpop.f32.mrf.mxu0
        %v4092 = vadd.f32 %v3931, %v4091
        %v4093 = vpop.f32.mrf.mxu0
        %4094 = vmatprep.mubr.bf16.mxu0 0
        %4095 = vmatmul.mubr.bf16.gmra.mxu0 %v2614
        %v4096 = vpop.f32.mrf.mxu0
        %v4097 = vadd.f32 %v3936, %v4096
        %v4098 = vpop.f32.mrf.mxu0
        %v4099 = vpop.f32.mrf.mxu0
        %v4100 = vadd.f32 %v3939, %v4099
        %v4101 = vpop.f32.mrf.mxu0
        %4102 = vmatprep.mubr.bf16.mxu0 0
        %4103 = vmatmul.mubr.bf16.gmra.mxu0 %v592
        %v4104 = vpop.f32.mrf.mxu0
        %v4105 = vadd.f32 %v3944, %v4104
        %v4106 = vpop.f32.mrf.mxu0
        %v4107 = vpop.f32.mrf.mxu0
        %v4108 = vadd.f32 %v3947, %v4107
        %v4109 = vpop.f32.mrf.mxu0
        %4110 = vdwg.mxu0
        %v4111 = vadd.f32 %v3470, %v3985
        %v4112 = vadd.f32 %v3473, %v3988
        %v4113 = vadd.f32 %v3478, %v3993
        %v4114 = vadd.f32 %v3481, %v3996
        %v4115 = vadd.f32 %v3486, %v4001
        %v4116 = vadd.f32 %v3489, %v4004
        %v4117 = vadd.f32 %v3494, %v4009
        %v4118 = vadd.f32 %v3497, %v4012
        %v4119 = vadd.f32 %v3502, %v4017
        %v4120 = vadd.f32 %v3505, %v4020
        %v4121 = vadd.f32 %v3510, %v4025
        %v4122 = vadd.f32 %v3513, %v4028
        %v4123 = vadd.f32 %v3518, %v4033
        %v4124 = vadd.f32 %v3521, %v4036
        %v4125 = vadd.f32 %v3526, %v4041
        %v4126 = vadd.f32 %v3529, %v4044
        %v4127 = vadd.f32 %v3534, %v4049
        %v4128 = vadd.f32 %v3537, %v4052
        %v4129 = vadd.f32 %v3542, %v4057
        %v4130 = vadd.f32 %v3545, %v4060
        %v4131 = vadd.f32 %v3550, %v4065
        %v4132 = vadd.f32 %v3553, %v4068
        %v4133 = vadd.f32 %v3558, %v4073
        %v4134 = vadd.f32 %v3561, %v4076
        %v4135 = vadd.f32 %v3566, %v4081
        %v4136 = vadd.f32 %v3569, %v4084
        %v4137 = vadd.f32 %v3574, %v4089
        %v4138 = vadd.f32 %v3577, %v4092
        %v4139 = vadd.f32 %v3582, %v4097
        %v4140 = vadd.f32 %v3585, %v4100
        %v4141 = vadd.f32 %v3590, %v4105
        %v4142 = vadd.f32 %v3593, %v4108
        %v4143 = vld [vmem:[%s5] sm:$0x1]
        %v4145 = vlaneseq
        %v4146 = vshrl.u32 %v4145, 7
        %v4147 = vsub.s32 0, %v4146
        %v4148 = vrot.slane %v4143, %v4147
        %v4150 = vmul.f32 %v4111, %v4148
        %v4151 = vmul.f32 %v4112, %v4148
        %v4152 = vmul.f32 %v4113, %v4148
        %v4153 = vmul.f32 %v4114, %v4148
        %v4154 = vmul.f32 %v4115, %v4148
        %v4155 = vmul.f32 %v4116, %v4148
        %v4156 = vmul.f32 %v4117, %v4148
        %v4157 = vmul.f32 %v4118, %v4148
        %v4158 = vmul.f32 %v4119, %v4148
        %v4159 = vmul.f32 %v4120, %v4148
        %v4160 = vmul.f32 %v4121, %v4148
        %v4161 = vmul.f32 %v4122, %v4148
        %v4162 = vmul.f32 %v4123, %v4148
        %v4163 = vmul.f32 %v4124, %v4148
        %v4164 = vmul.f32 %v4125, %v4148
        %v4165 = vmul.f32 %v4126, %v4148
        %v4166 = vmul.f32 %v4127, %v4148
        %v4167 = vmul.f32 %v4128, %v4148
        %v4168 = vmul.f32 %v4129, %v4148
        %v4169 = vmul.f32 %v4130, %v4148
        %v4170 = vmul.f32 %v4131, %v4148
        %v4171 = vmul.f32 %v4132, %v4148
        %v4172 = vmul.f32 %v4133, %v4148
        %v4173 = vmul.f32 %v4134, %v4148
        %v4174 = vmul.f32 %v4135, %v4148
        %v4175 = vmul.f32 %v4136, %v4148
        %v4176 = vmul.f32 %v4137, %v4148
        %v4177 = vmul.f32 %v4138, %v4148
        %v4178 = vmul.f32 %v4139, %v4148
        %v4179 = vmul.f32 %v4140, %v4148
        %v4180 = vmul.f32 %v4141, %v4148
        %v4181 = vmul.f32 %v4142, %v4148
        %v4182 = vld [vmem:[%s6] sm:$0x1]
        %v4184 = vlaneseq
        %v4185 = vshrl.u32 %v4184, 7
        %v4186 = vsub.s32 0, %v4185
        %v4187 = vrot.slane %v4182, %v4186
        %v4189 = vadd.f32 %v4150, %v4187
        %v4190 = vadd.f32 %v4151, %v4187
        %v4191 = vadd.f32 %v4152, %v4187
        %v4192 = vadd.f32 %v4153, %v4187
        %v4193 = vadd.f32 %v4154, %v4187
        %v4194 = vadd.f32 %v4155, %v4187
        %v4195 = vadd.f32 %v4156, %v4187
        %v4196 = vadd.f32 %v4157, %v4187
        %v4197 = vadd.f32 %v4158, %v4187
        %v4198 = vadd.f32 %v4159, %v4187
        %v4199 = vadd.f32 %v4160, %v4187
        %v4200 = vadd.f32 %v4161, %v4187
        %v4201 = vadd.f32 %v4162, %v4187
        %v4202 = vadd.f32 %v4163, %v4187
        %v4203 = vadd.f32 %v4164, %v4187
        %v4204 = vadd.f32 %v4165, %v4187
        %v4205 = vadd.f32 %v4166, %v4187
        %v4206 = vadd.f32 %v4167, %v4187
        %v4207 = vadd.f32 %v4168, %v4187
        %v4208 = vadd.f32 %v4169, %v4187
        %v4209 = vadd.f32 %v4170, %v4187
        %v4210 = vadd.f32 %v4171, %v4187
        %v4211 = vadd.f32 %v4172, %v4187
        %v4212 = vadd.f32 %v4173, %v4187
        %v4213 = vadd.f32 %v4174, %v4187
        %v4214 = vadd.f32 %v4175, %v4187
        %v4215 = vadd.f32 %v4176, %v4187
        %v4216 = vadd.f32 %v4177, %v4187
        %v4217 = vadd.f32 %v4178, %v4187
        %v4218 = vadd.f32 %v4179, %v4187
        %v4219 = vadd.f32 %v4180, %v4187
        %v4220 = vadd.f32 %v4181, %v4187
        %v4221 = vadd.f32 %v4189, %v359
        %v4222 = vadd.f32 %v4190, %v360
        %v4223 = vadd.f32 %v4191, %v361
        %v4224 = vadd.f32 %v4192, %v362
        %v4225 = vadd.f32 %v4193, %v363
        %v4226 = vadd.f32 %v4194, %v364
        %v4227 = vadd.f32 %v4195, %v365
        %v4228 = vadd.f32 %v4196, %v366
        %v4229 = vadd.f32 %v4197, %v367
        %v4230 = vadd.f32 %v4198, %v368
        %v4231 = vadd.f32 %v4199, %v369
        %v4232 = vadd.f32 %v4200, %v370
        %v4233 = vadd.f32 %v4201, %v371
        %v4234 = vadd.f32 %v4202, %v372
        %v4235 = vadd.f32 %v4203, %v373
        %v4236 = vadd.f32 %v4204, %v374
        %v4237 = vadd.f32 %v4205, %v375
        %v4238 = vadd.f32 %v4206, %v376
        %v4239 = vadd.f32 %v4207, %v377
        %v4240 = vadd.f32 %v4208, %v378
        %v4241 = vadd.f32 %v4209, %v379
        %v4242 = vadd.f32 %v4210, %v380
        %v4243 = vadd.f32 %v4211, %v381
        %v4244 = vadd.f32 %v4212, %v382
        %v4245 = vadd.f32 %v4213, %v383
        %v4246 = vadd.f32 %v4214, %v384
        %v4247 = vadd.f32 %v4215, %v385
        %v4248 = vadd.f32 %v4216, %v386
        %v4249 = vadd.f32 %v4217, %v387
        %v4250 = vadd.f32 %v4218, %v388
        %v4251 = vadd.f32 %v4219, %v389
        %v4252 = vadd.f32 %v4220, %v390
        %v4253 = vmax.f32 %v4221, 0.0
        %v4254 = vmax.f32 %v4222, 0.0
        %v4255 = vmax.f32 %v4223, 0.0
        %v4256 = vmax.f32 %v4224, 0.0
        %v4257 = vmax.f32 %v4225, 0.0
        %v4258 = vmax.f32 %v4226, 0.0
        %v4259 = vmax.f32 %v4227, 0.0
        %v4260 = vmax.f32 %v4228, 0.0
        %v4261 = vmax.f32 %v4229, 0.0
        %v4262 = vmax.f32 %v4230, 0.0
        %v4263 = vmax.f32 %v4231, 0.0
        %v4264 = vmax.f32 %v4232, 0.0
        %v4265 = vmax.f32 %v4233, 0.0
        %v4266 = vmax.f32 %v4234, 0.0
        %v4267 = vmax.f32 %v4235, 0.0
        %v4268 = vmax.f32 %v4236, 0.0
        %v4269 = vmax.f32 %v4237, 0.0
        %v4270 = vmax.f32 %v4238, 0.0
        %v4271 = vmax.f32 %v4239, 0.0
        %v4272 = vmax.f32 %v4240, 0.0
        %v4273 = vmax.f32 %v4241, 0.0
        %v4274 = vmax.f32 %v4242, 0.0
        %v4275 = vmax.f32 %v4243, 0.0
        %v4276 = vmax.f32 %v4244, 0.0
        %v4277 = vmax.f32 %v4245, 0.0
        %v4278 = vmax.f32 %v4246, 0.0
        %v4279 = vmax.f32 %v4247, 0.0
        %v4280 = vmax.f32 %v4248, 0.0
        %v4281 = vmax.f32 %v4249, 0.0
        %v4282 = vmax.f32 %v4250, 0.0
        %v4283 = vmax.f32 %v4251, 0.0
        %v4284 = vmax.f32 %v4252, 0.0
        %4285 = vst [vmem:[%s325] sm:$0xff] %v4253
        %4286 = vst [vmem:[%s325 + $0x8] sm:$0xff] %v4254
        %4287 = vst [vmem:[%s325 + $0x10] sm:$0xff] %v4255
        %4288 = vst [vmem:[%s325 + $0x18] sm:$0xff] %v4256
        %4289 = vst [vmem:[%s325 + $0x20] sm:$0xff] %v4257
        %4290 = vst [vmem:[%s325 + $0x28] sm:$0xff] %v4258
        %4291 = vst [vmem:[%s325 + $0x30] sm:$0xff] %v4259
        %4292 = vst [vmem:[%s325 + $0x38] sm:$0xff] %v4260
        %4293 = vst [vmem:[%s325 + $0x40] sm:$0xff] %v4261
        %4294 = vst [vmem:[%s325 + $0x48] sm:$0xff] %v4262
        %4295 = vst [vmem:[%s325 + $0x50] sm:$0xff] %v4263
        %4296 = vst [vmem:[%s325 + $0x58] sm:$0xff] %v4264
        %4297 = vst [vmem:[%s325 + $0x60] sm:$0xff] %v4265
        %4298 = vst [vmem:[%s325 + $0x68] sm:$0xff] %v4266
        %4299 = vst [vmem:[%s325 + $0x70] sm:$0xff] %v4267
        %4300 = vst [vmem:[%s325 + $0x78] sm:$0xff] %v4268
        %4301 = vst [vmem:[%s325 + $0x80] sm:$0xff] %v4269
        %4302 = vst [vmem:[%s325 + $0x88] sm:$0xff] %v4270
        %4303 = vst [vmem:[%s325 + $0x90] sm:$0xff] %v4271
        %4304 = vst [vmem:[%s325 + $0x98] sm:$0xff] %v4272
        %4305 = vst [vmem:[%s325 + $0xa0] sm:$0xff] %v4273
        %4306 = vst [vmem:[%s325 + $0xa8] sm:$0xff] %v4274
        %4307 = vst [vmem:[%s325 + $0xb0] sm:$0xff] %v4275
        %4308 = vst [vmem:[%s325 + $0xb8] sm:$0xff] %v4276
        %4309 = vst [vmem:[%s325 + $0xc0] sm:$0xff] %v4277
        %4310 = vst [vmem:[%s325 + $0xc8] sm:$0xff] %v4278
        %4311 = vst [vmem:[%s325 + $0xd0] sm:$0xff] %v4279
        %4312 = vst [vmem:[%s325 + $0xd8] sm:$0xff] %v4280
        %4313 = vst [vmem:[%s325 + $0xe0] sm:$0xff] %v4281
        %4314 = vst [vmem:[%s325 + $0xe8] sm:$0xff] %v4282
        %4315 = vst [vmem:[%s325 + $0xf0] sm:$0xff] %v4283
        %4316 = vst [vmem:[%s325 + $0xf8] sm:$0xff] %v4284
        %s4317 = sand.u32 %s185, 1
        %s4318 = scalar_lea.sflag [#allocation4], %s4317
        %s4319 = sand.u32 %s185, 1
        %s4320 = smul.addr %s4319, 256
        %s4321 = scalar_lea.vmem [#allocation8], %s4320
        // Predicated region
        $region61: #{tpu_custom_call.1} parent=47 // pred_check
          %p4322 = pneg %p195
        $region62: #{tpu_custom_call.1} parent=47 // pred_check_branch
          %4324 = sbr.rel (%p4322) target = $region64
        $region63: #{tpu_custom_call.1} parent=47 // pred_region
          %s4326 = ssub.s32 4096, 4096
          %4327 = vsyncadd %s4318, %s4326
          %s4328 = smul.addr %s25, 32
          %s4329 = smul.addr %s4328, 128
          %s4330 = scalar_lea.hbm %s7, %s4329
          %s4331 = sshll.u32 %s4321, 4
          %s4332 = int_to_ptr.vmem [resolvable:$true] %s4331
          %4337 = dma.vmem_to_hbm [thread:$0]  %s4332, 4096, %s4330, %s4318, 128, 128, 8
        $region64: #{tpu_custom_call.1} parent=47 // pred_fallthru
          _
      $region48: #{tpu_custom_call.1} parent=5 // pred_fallthru
        _
      %p4338 = scmp.le.s32.totalorder 2, %s20
      // Predicated region
      $region65: #{tpu_custom_call.1} parent=5 // pred_check
        %p4339 = pneg %p4338
      $region66: #{tpu_custom_call.1} parent=5 // pred_check_branch
        %4341 = sbr.rel (%p4339) target = $region68
      $region67: #{tpu_custom_call.1} parent=5 // pred_region
        %s4342 = ssub.s32 %s20, 2
        // Predicated region
        $region69: #{tpu_custom_call.1} parent=67 // pred_check
          %p4343 = pneg %p201
        $region70: #{tpu_custom_call.1} parent=67 // pred_check_branch
          %4345 = sbr.rel (%p4343) target = $region72
        $region71: #{tpu_custom_call.1} parent=67 // pred_region
          %s4346 = sand.u32 %s186, 1
          %s4347 = scalar_lea.sflag [#allocation4], %s4346
          %s4348 = sand.u32 %s186, 1
          %s4349 = smul.addr %s4348, 256
          %s4350 = scalar_lea.vmem [#allocation8], %s4349
          %4351 = dma.done %s4347, 4096
        $region72: #{tpu_custom_call.1} parent=67 // pred_fallthru
          _
      $region68: #{tpu_custom_call.1} parent=5 // pred_fallthru
        _
    $region6: #{tpu_custom_call.1} parent=1 // loop_footer
      %s24 = sadd.s32 1, %s20
    $region7: #{tpu_custom_call.1} parent=1 // loop_footer_branch
      %19 = sbr.rel target = $region3
    $region8: #{tpu_custom_call.1} parent=1 // loop_exit
      _
    %4352 = vsyncpa [#allocation3], 1
    %s4353 = scalar_lea.sflag [#allocation3], 1
    %4354 = vsyncpa %s4353, 1
    %4355 = vsyncpa [#allocation6], 1
    %4356 = vsyncpa [#allocation4], 1
    %s4357 = scalar_lea.sflag [#allocation4], 1
    %4358 = vsyncpa %s4357, 1

</llo_original>
